<compile_context>
chip_gen: v5e
topology: v5e:2x2
jax: 0.10.0
libtpu: 0.0.40
codegen_flags: <defaults>
</compile_context>

<pallas_src>
import math

import jax
import jax.numpy as jnp
from jax.experimental import pallas as pl
from jax.experimental.pallas import tpu as pltpu


# ------------------------------ small helpers ---------------------------------

def _round_up(x, m):
    return ((x + m - 1) // m) * m


def _vmem_spec(shape):
    nd = len(shape)
    return pl.BlockSpec(shape, lambda *_, _nd=nd: (0,) * _nd)


# --------------------------- padded weight packing -----------------------------

def _pack_lstm_dir_split(wih, whh, bih, bhh, in_widths, in_pads, H, Hp):
    """Pack one direction's LSTM weights into padded, SPLIT (Wx / Whh) layout.

    wih : (4H, sum(in_widths))  PyTorch weight_ih (gate order i, f, g, o)
    whh : (4H, H)               PyTorch weight_hh
    Returns:
      Wx  (sum(in_pads), 4*Hp)  input->gates projection (per-gate 128-lane slabs)
      b   (1, 4*Hp)             bih + bhh, folded into the precomputed projection
      Whh (Hp, 4*Hp)            recurrent projection
    """
    Kin = sum(in_pads)
    Wx = jnp.zeros((Kin, 4 * Hp), jnp.float32)
    Whh = jnp.zeros((Hp, 4 * Hp), jnp.float32)
    b = jnp.zeros((1, 4 * Hp), jnp.float32)

    src, dst = 0, 0
    for wr, wp in zip(in_widths, in_pads):
        blk = wih[:, src:src + wr]                      # (4H, wr)
        for g in range(4):
            Wx = Wx.at[dst:dst + wr,
                       g * Hp:g * Hp + H].set(blk[g * H:(g + 1) * H, :].T)
        src += wr
        dst += wp

    for g in range(4):
        Whh = Whh.at[0:H, g * Hp:g * Hp + H].set(whh[g * H:(g + 1) * H, :].T)
        b = b.at[0, g * Hp:g * Hp + H].set(
            bih[g * H:(g + 1) * H] + bhh[g * H:(g + 1) * H])
    return Wx, b, Whh


def _pack_mlp(w1, b1, w2, b2, H, Hp, M, Mp, NC, Cp):
    """fc1: (M, 4H); fc2: (NC, M).  Rep layout is [first_f, first_b, second_f,
    second_b] Hp-wide slabs; MLP hidden padded to Mp lanes, classes to Cp lanes."""
    W1 = jnp.zeros((4 * Hp, Mp), jnp.float32)
    for p in range(4):
        W1 = W1.at[p * Hp:p * Hp + H, 0:M].set(w1[:, p * H:(p + 1) * H].T)
    B1 = jnp.zeros((1, Mp), jnp.float32).at[0, 0:M].set(b1)
    W2 = jnp.zeros((Mp, Cp), jnp.float32).at[0:M, 0:NC].set(w2.T)
    B2 = jnp.zeros((1, Cp), jnp.float32).at[0, 0:NC].set(b2)
    return W1, B1, W2, B2


# ------------------------------- fused kernel ----------------------------------

def _make_fused_kernel(num_layers, seq_len, batch, n_rows, Hp, out_rows):
    L, T, Bsz = num_layers, seq_len, batch

    def kernel(*refs):
        x_ref, pos_ref = refs[0], refs[1]
        lyr = refs[2:2 + 6 * L]
        w1_ref, b1_ref, w2_ref, b2_ref = refs[2 + 6 * L:6 + 6 * L]
        out_ref = refs[6 + 6 * L]
        scratch = refs[7 + 6 * L:]
        gxf_ref, gxb_ref = scratch[0], scratch[1]       # (T*n_rows, 4*Hp) each
        seq_refs = scratch[2:]                          # (T*n_rows, Hp) x 2*pairs

        pos = pos_ref[...]                              # (n_rows, 1) int32

        def sigmoid(v):
            # single EUP op, mathematically exact sigmoid
            return 0.5 * jnp.tanh(0.5 * v) + 0.5

        unroll = True if T <= 16 else 4                 # bounded unroll for big T

        def gates_to_h(g, c):
            i_g = sigmoid(g[:, 0 * Hp:1 * Hp])          # 128-lane slabs
            f_g = sigmoid(g[:, 1 * Hp:2 * Hp])
            g_g = jnp.tanh(g[:, 2 * Hp:3 * Hp])
            o_g = sigmoid(g[:, 3 * Hp:4 * Hp])
            c_new = f_g * c + i_g * g_g
            h_new = o_g * jnp.tanh(c_new)
            return h_new, c_new

        def run_layer(l, x2d, seq_f_out, seq_b_out):
            wxf_ref, bf_ref, wxb_ref, bb_ref, whhf_ref, whhb_ref = lyr[6 * l:6 * l + 6]

            # Input projections for ALL timesteps, both directions (bias folded).
            # Off the recurrence critical path; one big, well-utilized MXU matmul
            # per direction instead of 2*T tiny per-step ones.
            gxf_ref[...] = jnp.dot(x2d, wxf_ref[...],
                                   preferred_element_type=jnp.float32) + bf_ref[...]
            gxb_ref[...] = jnp.dot(x2d, wxb_ref[...],
                                   preferred_element_type=jnp.float32) + bb_ref[...]

            def step(t, carry):
                h_f, c_f, cap_f, h_b, c_b, cap_b = carry
                t_b = T - 1 - t
                rf = pl.multiple_of(t * n_rows, n_rows)
                rb = pl.multiple_of(t_b * n_rows, n_rows)
                # Forward & backward recurrences interleaved: only the K=Hp
                # recurrent matmul + a slab add sit on the serial chain, and the
                # two directions' latencies hide under each other.
                g_f = gxf_ref[pl.ds(rf, n_rows), :] + jnp.dot(
                    h_f, whhf_ref[...], preferred_element_type=jnp.float32)
                g_b = gxb_ref[pl.ds(rb, n_rows), :] + jnp.dot(
                    h_b, whhb_ref[...], preferred_element_type=jnp.float32)
                h_f_new, c_f_new = gates_to_h(g_f, c_f)
                h_b_new, c_b_new = gates_to_h(g_b, c_b)
                if seq_f_out is not None:               # feed next layer
                    seq_f_out[pl.ds(rf, n_rows), :] = h_f_new
                    seq_b_out[pl.ds(rb, n_rows), :] = h_b_new
                # fused position "gather": capture h where pos == time index
                cap_f = jnp.where(pos == t, h_f_new, cap_f)
                cap_b = jnp.where(pos == t_b, h_b_new, cap_b)
                return h_f_new, c_f_new, cap_f, h_b_new, c_b_new, cap_b

            z = jnp.zeros((n_rows, Hp), jnp.float32)
            carry = jax.lax.fori_loop(0, T, step, (z, z, z, z, z, z), unroll=unroll)
            return carry[2], carry[5]                   # cap_f, cap_b

        cap_f = cap_b = None
        prev_f = prev_b = None
        for l in range(L):
            if l == 0:
                x2d = x_ref[...]                                    # (T*n_rows, Ip)
            else:
                x2d = jnp.concatenate([prev_f[...], prev_b[...]], axis=-1)
            if l < L - 1:
                cur_f = seq_refs[2 * (l % 2)]
                cur_b = seq_refs[2 * (l % 2) + 1]
            else:
                cur_f = cur_b = None
            cap_f, cap_b = run_layer(l, x2d, cur_f, cur_b)
            prev_f, prev_b = cur_f, cur_b

        # --------- fused MLP head: all 3 pairs batched into ONE matmul chain -----
        pad_rows = out_rows - 3 * Bsz

        def stack(cap, slices):
            parts = [cap[a:b] for a, b in slices]
            if pad_rows > 0:
                parts.append(jnp.zeros((pad_rows, Hp), jnp.float32))
            return jnp.concatenate(parts, axis=0)

        # row blocks: [alpha rows | beta rows | gamma rows | pad]
        first_sl = [(0, 2 * Bsz), (0, Bsz)]             # first  = A, B, A
        second_sl = [(Bsz, 3 * Bsz), (2 * Bsz, 3 * Bsz)]  # second = B, C, C
        rep = jnp.concatenate(
            [stack(cap_f, first_sl), stack(cap_b, first_sl),
             stack(cap_f, second_sl), stack(cap_b, second_sl)], axis=-1)

        h1 = jnp.dot(rep, w1_ref[...], preferred_element_type=jnp.float32) + b1_ref[...]
        h1 = jnp.where(h1 > 0, h1, 0.2 * h1)            # LeakyReLU(0.2)
        # single full-slab (out_rows x Cp) store; padded rows/lanes are garbage and
        # are sliced off in the wrapper (keep that invariant).
        out_ref[...] = jnp.dot(h1, w2_ref[...],
                               preferred_element_type=jnp.float32) + b2_ref[...]

    return kernel


# ----------------------------- parameter setup ---------------------------------

def _init_packed_params(key, I, H, L, M, NC, Ip, Hp, Mp, Cp):
    params = {"lstm": [], "fc": {}}
    k = 1.0 / math.sqrt(H)
    keys = jax.random.split(key, L * 8 + 4)
    ki = 0
    for layer in range(L):
        in_size = I if layer == 0 else 2 * H
        in_widths = [I] if layer == 0 else [H, H]
        in_pads = [Ip] if layer == 0 else [Hp, Hp]
        lp = {}
        for d in ("f", "b"):
            wih = jax.random.uniform(keys[ki], (4 * H, in_size),
                                     minval=-k, maxval=k, dtype=jnp.float32); ki += 1
            whh = jax.random.uniform(keys[ki], (4 * H, H),
                                     minval=-k, maxval=k, dtype=jnp.float32); ki += 1
            bih = jax.random.uniform(keys[ki], (4 * H,),
                                     minval=-k, maxval=k, dtype=jnp.float32); ki += 1
            bhh = jax.random.uniform(keys[ki], (4 * H,),
                                     minval=-k, maxval=k, dtype=jnp.float32); ki += 1
            Wx, bias, Whh = _pack_lstm_dir_split(wih, whh, bih, bhh,
                                                 in_widths, in_pads, H, Hp)
            lp["wx" + d] = Wx
            lp["b" + d] = bias
            lp["whh" + d] = Whh
        params["lstm"].append(lp)

    fc1_in = 4 * H
    k1 = 1.0 / math.sqrt(fc1_in)
    w1 = jax.random.uniform(keys[ki], (M, fc1_in), minval=-k1, maxval=k1,
                            dtype=jnp.float32); ki += 1
    b1 = jax.random.uniform(keys[ki], (M,), minval=-k1, maxval=k1,
                            dtype=jnp.float32); ki += 1
    k2 = 1.0 / math.sqrt(M)
    w2 = jax.random.uniform(keys[ki], (NC, M), minval=-k2, maxval=k2,
                            dtype=jnp.float32); ki += 1
    b2 = jax.random.uniform(keys[ki], (NC,), minval=-k2, maxval=k2,
                            dtype=jnp.float32); ki += 1
    W1, B1, W2, B2 = _pack_mlp(w1, b1, w2, b2, H, Hp, M, Mp, NC, Cp)
    params["fc"] = {"w1": W1, "b1": B1, "w2": W2, "b2": B2}
    return params


# ------------------------------- model builder ----------------------------------

def build_model(key, lstm_input_size, hidden_size, num_layers, mlp_size, num_classes):
    assert num_layers >= 1
    I, H, L, M, NC = lstm_input_size, hidden_size, num_layers, mlp_size, num_classes
    Ip = _round_up(I, 128)
    Hp = _round_up(H, 128)
    Mp = _round_up(M, 128)
    Cp = _round_up(NC, 128)
    params = _init_packed_params(key, I, H, L, M, NC, Ip, Hp, Mp, Cp)

    @jax.jit
    def forward(params, A, Bseq, Cseq, A_pos, B_pos, C_pos):
        Bsz, T, _ = A.shape
        n_rows = _round_up(3 * Bsz, 8)          # stacked LSTM batch rows (A|B|C)
        out_rows = _round_up(3 * Bsz, 8)        # batched head rows (alpha|beta|gamma)

        # Stack the 3 sequences into one batch, time-major, zero-pad rows/lanes,
        # flatten to (T*n_rows, Ip) so the in-kernel input projection is one matmul.
        x = jnp.concatenate([A, Bseq, Cseq], axis=0).astype(jnp.float32)   # (3B,T,I)
        x = jnp.transpose(x, (1, 0, 2))                                     # (T,3B,I)
        x = jnp.pad(x, ((0, 0), (0, n_rows - 3 * Bsz), (0, Ip - I)))
        x = x.reshape(T * n_rows, Ip)

        pos = jnp.concatenate([A_pos, B_pos, C_pos]).astype(jnp.int32)
        pos = jnp.pad(pos, (0, n_rows - 3 * Bsz), constant_values=-1)  # -1 never hits
        pos = pos.reshape(n_rows, 1)

        inputs = [x, pos]
        for lp in params["lstm"]:
            inputs += [lp["wxf"], lp["bf"], lp["wxb"], lp["bb"],
                       lp["whhf"], lp["whhb"]]
        fc = params["fc"]
        inputs += [fc["w1"], fc["b1"], fc["w2"], fc["b2"]]

        n_seq_pairs = min(L - 1, 2)             # inter-layer sequence buffers
        scratch_shapes = [pltpu.VMEM((T * n_rows, 4 * Hp), jnp.float32),
                          pltpu.VMEM((T * n_rows, 4 * Hp), jnp.float32)]
        scratch_shapes += [pltpu.VMEM((T * n_rows, Hp), jnp.float32)
                           for _ in range(2 * n_seq_pairs)]

        kernel = _make_fused_kernel(L, T, Bsz, n_rows, Hp, out_rows)

        out = pl.pallas_call(
            kernel,
            out_shape=jax.ShapeDtypeStruct((out_rows, Cp), jnp.float32),
            in_specs=[_vmem_spec(a.shape) for a in inputs],
            out_specs=_vmem_spec((out_rows, Cp)),
            scratch_shapes=scratch_shapes,
        )(*inputs)

        alpha = out[0:Bsz, :NC]
        beta = out[Bsz:2 * Bsz, :NC]
        gamma = out[2 * Bsz:3 * Bsz, :NC]
        return alpha, beta, gamma

    return params, forward


# ----------------------------------- main ---------------------------------------

if __name__ == "__main__":
    # lambdas-equivalent config (small shapes)
    lstm_input_size = 32
    hidden_size = 32
    num_layers = 1
    mlp_size = 64
    num_classes = 8
    batch = 2
    seq_len = 8

    key = jax.random.PRNGKey(0)
    kp, ka, kb, kc, kpa, kpb, kpc = jax.random.split(key, 7)

    params, forward = build_model(kp, lstm_input_size, hidden_size, num_layers,
                                  mlp_size, num_classes)

    A = jax.random.normal(ka, (batch, seq_len, lstm_input_size), dtype=jnp.float32)
    B_seq = jax.random.normal(kb, (batch, seq_len, lstm_input_size), dtype=jnp.float32)
    C_seq = jax.random.normal(kc, (batch, seq_len, lstm_input_size), dtype=jnp.float32)
    A_pos = jax.random.randint(kpa, (batch,), 0, seq_len)
    B_pos = jax.random.randint(kpb, (batch,), 0, seq_len)
    C_pos = jax.random.randint(kpc, (batch,), 0, seq_len)

    alpha_logits, beta_logits, gamma_logits = forward(
        params, A, B_seq, C_seq, A_pos, B_pos, C_pos)
    jax.block_until_ready((alpha_logits, beta_logits, gamma_logits))

    assert alpha_logits.shape == (batch, num_classes)
    assert beta_logits.shape == (batch, num_classes)
    assert gamma_logits.shape == (batch, num_classes)
    assert bool(jnp.all(jnp.isfinite(alpha_logits)))
    assert bool(jnp.all(jnp.isfinite(beta_logits)))
    assert bool(jnp.all(jnp.isfinite(gamma_logits)))
    print("KERNEL_OK")
</pallas_src>

<mosaic_0001>
module attributes {stable_mosaic.version = 11 : i64} {
  func.func @kernel(%arg0: memref<64x128xf32, #tpu.memory_space<vmem>>, %arg1: memref<8x1xi32, #tpu.memory_space<vmem>>, %arg2: memref<128x512xf32, #tpu.memory_space<vmem>>, %arg3: memref<1x512xf32, #tpu.memory_space<vmem>>, %arg4: memref<128x512xf32, #tpu.memory_space<vmem>>, %arg5: memref<1x512xf32, #tpu.memory_space<vmem>>, %arg6: memref<128x512xf32, #tpu.memory_space<vmem>>, %arg7: memref<128x512xf32, #tpu.memory_space<vmem>>, %arg8: memref<512x128xf32, #tpu.memory_space<vmem>>, %arg9: memref<1x128xf32, #tpu.memory_space<vmem>>, %arg10: memref<128x128xf32, #tpu.memory_space<vmem>>, %arg11: memref<1x128xf32, #tpu.memory_space<vmem>>, %arg12: memref<8x128xf32, #tpu.memory_space<vmem>>, %arg13: memref<64x512xf32, #tpu.memory_space<vmem>>, %arg14: memref<64x512xf32, #tpu.memory_space<vmem>>) attributes {dimension_semantics = [], scalar_prefetch = 0 : i64, scratch_operands = 2 : i64, tpu.core_type = #tpu.core_type<tc>} {
    %c0 = arith.constant 0 : index
    %c0_0 = arith.constant 0 : index
    %0 = vector.load %arg1[%c0, %c0_0] : memref<8x1xi32, #tpu.memory_space<vmem>>, vector<8x1xi32>
    %c0_1 = arith.constant 0 : index
    %c0_2 = arith.constant 0 : index
    %1 = vector.load %arg0[%c0_1, %c0_2] : memref<64x128xf32, #tpu.memory_space<vmem>>, vector<64x128xf32>
    %c0_3 = arith.constant 0 : index
    %c0_4 = arith.constant 0 : index
    %2 = vector.load %arg2[%c0_3, %c0_4] : memref<128x512xf32, #tpu.memory_space<vmem>>, vector<128x512xf32>
    %cst = arith.constant dense<0.000000e+00> : vector<64x512xf32>
    %3 = tpu.matmul %1, %2, %cst {dimension_numbers = #tpu.dot_dimension_numbers<[1], [0], [0], [1], [0, 0, 1, 1], [], []>} : vector<64x128xf32>, vector<128x512xf32>, vector<64x512xf32> -> vector<64x512xf32>
    %c0_5 = arith.constant 0 : index
    %c0_6 = arith.constant 0 : index
    %4 = vector.load %arg3[%c0_5, %c0_6] : memref<1x512xf32, #tpu.memory_space<vmem>>, vector<1x512xf32>
    %5 = vector.broadcast %4 : vector<1x512xf32> to vector<64x512xf32>
    %6 = arith.addf %3, %5 : vector<64x512xf32>
    %c0_7 = arith.constant 0 : index
    %c0_8 = arith.constant 0 : index
    %7 = vector.load %arg13[%c0_7, %c0_8] : memref<64x512xf32, #tpu.memory_space<vmem>>, vector<64x512xf32>
    tpu.vector_store %arg13[%c0_7, %c0_8], %6 {strides = array<i32>} : memref<64x512xf32, #tpu.memory_space<vmem>>, vector<64x512xf32>,
    %c0_9 = arith.constant 0 : index
    %c0_10 = arith.constant 0 : index
    %8 = vector.load %arg4[%c0_9, %c0_10] : memref<128x512xf32, #tpu.memory_space<vmem>>, vector<128x512xf32>
    %cst_11 = arith.constant dense<0.000000e+00> : vector<64x512xf32>
    %9 = tpu.matmul %1, %8, %cst_11 {dimension_numbers = #tpu.dot_dimension_numbers<[1], [0], [0], [1], [0, 0, 1, 1], [], []>} : vector<64x128xf32>, vector<128x512xf32>, vector<64x512xf32> -> vector<64x512xf32>
    %c0_12 = arith.constant 0 : index
    %c0_13 = arith.constant 0 : index
    %10 = vector.load %arg5[%c0_12, %c0_13] : memref<1x512xf32, #tpu.memory_space<vmem>>, vector<1x512xf32>
    %11 = vector.broadcast %10 : vector<1x512xf32> to vector<64x512xf32>
    %12 = arith.addf %9, %11 : vector<64x512xf32>
    %c0_14 = arith.constant 0 : index
    %c0_15 = arith.constant 0 : index
    %13 = vector.load %arg14[%c0_14, %c0_15] : memref<64x512xf32, #tpu.memory_space<vmem>>, vector<64x512xf32>
    tpu.vector_store %arg14[%c0_14, %c0_15], %12 {strides = array<i32>} : memref<64x512xf32, #tpu.memory_space<vmem>>, vector<64x512xf32>,
    %cst_16 = arith.constant 0.000000e+00 : f32
    %14 = vector.broadcast %cst_16 : f32 to vector<8x128xf32>
    %c0_i32 = arith.constant 0 : i32
    %c7_i32 = arith.constant 7 : i32
    %15 = arith.subi %c7_i32, %c0_i32 : i32
    %c8_i32 = arith.constant 8 : i32
    %16 = arith.muli %c0_i32, %c8_i32 : i32
    %17 = tpu.assume_multiple %16, 8 : i32
    %c8_i32_17 = arith.constant 8 : i32
    %18 = arith.muli %15, %c8_i32_17 : i32
    %19 = tpu.assume_multiple %18, 8 : i32
    %20 = arith.index_cast %17 : i32 to index
    %c0_18 = arith.constant 0 : index
    %21 = vector.load %arg13[%20, %c0_18] : memref<64x512xf32, #tpu.memory_space<vmem>>, vector<8x512xf32>
    %c0_19 = arith.constant 0 : index
    %c0_20 = arith.constant 0 : index
    %22 = vector.load %arg6[%c0_19, %c0_20] : memref<128x512xf32, #tpu.memory_space<vmem>>, vector<128x512xf32>
    %cst_21 = arith.constant dense<0.000000e+00> : vector<8x512xf32>
    %23 = tpu.matmul %14, %22, %cst_21 {dimension_numbers = #tpu.dot_dimension_numbers<[1], [0], [0], [1], [0, 0, 1, 1], [], []>} : vector<8x128xf32>, vector<128x512xf32>, vector<8x512xf32> -> vector<8x512xf32>
    %24 = arith.addf %21, %23 : vector<8x512xf32>
    %25 = arith.index_cast %19 : i32 to index
    %c0_22 = arith.constant 0 : index
    %26 = vector.load %arg14[%25, %c0_22] : memref<64x512xf32, #tpu.memory_space<vmem>>, vector<8x512xf32>
    %c0_23 = arith.constant 0 : index
    %c0_24 = arith.constant 0 : index
    %27 = vector.load %arg7[%c0_23, %c0_24] : memref<128x512xf32, #tpu.memory_space<vmem>>, vector<128x512xf32>
    %cst_25 = arith.constant dense<0.000000e+00> : vector<8x512xf32>
    %28 = tpu.matmul %14, %27, %cst_25 {dimension_numbers = #tpu.dot_dimension_numbers<[1], [0], [0], [1], [0, 0, 1, 1], [], []>} : vector<8x128xf32>, vector<128x512xf32>, vector<8x512xf32> -> vector<8x512xf32>
    %29 = arith.addf %26, %28 : vector<8x512xf32>
    %30 = vector.extract_strided_slice %24 {offsets = [0, 0], sizes = [8, 128], strides = [1, 1]} : vector<8x512xf32> to vector<8x128xf32>
    %cst_26 = arith.constant 5.000000e-01 : f32
    %31 = vector.broadcast %cst_26 : f32 to vector<8x128xf32>
    %32 = arith.mulf %31, %30 : vector<8x128xf32>
    %33 = math.tanh %32 : vector<8x128xf32>
    %cst_27 = arith.constant 5.000000e-01 : f32
    %34 = vector.broadcast %cst_27 : f32 to vector<8x128xf32>
    %35 = arith.mulf %34, %33 : vector<8x128xf32>
    %cst_28 = arith.constant 5.000000e-01 : f32
    %36 = vector.broadcast %cst_28 : f32 to vector<8x128xf32>
    %37 = arith.addf %35, %36 : vector<8x128xf32>
    %38 = vector.extract_strided_slice %24 {offsets = [0, 128], sizes = [8, 128], strides = [1, 1]} : vector<8x512xf32> to vector<8x128xf32>
    %cst_29 = arith.constant 5.000000e-01 : f32
    %39 = vector.broadcast %cst_29 : f32 to vector<8x128xf32>
    %40 = arith.mulf %39, %38 : vector<8x128xf32>
    %41 = math.tanh %40 : vector<8x128xf32>
    %cst_30 = arith.constant 5.000000e-01 : f32
    %42 = vector.broadcast %cst_30 : f32 to vector<8x128xf32>
    %43 = arith.mulf %42, %41 : vector<8x128xf32>
    %cst_31 = arith.constant 5.000000e-01 : f32
    %44 = vector.broadcast %cst_31 : f32 to vector<8x128xf32>
    %45 = arith.addf %43, %44 : vector<8x128xf32>
    %46 = vector.extract_strided_slice %24 {offsets = [0, 256], sizes = [8, 128], strides = [1, 1]} : vector<8x512xf32> to vector<8x128xf32>
    %47 = math.tanh %46 : vector<8x128xf32>
    %48 = vector.extract_strided_slice %24 {offsets = [0, 384], sizes = [8, 128], strides = [1, 1]} : vector<8x512xf32> to vector<8x128xf32>
    %cst_32 = arith.constant 5.000000e-01 : f32
    %49 = vector.broadcast %cst_32 : f32 to vector<8x128xf32>
    %50 = arith.mulf %49, %48 : vector<8x128xf32>
    %51 = math.tanh %50 : vector<8x128xf32>
    %cst_33 = arith.constant 5.000000e-01 : f32
    %52 = vector.broadcast %cst_33 : f32 to vector<8x128xf32>
    %53 = arith.mulf %52, %51 : vector<8x128xf32>
    %cst_34 = arith.constant 5.000000e-01 : f32
    %54 = vector.broadcast %cst_34 : f32 to vector<8x128xf32>
    %55 = arith.addf %53, %54 : vector<8x128xf32>
    %56 = arith.mulf %45, %14 : vector<8x128xf32>
    %57 = arith.mulf %37, %47 : vector<8x128xf32>
    %58 = arith.addf %56, %57 : vector<8x128xf32>
    %59 = math.tanh %58 : vector<8x128xf32>
    %60 = arith.mulf %55, %59 : vector<8x128xf32>
    %61 = vector.extract_strided_slice %29 {offsets = [0, 0], sizes = [8, 128], strides = [1, 1]} : vector<8x512xf32> to vector<8x128xf32>
    %cst_35 = arith.constant 5.000000e-01 : f32
    %62 = vector.broadcast %cst_35 : f32 to vector<8x128xf32>
    %63 = arith.mulf %62, %61 : vector<8x128xf32>
    %64 = math.tanh %63 : vector<8x128xf32>
    %cst_36 = arith.constant 5.000000e-01 : f32
    %65 = vector.broadcast %cst_36 : f32 to vector<8x128xf32>
    %66 = arith.mulf %65, %64 : vector<8x128xf32>
    %cst_37 = arith.constant 5.000000e-01 : f32
    %67 = vector.broadcast %cst_37 : f32 to vector<8x128xf32>
    %68 = arith.addf %66, %67 : vector<8x128xf32>
    %69 = vector.extract_strided_slice %29 {offsets = [0, 128], sizes = [8, 128], strides = [1, 1]} : vector<8x512xf32> to vector<8x128xf32>
    %cst_38 = arith.constant 5.000000e-01 : f32
    %70 = vector.broadcast %cst_38 : f32 to vector<8x128xf32>
    %71 = arith.mulf %70, %69 : vector<8x128xf32>
    %72 = math.tanh %71 : vector<8x128xf32>
    %cst_39 = arith.constant 5.000000e-01 : f32
    %73 = vector.broadcast %cst_39 : f32 to vector<8x128xf32>
    %74 = arith.mulf %73, %72 : vector<8x128xf32>
    %cst_40 = arith.constant 5.000000e-01 : f32
    %75 = vector.broadcast %cst_40 : f32 to vector<8x128xf32>
    %76 = arith.addf %74, %75 : vector<8x128xf32>
    %77 = vector.extract_strided_slice %29 {offsets = [0, 256], sizes = [8, 128], strides = [1, 1]} : vector<8x512xf32> to vector<8x128xf32>
    %78 = math.tanh %77 : vector<8x128xf32>
    %79 = vector.extract_strided_slice %29 {offsets = [0, 384], sizes = [8, 128], strides = [1, 1]} : vector<8x512xf32> to vector<8x128xf32>
    %cst_41 = arith.constant 5.000000e-01 : f32
    %80 = vector.broadcast %cst_41 : f32 to vector<8x128xf32>
    %81 = arith.mulf %80, %79 : vector<8x128xf32>
    %82 = math.tanh %81 : vector<8x128xf32>
    %cst_42 = arith.constant 5.000000e-01 : f32
    %83 = vector.broadcast %cst_42 : f32 to vector<8x128xf32>
    %84 = arith.mulf %83, %82 : vector<8x128xf32>
    %cst_43 = arith.constant 5.000000e-01 : f32
    %85 = vector.broadcast %cst_43 : f32 to vector<8x128xf32>
    %86 = arith.addf %84, %85 : vector<8x128xf32>
    %87 = arith.mulf %76, %14 : vector<8x128xf32>
    %88 = arith.mulf %68, %78 : vector<8x128xf32>
    %89 = arith.addf %87, %88 : vector<8x128xf32>
    %90 = math.tanh %89 : vector<8x128xf32>
    %91 = arith.mulf %86, %90 : vector<8x128xf32>
    %92 = vector.broadcast %c0_i32 : i32 to vector<8x1xi32>
    %93 = arith.cmpi eq, %0, %92 : vector<8x1xi32>
    %94 = vector.shape_cast %93 : vector<8x1xi1> to vector<8x1xi1>
    %95 = vector.broadcast %94 : vector<8x1xi1> to vector<8x128xi1>
    %96 = arith.select %95, %60, %14 : vector<8x128xi1>, vector<8x128xf32>
    %97 = vector.broadcast %15 : i32 to vector<8x1xi32>
    %98 = arith.cmpi eq, %0, %97 : vector<8x1xi32>
    %99 = vector.shape_cast %98 : vector<8x1xi1> to vector<8x1xi1>
    %100 = vector.broadcast %99 : vector<8x1xi1> to vector<8x128xi1>
    %101 = arith.select %100, %91, %14 : vector<8x128xi1>, vector<8x128xf32>
    %c1_i32 = arith.constant 1 : i32
    %c7_i32_44 = arith.constant 7 : i32
    %102 = arith.subi %c7_i32_44, %c1_i32 : i32
    %c8_i32_45 = arith.constant 8 : i32
    %103 = arith.muli %c1_i32, %c8_i32_45 : i32
    %104 = tpu.assume_multiple %103, 8 : i32
    %c8_i32_46 = arith.constant 8 : i32
    %105 = arith.muli %102, %c8_i32_46 : i32
    %106 = tpu.assume_multiple %105, 8 : i32
    %107 = arith.index_cast %104 : i32 to index
    %c0_47 = arith.constant 0 : index
    %108 = vector.load %arg13[%107, %c0_47] : memref<64x512xf32, #tpu.memory_space<vmem>>, vector<8x512xf32>
    %c0_48 = arith.constant 0 : index
    %c0_49 = arith.constant 0 : index
    %109 = vector.load %arg6[%c0_48, %c0_49] : memref<128x512xf32, #tpu.memory_space<vmem>>, vector<128x512xf32>
    %cst_50 = arith.constant dense<0.000000e+00> : vector<8x512xf32>
    %110 = tpu.matmul %60, %109, %cst_50 {dimension_numbers = #tpu.dot_dimension_numbers<[1], [0], [0], [1], [0, 0, 1, 1], [], []>} : vector<8x128xf32>, vector<128x512xf32>, vector<8x512xf32> -> vector<8x512xf32>
    %111 = arith.addf %108, %110 : vector<8x512xf32>
    %112 = arith.index_cast %106 : i32 to index
    %c0_51 = arith.constant 0 : index
    %113 = vector.load %arg14[%112, %c0_51] : memref<64x512xf32, #tpu.memory_space<vmem>>, vector<8x512xf32>
    %c0_52 = arith.constant 0 : index
    %c0_53 = arith.constant 0 : index
    %114 = vector.load %arg7[%c0_52, %c0_53] : memref<128x512xf32, #tpu.memory_space<vmem>>, vector<128x512xf32>
    %cst_54 = arith.constant dense<0.000000e+00> : vector<8x512xf32>
    %115 = tpu.matmul %91, %114, %cst_54 {dimension_numbers = #tpu.dot_dimension_numbers<[1], [0], [0], [1], [0, 0, 1, 1], [], []>} : vector<8x128xf32>, vector<128x512xf32>, vector<8x512xf32> -> vector<8x512xf32>
    %116 = arith.addf %113, %115 : vector<8x512xf32>
    %117 = vector.extract_strided_slice %111 {offsets = [0, 0], sizes = [8, 128], strides = [1, 1]} : vector<8x512xf32> to vector<8x128xf32>
    %cst_55 = arith.constant 5.000000e-01 : f32
    %118 = vector.broadcast %cst_55 : f32 to vector<8x128xf32>
    %119 = arith.mulf %118, %117 : vector<8x128xf32>
    %120 = math.tanh %119 : vector<8x128xf32>
    %cst_56 = arith.constant 5.000000e-01 : f32
    %121 = vector.broadcast %cst_56 : f32 to vector<8x128xf32>
    %122 = arith.mulf %121, %120 : vector<8x128xf32>
    %cst_57 = arith.constant 5.000000e-01 : f32
    %123 = vector.broadcast %cst_57 : f32 to vector<8x128xf32>
    %124 = arith.addf %122, %123 : vector<8x128xf32>
    %125 = vector.extract_strided_slice %111 {offsets = [0, 128], sizes = [8, 128], strides = [1, 1]} : vector<8x512xf32> to vector<8x128xf32>
    %cst_58 = arith.constant 5.000000e-01 : f32
    %126 = vector.broadcast %cst_58 : f32 to vector<8x128xf32>
    %127 = arith.mulf %126, %125 : vector<8x128xf32>
    %128 = math.tanh %127 : vector<8x128xf32>
    %cst_59 = arith.constant 5.000000e-01 : f32
    %129 = vector.broadcast %cst_59 : f32 to vector<8x128xf32>
    %130 = arith.mulf %129, %128 : vector<8x128xf32>
    %cst_60 = arith.constant 5.000000e-01 : f32
    %131 = vector.broadcast %cst_60 : f32 to vector<8x128xf32>
    %132 = arith.addf %130, %131 : vector<8x128xf32>
    %133 = vector.extract_strided_slice %111 {offsets = [0, 256], sizes = [8, 128], strides = [1, 1]} : vector<8x512xf32> to vector<8x128xf32>
    %134 = math.tanh %133 : vector<8x128xf32>
    %135 = vector.extract_strided_slice %111 {offsets = [0, 384], sizes = [8, 128], strides = [1, 1]} : vector<8x512xf32> to vector<8x128xf32>
    %cst_61 = arith.constant 5.000000e-01 : f32
    %136 = vector.broadcast %cst_61 : f32 to vector<8x128xf32>
    %137 = arith.mulf %136, %135 : vector<8x128xf32>
    %138 = math.tanh %137 : vector<8x128xf32>
    %cst_62 = arith.constant 5.000000e-01 : f32
    %139 = vector.broadcast %cst_62 : f32 to vector<8x128xf32>
    %140 = arith.mulf %139, %138 : vector<8x128xf32>
    %cst_63 = arith.constant 5.000000e-01 : f32
    %141 = vector.broadcast %cst_63 : f32 to vector<8x128xf32>
    %142 = arith.addf %140, %141 : vector<8x128xf32>
    %143 = arith.mulf %132, %58 : vector<8x128xf32>
    %144 = arith.mulf %124, %134 : vector<8x128xf32>
    %145 = arith.addf %143, %144 : vector<8x128xf32>
    %146 = math.tanh %145 : vector<8x128xf32>
    %147 = arith.mulf %142, %146 : vector<8x128xf32>
    %148 = vector.extract_strided_slice %116 {offsets = [0, 0], sizes = [8, 128], strides = [1, 1]} : vector<8x512xf32> to vector<8x128xf32>
    %cst_64 = arith.constant 5.000000e-01 : f32
    %149 = vector.broadcast %cst_64 : f32 to vector<8x128xf32>
    %150 = arith.mulf %149, %148 : vector<8x128xf32>
    %151 = math.tanh %150 : vector<8x128xf32>
    %cst_65 = arith.constant 5.000000e-01 : f32
    %152 = vector.broadcast %cst_65 : f32 to vector<8x128xf32>
    %153 = arith.mulf %152, %151 : vector<8x128xf32>
    %cst_66 = arith.constant 5.000000e-01 : f32
    %154 = vector.broadcast %cst_66 : f32 to vector<8x128xf32>
    %155 = arith.addf %153, %154 : vector<8x128xf32>
    %156 = vector.extract_strided_slice %116 {offsets = [0, 128], sizes = [8, 128], strides = [1, 1]} : vector<8x512xf32> to vector<8x128xf32>
    %cst_67 = arith.constant 5.000000e-01 : f32
    %157 = vector.broadcast %cst_67 : f32 to vector<8x128xf32>
    %158 = arith.mulf %157, %156 : vector<8x128xf32>
    %159 = math.tanh %158 : vector<8x128xf32>
    %cst_68 = arith.constant 5.000000e-01 : f32
    %160 = vector.broadcast %cst_68 : f32 to vector<8x128xf32>
    %161 = arith.mulf %160, %159 : vector<8x128xf32>
    %cst_69 = arith.constant 5.000000e-01 : f32
    %162 = vector.broadcast %cst_69 : f32 to vector<8x128xf32>
    %163 = arith.addf %161, %162 : vector<8x128xf32>
    %164 = vector.extract_strided_slice %116 {offsets = [0, 256], sizes = [8, 128], strides = [1, 1]} : vector<8x512xf32> to vector<8x128xf32>
    %165 = math.tanh %164 : vector<8x128xf32>
    %166 = vector.extract_strided_slice %116 {offsets = [0, 384], sizes = [8, 128], strides = [1, 1]} : vector<8x512xf32> to vector<8x128xf32>
    %cst_70 = arith.constant 5.000000e-01 : f32
    %167 = vector.broadcast %cst_70 : f32 to vector<8x128xf32>
    %168 = arith.mulf %167, %166 : vector<8x128xf32>
    %169 = math.tanh %168 : vector<8x128xf32>
    %cst_71 = arith.constant 5.000000e-01 : f32
    %170 = vector.broadcast %cst_71 : f32 to vector<8x128xf32>
    %171 = arith.mulf %170, %169 : vector<8x128xf32>
    %cst_72 = arith.constant 5.000000e-01 : f32
    %172 = vector.broadcast %cst_72 : f32 to vector<8x128xf32>
    %173 = arith.addf %171, %172 : vector<8x128xf32>
    %174 = arith.mulf %163, %89 : vector<8x128xf32>
    %175 = arith.mulf %155, %165 : vector<8x128xf32>
    %176 = arith.addf %174, %175 : vector<8x128xf32>
    %177 = math.tanh %176 : vector<8x128xf32>
    %178 = arith.mulf %173, %177 : vector<8x128xf32>
    %179 = vector.broadcast %c1_i32 : i32 to vector<8x1xi32>
    %180 = arith.cmpi eq, %0, %179 : vector<8x1xi32>
    %181 = vector.shape_cast %180 : vector<8x1xi1> to vector<8x1xi1>
    %182 = vector.broadcast %181 : vector<8x1xi1> to vector<8x128xi1>
    %183 = arith.select %182, %147, %96 : vector<8x128xi1>, vector<8x128xf32>
    %184 = vector.broadcast %102 : i32 to vector<8x1xi32>
    %185 = arith.cmpi eq, %0, %184 : vector<8x1xi32>
    %186 = vector.shape_cast %185 : vector<8x1xi1> to vector<8x1xi1>
    %187 = vector.broadcast %186 : vector<8x1xi1> to vector<8x128xi1>
    %188 = arith.select %187, %178, %101 : vector<8x128xi1>, vector<8x128xf32>
    %c2_i32 = arith.constant 2 : i32
    %c7_i32_73 = arith.constant 7 : i32
    %189 = arith.subi %c7_i32_73, %c2_i32 : i32
    %c8_i32_74 = arith.constant 8 : i32
    %190 = arith.muli %c2_i32, %c8_i32_74 : i32
    %191 = tpu.assume_multiple %190, 8 : i32
    %c8_i32_75 = arith.constant 8 : i32
    %192 = arith.muli %189, %c8_i32_75 : i32
    %193 = tpu.assume_multiple %192, 8 : i32
    %194 = arith.index_cast %191 : i32 to index
    %c0_76 = arith.constant 0 : index
    %195 = vector.load %arg13[%194, %c0_76] : memref<64x512xf32, #tpu.memory_space<vmem>>, vector<8x512xf32>
    %c0_77 = arith.constant 0 : index
    %c0_78 = arith.constant 0 : index
    %196 = vector.load %arg6[%c0_77, %c0_78] : memref<128x512xf32, #tpu.memory_space<vmem>>, vector<128x512xf32>
    %cst_79 = arith.constant dense<0.000000e+00> : vector<8x512xf32>
    %197 = tpu.matmul %147, %196, %cst_79 {dimension_numbers = #tpu.dot_dimension_numbers<[1], [0], [0], [1], [0, 0, 1, 1], [], []>} : vector<8x128xf32>, vector<128x512xf32>, vector<8x512xf32> -> vector<8x512xf32>
    %198 = arith.addf %195, %197 : vector<8x512xf32>
    %199 = arith.index_cast %193 : i32 to index
    %c0_80 = arith.constant 0 : index
    %200 = vector.load %arg14[%199, %c0_80] : memref<64x512xf32, #tpu.memory_space<vmem>>, vector<8x512xf32>
    %c0_81 = arith.constant 0 : index
    %c0_82 = arith.constant 0 : index
    %201 = vector.load %arg7[%c0_81, %c0_82] : memref<128x512xf32, #tpu.memory_space<vmem>>, vector<128x512xf32>
    %cst_83 = arith.constant dense<0.000000e+00> : vector<8x512xf32>
    %202 = tpu.matmul %178, %201, %cst_83 {dimension_numbers = #tpu.dot_dimension_numbers<[1], [0], [0], [1], [0, 0, 1, 1], [], []>} : vector<8x128xf32>, vector<128x512xf32>, vector<8x512xf32> -> vector<8x512xf32>
    %203 = arith.addf %200, %202 : vector<8x512xf32>
    %204 = vector.extract_strided_slice %198 {offsets = [0, 0], sizes = [8, 128], strides = [1, 1]} : vector<8x512xf32> to vector<8x128xf32>
    %cst_84 = arith.constant 5.000000e-01 : f32
    %205 = vector.broadcast %cst_84 : f32 to vector<8x128xf32>
    %206 = arith.mulf %205, %204 : vector<8x128xf32>
    %207 = math.tanh %206 : vector<8x128xf32>
    %cst_85 = arith.constant 5.000000e-01 : f32
    %208 = vector.broadcast %cst_85 : f32 to vector<8x128xf32>
    %209 = arith.mulf %208, %207 : vector<8x128xf32>
    %cst_86 = arith.constant 5.000000e-01 : f32
    %210 = vector.broadcast %cst_86 : f32 to vector<8x128xf32>
    %211 = arith.addf %209, %210 : vector<8x128xf32>
    %212 = vector.extract_strided_slice %198 {offsets = [0, 128], sizes = [8, 128], strides = [1, 1]} : vector<8x512xf32> to vector<8x128xf32>
    %cst_87 = arith.constant 5.000000e-01 : f32
    %213 = vector.broadcast %cst_87 : f32 to vector<8x128xf32>
    %214 = arith.mulf %213, %212 : vector<8x128xf32>
    %215 = math.tanh %214 : vector<8x128xf32>
    %cst_88 = arith.constant 5.000000e-01 : f32
    %216 = vector.broadcast %cst_88 : f32 to vector<8x128xf32>
    %217 = arith.mulf %216, %215 : vector<8x128xf32>
    %cst_89 = arith.constant 5.000000e-01 : f32
    %218 = vector.broadcast %cst_89 : f32 to vector<8x128xf32>
    %219 = arith.addf %217, %218 : vector<8x128xf32>
    %220 = vector.extract_strided_slice %198 {offsets = [0, 256], sizes = [8, 128], strides = [1, 1]} : vector<8x512xf32> to vector<8x128xf32>
    %221 = math.tanh %220 : vector<8x128xf32>
    %222 = vector.extract_strided_slice %198 {offsets = [0, 384], sizes = [8, 128], strides = [1, 1]} : vector<8x512xf32> to vector<8x128xf32>
    %cst_90 = arith.constant 5.000000e-01 : f32
    %223 = vector.broadcast %cst_90 : f32 to vector<8x128xf32>
    %224 = arith.mulf %223, %222 : vector<8x128xf32>
    %225 = math.tanh %224 : vector<8x128xf32>
    %cst_91 = arith.constant 5.000000e-01 : f32
    %226 = vector.broadcast %cst_91 : f32 to vector<8x128xf32>
    %227 = arith.mulf %226, %225 : vector<8x128xf32>
    %cst_92 = arith.constant 5.000000e-01 : f32
    %228 = vector.broadcast %cst_92 : f32 to vector<8x128xf32>
    %229 = arith.addf %227, %228 : vector<8x128xf32>
    %230 = arith.mulf %219, %145 : vector<8x128xf32>
    %231 = arith.mulf %211, %221 : vector<8x128xf32>
    %232 = arith.addf %230, %231 : vector<8x128xf32>
    %233 = math.tanh %232 : vector<8x128xf32>
    %234 = arith.mulf %229, %233 : vector<8x128xf32>
    %235 = vector.extract_strided_slice %203 {offsets = [0, 0], sizes = [8, 128], strides = [1, 1]} : vector<8x512xf32> to vector<8x128xf32>
    %cst_93 = arith.constant 5.000000e-01 : f32
    %236 = vector.broadcast %cst_93 : f32 to vector<8x128xf32>
    %237 = arith.mulf %236, %235 : vector<8x128xf32>
    %238 = math.tanh %237 : vector<8x128xf32>
    %cst_94 = arith.constant 5.000000e-01 : f32
    %239 = vector.broadcast %cst_94 : f32 to vector<8x128xf32>
    %240 = arith.mulf %239, %238 : vector<8x128xf32>
    %cst_95 = arith.constant 5.000000e-01 : f32
    %241 = vector.broadcast %cst_95 : f32 to vector<8x128xf32>
    %242 = arith.addf %240, %241 : vector<8x128xf32>
    %243 = vector.extract_strided_slice %203 {offsets = [0, 128], sizes = [8, 128], strides = [1, 1]} : vector<8x512xf32> to vector<8x128xf32>
    %cst_96 = arith.constant 5.000000e-01 : f32
    %244 = vector.broadcast %cst_96 : f32 to vector<8x128xf32>
    %245 = arith.mulf %244, %243 : vector<8x128xf32>
    %246 = math.tanh %245 : vector<8x128xf32>
    %cst_97 = arith.constant 5.000000e-01 : f32
    %247 = vector.broadcast %cst_97 : f32 to vector<8x128xf32>
    %248 = arith.mulf %247, %246 : vector<8x128xf32>
    %cst_98 = arith.constant 5.000000e-01 : f32
    %249 = vector.broadcast %cst_98 : f32 to vector<8x128xf32>
    %250 = arith.addf %248, %249 : vector<8x128xf32>
    %251 = vector.extract_strided_slice %203 {offsets = [0, 256], sizes = [8, 128], strides = [1, 1]} : vector<8x512xf32> to vector<8x128xf32>
    %252 = math.tanh %251 : vector<8x128xf32>
    %253 = vector.extract_strided_slice %203 {offsets = [0, 384], sizes = [8, 128], strides = [1, 1]} : vector<8x512xf32> to vector<8x128xf32>
    %cst_99 = arith.constant 5.000000e-01 : f32
    %254 = vector.broadcast %cst_99 : f32 to vector<8x128xf32>
    %255 = arith.mulf %254, %253 : vector<8x128xf32>
    %256 = math.tanh %255 : vector<8x128xf32>
    %cst_100 = arith.constant 5.000000e-01 : f32
    %257 = vector.broadcast %cst_100 : f32 to vector<8x128xf32>
    %258 = arith.mulf %257, %256 : vector<8x128xf32>
    %cst_101 = arith.constant 5.000000e-01 : f32
    %259 = vector.broadcast %cst_101 : f32 to vector<8x128xf32>
    %260 = arith.addf %258, %259 : vector<8x128xf32>
    %261 = arith.mulf %250, %176 : vector<8x128xf32>
    %262 = arith.mulf %242, %252 : vector<8x128xf32>
    %263 = arith.addf %261, %262 : vector<8x128xf32>
    %264 = math.tanh %263 : vector<8x128xf32>
    %265 = arith.mulf %260, %264 : vector<8x128xf32>
    %266 = vector.broadcast %c2_i32 : i32 to vector<8x1xi32>
    %267 = arith.cmpi eq, %0, %266 : vector<8x1xi32>
    %268 = vector.shape_cast %267 : vector<8x1xi1> to vector<8x1xi1>
    %269 = vector.broadcast %268 : vector<8x1xi1> to vector<8x128xi1>
    %270 = arith.select %269, %234, %183 : vector<8x128xi1>, vector<8x128xf32>
    %271 = vector.broadcast %189 : i32 to vector<8x1xi32>
    %272 = arith.cmpi eq, %0, %271 : vector<8x1xi32>
    %273 = vector.shape_cast %272 : vector<8x1xi1> to vector<8x1xi1>
    %274 = vector.broadcast %273 : vector<8x1xi1> to vector<8x128xi1>
    %275 = arith.select %274, %265, %188 : vector<8x128xi1>, vector<8x128xf32>
    %c3_i32 = arith.constant 3 : i32
    %c7_i32_102 = arith.constant 7 : i32
    %276 = arith.subi %c7_i32_102, %c3_i32 : i32
    %c8_i32_103 = arith.constant 8 : i32
    %277 = arith.muli %c3_i32, %c8_i32_103 : i32
    %278 = tpu.assume_multiple %277, 8 : i32
    %c8_i32_104 = arith.constant 8 : i32
    %279 = arith.muli %276, %c8_i32_104 : i32
    %280 = tpu.assume_multiple %279, 8 : i32
    %281 = arith.index_cast %278 : i32 to index
    %c0_105 = arith.constant 0 : index
    %282 = vector.load %arg13[%281, %c0_105] : memref<64x512xf32, #tpu.memory_space<vmem>>, vector<8x512xf32>
    %c0_106 = arith.constant 0 : index
    %c0_107 = arith.constant 0 : index
    %283 = vector.load %arg6[%c0_106, %c0_107] : memref<128x512xf32, #tpu.memory_space<vmem>>, vector<128x512xf32>
    %cst_108 = arith.constant dense<0.000000e+00> : vector<8x512xf32>
    %284 = tpu.matmul %234, %283, %cst_108 {dimension_numbers = #tpu.dot_dimension_numbers<[1], [0], [0], [1], [0, 0, 1, 1], [], []>} : vector<8x128xf32>, vector<128x512xf32>, vector<8x512xf32> -> vector<8x512xf32>
    %285 = arith.addf %282, %284 : vector<8x512xf32>
    %286 = arith.index_cast %280 : i32 to index
    %c0_109 = arith.constant 0 : index
    %287 = vector.load %arg14[%286, %c0_109] : memref<64x512xf32, #tpu.memory_space<vmem>>, vector<8x512xf32>
    %c0_110 = arith.constant 0 : index
    %c0_111 = arith.constant 0 : index
    %288 = vector.load %arg7[%c0_110, %c0_111] : memref<128x512xf32, #tpu.memory_space<vmem>>, vector<128x512xf32>
    %cst_112 = arith.constant dense<0.000000e+00> : vector<8x512xf32>
    %289 = tpu.matmul %265, %288, %cst_112 {dimension_numbers = #tpu.dot_dimension_numbers<[1], [0], [0], [1], [0, 0, 1, 1], [], []>} : vector<8x128xf32>, vector<128x512xf32>, vector<8x512xf32> -> vector<8x512xf32>
    %290 = arith.addf %287, %289 : vector<8x512xf32>
    %291 = vector.extract_strided_slice %285 {offsets = [0, 0], sizes = [8, 128], strides = [1, 1]} : vector<8x512xf32> to vector<8x128xf32>
    %cst_113 = arith.constant 5.000000e-01 : f32
    %292 = vector.broadcast %cst_113 : f32 to vector<8x128xf32>
    %293 = arith.mulf %292, %291 : vector<8x128xf32>
    %294 = math.tanh %293 : vector<8x128xf32>
    %cst_114 = arith.constant 5.000000e-01 : f32
    %295 = vector.broadcast %cst_114 : f32 to vector<8x128xf32>
    %296 = arith.mulf %295, %294 : vector<8x128xf32>
    %cst_115 = arith.constant 5.000000e-01 : f32
    %297 = vector.broadcast %cst_115 : f32 to vector<8x128xf32>
    %298 = arith.addf %296, %297 : vector<8x128xf32>
    %299 = vector.extract_strided_slice %285 {offsets = [0, 128], sizes = [8, 128], strides = [1, 1]} : vector<8x512xf32> to vector<8x128xf32>
    %cst_116 = arith.constant 5.000000e-01 : f32
    %300 = vector.broadcast %cst_116 : f32 to vector<8x128xf32>
    %301 = arith.mulf %300, %299 : vector<8x128xf32>
    %302 = math.tanh %301 : vector<8x128xf32>
    %cst_117 = arith.constant 5.000000e-01 : f32
    %303 = vector.broadcast %cst_117 : f32 to vector<8x128xf32>
    %304 = arith.mulf %303, %302 : vector<8x128xf32>
    %cst_118 = arith.constant 5.000000e-01 : f32
    %305 = vector.broadcast %cst_118 : f32 to vector<8x128xf32>
    %306 = arith.addf %304, %305 : vector<8x128xf32>
    %307 = vector.extract_strided_slice %285 {offsets = [0, 256], sizes = [8, 128], strides = [1, 1]} : vector<8x512xf32> to vector<8x128xf32>
    %308 = math.tanh %307 : vector<8x128xf32>
    %309 = vector.extract_strided_slice %285 {offsets = [0, 384], sizes = [8, 128], strides = [1, 1]} : vector<8x512xf32> to vector<8x128xf32>
    %cst_119 = arith.constant 5.000000e-01 : f32
    %310 = vector.broadcast %cst_119 : f32 to vector<8x128xf32>
    %311 = arith.mulf %310, %309 : vector<8x128xf32>
    %312 = math.tanh %311 : vector<8x128xf32>
    %cst_120 = arith.constant 5.000000e-01 : f32
    %313 = vector.broadcast %cst_120 : f32 to vector<8x128xf32>
    %314 = arith.mulf %313, %312 : vector<8x128xf32>
    %cst_121 = arith.constant 5.000000e-01 : f32
    %315 = vector.broadcast %cst_121 : f32 to vector<8x128xf32>
    %316 = arith.addf %314, %315 : vector<8x128xf32>
    %317 = arith.mulf %306, %232 : vector<8x128xf32>
    %318 = arith.mulf %298, %308 : vector<8x128xf32>
    %319 = arith.addf %317, %318 : vector<8x128xf32>
    %320 = math.tanh %319 : vector<8x128xf32>
    %321 = arith.mulf %316, %320 : vector<8x128xf32>
    %322 = vector.extract_strided_slice %290 {offsets = [0, 0], sizes = [8, 128], strides = [1, 1]} : vector<8x512xf32> to vector<8x128xf32>
    %cst_122 = arith.constant 5.000000e-01 : f32
    %323 = vector.broadcast %cst_122 : f32 to vector<8x128xf32>
    %324 = arith.mulf %323, %322 : vector<8x128xf32>
    %325 = math.tanh %324 : vector<8x128xf32>
    %cst_123 = arith.constant 5.000000e-01 : f32
    %326 = vector.broadcast %cst_123 : f32 to vector<8x128xf32>
    %327 = arith.mulf %326, %325 : vector<8x128xf32>
    %cst_124 = arith.constant 5.000000e-01 : f32
    %328 = vector.broadcast %cst_124 : f32 to vector<8x128xf32>
    %329 = arith.addf %327, %328 : vector<8x128xf32>
    %330 = vector.extract_strided_slice %290 {offsets = [0, 128], sizes = [8, 128], strides = [1, 1]} : vector<8x512xf32> to vector<8x128xf32>
    %cst_125 = arith.constant 5.000000e-01 : f32
    %331 = vector.broadcast %cst_125 : f32 to vector<8x128xf32>
    %332 = arith.mulf %331, %330 : vector<8x128xf32>
    %333 = math.tanh %332 : vector<8x128xf32>
    %cst_126 = arith.constant 5.000000e-01 : f32
    %334 = vector.broadcast %cst_126 : f32 to vector<8x128xf32>
    %335 = arith.mulf %334, %333 : vector<8x128xf32>
    %cst_127 = arith.constant 5.000000e-01 : f32
    %336 = vector.broadcast %cst_127 : f32 to vector<8x128xf32>
    %337 = arith.addf %335, %336 : vector<8x128xf32>
    %338 = vector.extract_strided_slice %290 {offsets = [0, 256], sizes = [8, 128], strides = [1, 1]} : vector<8x512xf32> to vector<8x128xf32>
    %339 = math.tanh %338 : vector<8x128xf32>
    %340 = vector.extract_strided_slice %290 {offsets = [0, 384], sizes = [8, 128], strides = [1, 1]} : vector<8x512xf32> to vector<8x128xf32>
    %cst_128 = arith.constant 5.000000e-01 : f32
    %341 = vector.broadcast %cst_128 : f32 to vector<8x128xf32>
    %342 = arith.mulf %341, %340 : vector<8x128xf32>
    %343 = math.tanh %342 : vector<8x128xf32>
    %cst_129 = arith.constant 5.000000e-01 : f32
    %344 = vector.broadcast %cst_129 : f32 to vector<8x128xf32>
    %345 = arith.mulf %344, %343 : vector<8x128xf32>
    %cst_130 = arith.constant 5.000000e-01 : f32
    %346 = vector.broadcast %cst_130 : f32 to vector<8x128xf32>
    %347 = arith.addf %345, %346 : vector<8x128xf32>
    %348 = arith.mulf %337, %263 : vector<8x128xf32>
    %349 = arith.mulf %329, %339 : vector<8x128xf32>
    %350 = arith.addf %348, %349 : vector<8x128xf32>
    %351 = math.tanh %350 : vector<8x128xf32>
    %352 = arith.mulf %347, %351 : vector<8x128xf32>
    %353 = vector.broadcast %c3_i32 : i32 to vector<8x1xi32>
    %354 = arith.cmpi eq, %0, %353 : vector<8x1xi32>
    %355 = vector.shape_cast %354 : vector<8x1xi1> to vector<8x1xi1>
    %356 = vector.broadcast %355 : vector<8x1xi1> to vector<8x128xi1>
    %357 = arith.select %356, %321, %270 : vector<8x128xi1>, vector<8x128xf32>
    %358 = vector.broadcast %276 : i32 to vector<8x1xi32>
    %359 = arith.cmpi eq, %0, %358 : vector<8x1xi32>
    %360 = vector.shape_cast %359 : vector<8x1xi1> to vector<8x1xi1>
    %361 = vector.broadcast %360 : vector<8x1xi1> to vector<8x128xi1>
    %362 = arith.select %361, %352, %275 : vector<8x128xi1>, vector<8x128xf32>
    %c4_i32 = arith.constant 4 : i32
    %c7_i32_131 = arith.constant 7 : i32
    %363 = arith.subi %c7_i32_131, %c4_i32 : i32
    %c8_i32_132 = arith.constant 8 : i32
    %364 = arith.muli %c4_i32, %c8_i32_132 : i32
    %365 = tpu.assume_multiple %364, 8 : i32
    %c8_i32_133 = arith.constant 8 : i32
    %366 = arith.muli %363, %c8_i32_133 : i32
    %367 = tpu.assume_multiple %366, 8 : i32
    %368 = arith.index_cast %365 : i32 to index
    %c0_134 = arith.constant 0 : index
    %369 = vector.load %arg13[%368, %c0_134] : memref<64x512xf32, #tpu.memory_space<vmem>>, vector<8x512xf32>
    %c0_135 = arith.constant 0 : index
    %c0_136 = arith.constant 0 : index
    %370 = vector.load %arg6[%c0_135, %c0_136] : memref<128x512xf32, #tpu.memory_space<vmem>>, vector<128x512xf32>
    %cst_137 = arith.constant dense<0.000000e+00> : vector<8x512xf32>
    %371 = tpu.matmul %321, %370, %cst_137 {dimension_numbers = #tpu.dot_dimension_numbers<[1], [0], [0], [1], [0, 0, 1, 1], [], []>} : vector<8x128xf32>, vector<128x512xf32>, vector<8x512xf32> -> vector<8x512xf32>
    %372 = arith.addf %369, %371 : vector<8x512xf32>
    %373 = arith.index_cast %367 : i32 to index
    %c0_138 = arith.constant 0 : index
    %374 = vector.load %arg14[%373, %c0_138] : memref<64x512xf32, #tpu.memory_space<vmem>>, vector<8x512xf32>
    %c0_139 = arith.constant 0 : index
    %c0_140 = arith.constant 0 : index
    %375 = vector.load %arg7[%c0_139, %c0_140] : memref<128x512xf32, #tpu.memory_space<vmem>>, vector<128x512xf32>
    %cst_141 = arith.constant dense<0.000000e+00> : vector<8x512xf32>
    %376 = tpu.matmul %352, %375, %cst_141 {dimension_numbers = #tpu.dot_dimension_numbers<[1], [0], [0], [1], [0, 0, 1, 1], [], []>} : vector<8x128xf32>, vector<128x512xf32>, vector<8x512xf32> -> vector<8x512xf32>
    %377 = arith.addf %374, %376 : vector<8x512xf32>
    %378 = vector.extract_strided_slice %372 {offsets = [0, 0], sizes = [8, 128], strides = [1, 1]} : vector<8x512xf32> to vector<8x128xf32>
    %cst_142 = arith.constant 5.000000e-01 : f32
    %379 = vector.broadcast %cst_142 : f32 to vector<8x128xf32>
    %380 = arith.mulf %379, %378 : vector<8x128xf32>
    %381 = math.tanh %380 : vector<8x128xf32>
    %cst_143 = arith.constant 5.000000e-01 : f32
    %382 = vector.broadcast %cst_143 : f32 to vector<8x128xf32>
    %383 = arith.mulf %382, %381 : vector<8x128xf32>
    %cst_144 = arith.constant 5.000000e-01 : f32
    %384 = vector.broadcast %cst_144 : f32 to vector<8x128xf32>
    %385 = arith.addf %383, %384 : vector<8x128xf32>
    %386 = vector.extract_strided_slice %372 {offsets = [0, 128], sizes = [8, 128], strides = [1, 1]} : vector<8x512xf32> to vector<8x128xf32>
    %cst_145 = arith.constant 5.000000e-01 : f32
    %387 = vector.broadcast %cst_145 : f32 to vector<8x128xf32>
    %388 = arith.mulf %387, %386 : vector<8x128xf32>
    %389 = math.tanh %388 : vector<8x128xf32>
    %cst_146 = arith.constant 5.000000e-01 : f32
    %390 = vector.broadcast %cst_146 : f32 to vector<8x128xf32>
    %391 = arith.mulf %390, %389 : vector<8x128xf32>
    %cst_147 = arith.constant 5.000000e-01 : f32
    %392 = vector.broadcast %cst_147 : f32 to vector<8x128xf32>
    %393 = arith.addf %391, %392 : vector<8x128xf32>
    %394 = vector.extract_strided_slice %372 {offsets = [0, 256], sizes = [8, 128], strides = [1, 1]} : vector<8x512xf32> to vector<8x128xf32>
    %395 = math.tanh %394 : vector<8x128xf32>
    %396 = vector.extract_strided_slice %372 {offsets = [0, 384], sizes = [8, 128], strides = [1, 1]} : vector<8x512xf32> to vector<8x128xf32>
    %cst_148 = arith.constant 5.000000e-01 : f32
    %397 = vector.broadcast %cst_148 : f32 to vector<8x128xf32>
    %398 = arith.mulf %397, %396 : vector<8x128xf32>
    %399 = math.tanh %398 : vector<8x128xf32>
    %cst_149 = arith.constant 5.000000e-01 : f32
    %400 = vector.broadcast %cst_149 : f32 to vector<8x128xf32>
    %401 = arith.mulf %400, %399 : vector<8x128xf32>
    %cst_150 = arith.constant 5.000000e-01 : f32
    %402 = vector.broadcast %cst_150 : f32 to vector<8x128xf32>
    %403 = arith.addf %401, %402 : vector<8x128xf32>
    %404 = arith.mulf %393, %319 : vector<8x128xf32>
    %405 = arith.mulf %385, %395 : vector<8x128xf32>
    %406 = arith.addf %404, %405 : vector<8x128xf32>
    %407 = math.tanh %406 : vector<8x128xf32>
    %408 = arith.mulf %403, %407 : vector<8x128xf32>
    %409 = vector.extract_strided_slice %377 {offsets = [0, 0], sizes = [8, 128], strides = [1, 1]} : vector<8x512xf32> to vector<8x128xf32>
    %cst_151 = arith.constant 5.000000e-01 : f32
    %410 = vector.broadcast %cst_151 : f32 to vector<8x128xf32>
    %411 = arith.mulf %410, %409 : vector<8x128xf32>
    %412 = math.tanh %411 : vector<8x128xf32>
    %cst_152 = arith.constant 5.000000e-01 : f32
    %413 = vector.broadcast %cst_152 : f32 to vector<8x128xf32>
    %414 = arith.mulf %413, %412 : vector<8x128xf32>
    %cst_153 = arith.constant 5.000000e-01 : f32
    %415 = vector.broadcast %cst_153 : f32 to vector<8x128xf32>
    %416 = arith.addf %414, %415 : vector<8x128xf32>
    %417 = vector.extract_strided_slice %377 {offsets = [0, 128], sizes = [8, 128], strides = [1, 1]} : vector<8x512xf32> to vector<8x128xf32>
    %cst_154 = arith.constant 5.000000e-01 : f32
    %418 = vector.broadcast %cst_154 : f32 to vector<8x128xf32>
    %419 = arith.mulf %418, %417 : vector<8x128xf32>
    %420 = math.tanh %419 : vector<8x128xf32>
    %cst_155 = arith.constant 5.000000e-01 : f32
    %421 = vector.broadcast %cst_155 : f32 to vector<8x128xf32>
    %422 = arith.mulf %421, %420 : vector<8x128xf32>
    %cst_156 = arith.constant 5.000000e-01 : f32
    %423 = vector.broadcast %cst_156 : f32 to vector<8x128xf32>
    %424 = arith.addf %422, %423 : vector<8x128xf32>
    %425 = vector.extract_strided_slice %377 {offsets = [0, 256], sizes = [8, 128], strides = [1, 1]} : vector<8x512xf32> to vector<8x128xf32>
    %426 = math.tanh %425 : vector<8x128xf32>
    %427 = vector.extract_strided_slice %377 {offsets = [0, 384], sizes = [8, 128], strides = [1, 1]} : vector<8x512xf32> to vector<8x128xf32>
    %cst_157 = arith.constant 5.000000e-01 : f32
    %428 = vector.broadcast %cst_157 : f32 to vector<8x128xf32>
    %429 = arith.mulf %428, %427 : vector<8x128xf32>
    %430 = math.tanh %429 : vector<8x128xf32>
    %cst_158 = arith.constant 5.000000e-01 : f32
    %431 = vector.broadcast %cst_158 : f32 to vector<8x128xf32>
    %432 = arith.mulf %431, %430 : vector<8x128xf32>
    %cst_159 = arith.constant 5.000000e-01 : f32
    %433 = vector.broadcast %cst_159 : f32 to vector<8x128xf32>
    %434 = arith.addf %432, %433 : vector<8x128xf32>
    %435 = arith.mulf %424, %350 : vector<8x128xf32>
    %436 = arith.mulf %416, %426 : vector<8x128xf32>
    %437 = arith.addf %435, %436 : vector<8x128xf32>
    %438 = math.tanh %437 : vector<8x128xf32>
    %439 = arith.mulf %434, %438 : vector<8x128xf32>
    %440 = vector.broadcast %c4_i32 : i32 to vector<8x1xi32>
    %441 = arith.cmpi eq, %0, %440 : vector<8x1xi32>
    %442 = vector.shape_cast %441 : vector<8x1xi1> to vector<8x1xi1>
    %443 = vector.broadcast %442 : vector<8x1xi1> to vector<8x128xi1>
    %444 = arith.select %443, %408, %357 : vector<8x128xi1>, vector<8x128xf32>
    %445 = vector.broadcast %363 : i32 to vector<8x1xi32>
    %446 = arith.cmpi eq, %0, %445 : vector<8x1xi32>
    %447 = vector.shape_cast %446 : vector<8x1xi1> to vector<8x1xi1>
    %448 = vector.broadcast %447 : vector<8x1xi1> to vector<8x128xi1>
    %449 = arith.select %448, %439, %362 : vector<8x128xi1>, vector<8x128xf32>
    %c5_i32 = arith.constant 5 : i32
    %c7_i32_160 = arith.constant 7 : i32
    %450 = arith.subi %c7_i32_160, %c5_i32 : i32
    %c8_i32_161 = arith.constant 8 : i32
    %451 = arith.muli %c5_i32, %c8_i32_161 : i32
    %452 = tpu.assume_multiple %451, 8 : i32
    %c8_i32_162 = arith.constant 8 : i32
    %453 = arith.muli %450, %c8_i32_162 : i32
    %454 = tpu.assume_multiple %453, 8 : i32
    %455 = arith.index_cast %452 : i32 to index
    %c0_163 = arith.constant 0 : index
    %456 = vector.load %arg13[%455, %c0_163] : memref<64x512xf32, #tpu.memory_space<vmem>>, vector<8x512xf32>
    %c0_164 = arith.constant 0 : index
    %c0_165 = arith.constant 0 : index
    %457 = vector.load %arg6[%c0_164, %c0_165] : memref<128x512xf32, #tpu.memory_space<vmem>>, vector<128x512xf32>
    %cst_166 = arith.constant dense<0.000000e+00> : vector<8x512xf32>
    %458 = tpu.matmul %408, %457, %cst_166 {dimension_numbers = #tpu.dot_dimension_numbers<[1], [0], [0], [1], [0, 0, 1, 1], [], []>} : vector<8x128xf32>, vector<128x512xf32>, vector<8x512xf32> -> vector<8x512xf32>
    %459 = arith.addf %456, %458 : vector<8x512xf32>
    %460 = arith.index_cast %454 : i32 to index
    %c0_167 = arith.constant 0 : index
    %461 = vector.load %arg14[%460, %c0_167] : memref<64x512xf32, #tpu.memory_space<vmem>>, vector<8x512xf32>
    %c0_168 = arith.constant 0 : index
    %c0_169 = arith.constant 0 : index
    %462 = vector.load %arg7[%c0_168, %c0_169] : memref<128x512xf32, #tpu.memory_space<vmem>>, vector<128x512xf32>
    %cst_170 = arith.constant dense<0.000000e+00> : vector<8x512xf32>
    %463 = tpu.matmul %439, %462, %cst_170 {dimension_numbers = #tpu.dot_dimension_numbers<[1], [0], [0], [1], [0, 0, 1, 1], [], []>} : vector<8x128xf32>, vector<128x512xf32>, vector<8x512xf32> -> vector<8x512xf32>
    %464 = arith.addf %461, %463 : vector<8x512xf32>
    %465 = vector.extract_strided_slice %459 {offsets = [0, 0], sizes = [8, 128], strides = [1, 1]} : vector<8x512xf32> to vector<8x128xf32>
    %cst_171 = arith.constant 5.000000e-01 : f32
    %466 = vector.broadcast %cst_171 : f32 to vector<8x128xf32>
    %467 = arith.mulf %466, %465 : vector<8x128xf32>
    %468 = math.tanh %467 : vector<8x128xf32>
    %cst_172 = arith.constant 5.000000e-01 : f32
    %469 = vector.broadcast %cst_172 : f32 to vector<8x128xf32>
    %470 = arith.mulf %469, %468 : vector<8x128xf32>
    %cst_173 = arith.constant 5.000000e-01 : f32
    %471 = vector.broadcast %cst_173 : f32 to vector<8x128xf32>
    %472 = arith.addf %470, %471 : vector<8x128xf32>
    %473 = vector.extract_strided_slice %459 {offsets = [0, 128], sizes = [8, 128], strides = [1, 1]} : vector<8x512xf32> to vector<8x128xf32>
    %cst_174 = arith.constant 5.000000e-01 : f32
    %474 = vector.broadcast %cst_174 : f32 to vector<8x128xf32>
    %475 = arith.mulf %474, %473 : vector<8x128xf32>
    %476 = math.tanh %475 : vector<8x128xf32>
    %cst_175 = arith.constant 5.000000e-01 : f32
    %477 = vector.broadcast %cst_175 : f32 to vector<8x128xf32>
    %478 = arith.mulf %477, %476 : vector<8x128xf32>
    %cst_176 = arith.constant 5.000000e-01 : f32
    %479 = vector.broadcast %cst_176 : f32 to vector<8x128xf32>
    %480 = arith.addf %478, %479 : vector<8x128xf32>
    %481 = vector.extract_strided_slice %459 {offsets = [0, 256], sizes = [8, 128], strides = [1, 1]} : vector<8x512xf32> to vector<8x128xf32>
    %482 = math.tanh %481 : vector<8x128xf32>
    %483 = vector.extract_strided_slice %459 {offsets = [0, 384], sizes = [8, 128], strides = [1, 1]} : vector<8x512xf32> to vector<8x128xf32>
    %cst_177 = arith.constant 5.000000e-01 : f32
    %484 = vector.broadcast %cst_177 : f32 to vector<8x128xf32>
    %485 = arith.mulf %484, %483 : vector<8x128xf32>
    %486 = math.tanh %485 : vector<8x128xf32>
    %cst_178 = arith.constant 5.000000e-01 : f32
    %487 = vector.broadcast %cst_178 : f32 to vector<8x128xf32>
    %488 = arith.mulf %487, %486 : vector<8x128xf32>
    %cst_179 = arith.constant 5.000000e-01 : f32
    %489 = vector.broadcast %cst_179 : f32 to vector<8x128xf32>
    %490 = arith.addf %488, %489 : vector<8x128xf32>
    %491 = arith.mulf %480, %406 : vector<8x128xf32>
    %492 = arith.mulf %472, %482 : vector<8x128xf32>
    %493 = arith.addf %491, %492 : vector<8x128xf32>
    %494 = math.tanh %493 : vector<8x128xf32>
    %495 = arith.mulf %490, %494 : vector<8x128xf32>
    %496 = vector.extract_strided_slice %464 {offsets = [0, 0], sizes = [8, 128], strides = [1, 1]} : vector<8x512xf32> to vector<8x128xf32>
    %cst_180 = arith.constant 5.000000e-01 : f32
    %497 = vector.broadcast %cst_180 : f32 to vector<8x128xf32>
    %498 = arith.mulf %497, %496 : vector<8x128xf32>
    %499 = math.tanh %498 : vector<8x128xf32>
    %cst_181 = arith.constant 5.000000e-01 : f32
    %500 = vector.broadcast %cst_181 : f32 to vector<8x128xf32>
    %501 = arith.mulf %500, %499 : vector<8x128xf32>
    %cst_182 = arith.constant 5.000000e-01 : f32
    %502 = vector.broadcast %cst_182 : f32 to vector<8x128xf32>
    %503 = arith.addf %501, %502 : vector<8x128xf32>
    %504 = vector.extract_strided_slice %464 {offsets = [0, 128], sizes = [8, 128], strides = [1, 1]} : vector<8x512xf32> to vector<8x128xf32>
    %cst_183 = arith.constant 5.000000e-01 : f32
    %505 = vector.broadcast %cst_183 : f32 to vector<8x128xf32>
    %506 = arith.mulf %505, %504 : vector<8x128xf32>
    %507 = math.tanh %506 : vector<8x128xf32>
    %cst_184 = arith.constant 5.000000e-01 : f32
    %508 = vector.broadcast %cst_184 : f32 to vector<8x128xf32>
    %509 = arith.mulf %508, %507 : vector<8x128xf32>
    %cst_185 = arith.constant 5.000000e-01 : f32
    %510 = vector.broadcast %cst_185 : f32 to vector<8x128xf32>
    %511 = arith.addf %509, %510 : vector<8x128xf32>
    %512 = vector.extract_strided_slice %464 {offsets = [0, 256], sizes = [8, 128], strides = [1, 1]} : vector<8x512xf32> to vector<8x128xf32>
    %513 = math.tanh %512 : vector<8x128xf32>
    %514 = vector.extract_strided_slice %464 {offsets = [0, 384], sizes = [8, 128], strides = [1, 1]} : vector<8x512xf32> to vector<8x128xf32>
    %cst_186 = arith.constant 5.000000e-01 : f32
    %515 = vector.broadcast %cst_186 : f32 to vector<8x128xf32>
    %516 = arith.mulf %515, %514 : vector<8x128xf32>
    %517 = math.tanh %516 : vector<8x128xf32>
    %cst_187 = arith.constant 5.000000e-01 : f32
    %518 = vector.broadcast %cst_187 : f32 to vector<8x128xf32>
    %519 = arith.mulf %518, %517 : vector<8x128xf32>
    %cst_188 = arith.constant 5.000000e-01 : f32
    %520 = vector.broadcast %cst_188 : f32 to vector<8x128xf32>
    %521 = arith.addf %519, %520 : vector<8x128xf32>
    %522 = arith.mulf %511, %437 : vector<8x128xf32>
    %523 = arith.mulf %503, %513 : vector<8x128xf32>
    %524 = arith.addf %522, %523 : vector<8x128xf32>
    %525 = math.tanh %524 : vector<8x128xf32>
    %526 = arith.mulf %521, %525 : vector<8x128xf32>
    %527 = vector.broadcast %c5_i32 : i32 to vector<8x1xi32>
    %528 = arith.cmpi eq, %0, %527 : vector<8x1xi32>
    %529 = vector.shape_cast %528 : vector<8x1xi1> to vector<8x1xi1>
    %530 = vector.broadcast %529 : vector<8x1xi1> to vector<8x128xi1>
    %531 = arith.select %530, %495, %444 : vector<8x128xi1>, vector<8x128xf32>
    %532 = vector.broadcast %450 : i32 to vector<8x1xi32>
    %533 = arith.cmpi eq, %0, %532 : vector<8x1xi32>
    %534 = vector.shape_cast %533 : vector<8x1xi1> to vector<8x1xi1>
    %535 = vector.broadcast %534 : vector<8x1xi1> to vector<8x128xi1>
    %536 = arith.select %535, %526, %449 : vector<8x128xi1>, vector<8x128xf32>
    %c6_i32 = arith.constant 6 : i32
    %c7_i32_189 = arith.constant 7 : i32
    %537 = arith.subi %c7_i32_189, %c6_i32 : i32
    %c8_i32_190 = arith.constant 8 : i32
    %538 = arith.muli %c6_i32, %c8_i32_190 : i32
    %539 = tpu.assume_multiple %538, 8 : i32
    %c8_i32_191 = arith.constant 8 : i32
    %540 = arith.muli %537, %c8_i32_191 : i32
    %541 = tpu.assume_multiple %540, 8 : i32
    %542 = arith.index_cast %539 : i32 to index
    %c0_192 = arith.constant 0 : index
    %543 = vector.load %arg13[%542, %c0_192] : memref<64x512xf32, #tpu.memory_space<vmem>>, vector<8x512xf32>
    %c0_193 = arith.constant 0 : index
    %c0_194 = arith.constant 0 : index
    %544 = vector.load %arg6[%c0_193, %c0_194] : memref<128x512xf32, #tpu.memory_space<vmem>>, vector<128x512xf32>
    %cst_195 = arith.constant dense<0.000000e+00> : vector<8x512xf32>
    %545 = tpu.matmul %495, %544, %cst_195 {dimension_numbers = #tpu.dot_dimension_numbers<[1], [0], [0], [1], [0, 0, 1, 1], [], []>} : vector<8x128xf32>, vector<128x512xf32>, vector<8x512xf32> -> vector<8x512xf32>
    %546 = arith.addf %543, %545 : vector<8x512xf32>
    %547 = arith.index_cast %541 : i32 to index
    %c0_196 = arith.constant 0 : index
    %548 = vector.load %arg14[%547, %c0_196] : memref<64x512xf32, #tpu.memory_space<vmem>>, vector<8x512xf32>
    %c0_197 = arith.constant 0 : index
    %c0_198 = arith.constant 0 : index
    %549 = vector.load %arg7[%c0_197, %c0_198] : memref<128x512xf32, #tpu.memory_space<vmem>>, vector<128x512xf32>
    %cst_199 = arith.constant dense<0.000000e+00> : vector<8x512xf32>
    %550 = tpu.matmul %526, %549, %cst_199 {dimension_numbers = #tpu.dot_dimension_numbers<[1], [0], [0], [1], [0, 0, 1, 1], [], []>} : vector<8x128xf32>, vector<128x512xf32>, vector<8x512xf32> -> vector<8x512xf32>
    %551 = arith.addf %548, %550 : vector<8x512xf32>
    %552 = vector.extract_strided_slice %546 {offsets = [0, 0], sizes = [8, 128], strides = [1, 1]} : vector<8x512xf32> to vector<8x128xf32>
    %cst_200 = arith.constant 5.000000e-01 : f32
    %553 = vector.broadcast %cst_200 : f32 to vector<8x128xf32>
    %554 = arith.mulf %553, %552 : vector<8x128xf32>
    %555 = math.tanh %554 : vector<8x128xf32>
    %cst_201 = arith.constant 5.000000e-01 : f32
    %556 = vector.broadcast %cst_201 : f32 to vector<8x128xf32>
    %557 = arith.mulf %556, %555 : vector<8x128xf32>
    %cst_202 = arith.constant 5.000000e-01 : f32
    %558 = vector.broadcast %cst_202 : f32 to vector<8x128xf32>
    %559 = arith.addf %557, %558 : vector<8x128xf32>
    %560 = vector.extract_strided_slice %546 {offsets = [0, 128], sizes = [8, 128], strides = [1, 1]} : vector<8x512xf32> to vector<8x128xf32>
    %cst_203 = arith.constant 5.000000e-01 : f32
    %561 = vector.broadcast %cst_203 : f32 to vector<8x128xf32>
    %562 = arith.mulf %561, %560 : vector<8x128xf32>
    %563 = math.tanh %562 : vector<8x128xf32>
    %cst_204 = arith.constant 5.000000e-01 : f32
    %564 = vector.broadcast %cst_204 : f32 to vector<8x128xf32>
    %565 = arith.mulf %564, %563 : vector<8x128xf32>
    %cst_205 = arith.constant 5.000000e-01 : f32
    %566 = vector.broadcast %cst_205 : f32 to vector<8x128xf32>
    %567 = arith.addf %565, %566 : vector<8x128xf32>
    %568 = vector.extract_strided_slice %546 {offsets = [0, 256], sizes = [8, 128], strides = [1, 1]} : vector<8x512xf32> to vector<8x128xf32>
    %569 = math.tanh %568 : vector<8x128xf32>
    %570 = vector.extract_strided_slice %546 {offsets = [0, 384], sizes = [8, 128], strides = [1, 1]} : vector<8x512xf32> to vector<8x128xf32>
    %cst_206 = arith.constant 5.000000e-01 : f32
    %571 = vector.broadcast %cst_206 : f32 to vector<8x128xf32>
    %572 = arith.mulf %571, %570 : vector<8x128xf32>
    %573 = math.tanh %572 : vector<8x128xf32>
    %cst_207 = arith.constant 5.000000e-01 : f32
    %574 = vector.broadcast %cst_207 : f32 to vector<8x128xf32>
    %575 = arith.mulf %574, %573 : vector<8x128xf32>
    %cst_208 = arith.constant 5.000000e-01 : f32
    %576 = vector.broadcast %cst_208 : f32 to vector<8x128xf32>
    %577 = arith.addf %575, %576 : vector<8x128xf32>
    %578 = arith.mulf %567, %493 : vector<8x128xf32>
    %579 = arith.mulf %559, %569 : vector<8x128xf32>
    %580 = arith.addf %578, %579 : vector<8x128xf32>
    %581 = math.tanh %580 : vector<8x128xf32>
    %582 = arith.mulf %577, %581 : vector<8x128xf32>
    %583 = vector.extract_strided_slice %551 {offsets = [0, 0], sizes = [8, 128], strides = [1, 1]} : vector<8x512xf32> to vector<8x128xf32>
    %cst_209 = arith.constant 5.000000e-01 : f32
    %584 = vector.broadcast %cst_209 : f32 to vector<8x128xf32>
    %585 = arith.mulf %584, %583 : vector<8x128xf32>
    %586 = math.tanh %585 : vector<8x128xf32>
    %cst_210 = arith.constant 5.000000e-01 : f32
    %587 = vector.broadcast %cst_210 : f32 to vector<8x128xf32>
    %588 = arith.mulf %587, %586 : vector<8x128xf32>
    %cst_211 = arith.constant 5.000000e-01 : f32
    %589 = vector.broadcast %cst_211 : f32 to vector<8x128xf32>
    %590 = arith.addf %588, %589 : vector<8x128xf32>
    %591 = vector.extract_strided_slice %551 {offsets = [0, 128], sizes = [8, 128], strides = [1, 1]} : vector<8x512xf32> to vector<8x128xf32>
    %cst_212 = arith.constant 5.000000e-01 : f32
    %592 = vector.broadcast %cst_212 : f32 to vector<8x128xf32>
    %593 = arith.mulf %592, %591 : vector<8x128xf32>
    %594 = math.tanh %593 : vector<8x128xf32>
    %cst_213 = arith.constant 5.000000e-01 : f32
    %595 = vector.broadcast %cst_213 : f32 to vector<8x128xf32>
    %596 = arith.mulf %595, %594 : vector<8x128xf32>
    %cst_214 = arith.constant 5.000000e-01 : f32
    %597 = vector.broadcast %cst_214 : f32 to vector<8x128xf32>
    %598 = arith.addf %596, %597 : vector<8x128xf32>
    %599 = vector.extract_strided_slice %551 {offsets = [0, 256], sizes = [8, 128], strides = [1, 1]} : vector<8x512xf32> to vector<8x128xf32>
    %600 = math.tanh %599 : vector<8x128xf32>
    %601 = vector.extract_strided_slice %551 {offsets = [0, 384], sizes = [8, 128], strides = [1, 1]} : vector<8x512xf32> to vector<8x128xf32>
    %cst_215 = arith.constant 5.000000e-01 : f32
    %602 = vector.broadcast %cst_215 : f32 to vector<8x128xf32>
    %603 = arith.mulf %602, %601 : vector<8x128xf32>
    %604 = math.tanh %603 : vector<8x128xf32>
    %cst_216 = arith.constant 5.000000e-01 : f32
    %605 = vector.broadcast %cst_216 : f32 to vector<8x128xf32>
    %606 = arith.mulf %605, %604 : vector<8x128xf32>
    %cst_217 = arith.constant 5.000000e-01 : f32
    %607 = vector.broadcast %cst_217 : f32 to vector<8x128xf32>
    %608 = arith.addf %606, %607 : vector<8x128xf32>
    %609 = arith.mulf %598, %524 : vector<8x128xf32>
    %610 = arith.mulf %590, %600 : vector<8x128xf32>
    %611 = arith.addf %609, %610 : vector<8x128xf32>
    %612 = math.tanh %611 : vector<8x128xf32>
    %613 = arith.mulf %608, %612 : vector<8x128xf32>
    %614 = vector.broadcast %c6_i32 : i32 to vector<8x1xi32>
    %615 = arith.cmpi eq, %0, %614 : vector<8x1xi32>
    %616 = vector.shape_cast %615 : vector<8x1xi1> to vector<8x1xi1>
    %617 = vector.broadcast %616 : vector<8x1xi1> to vector<8x128xi1>
    %618 = arith.select %617, %582, %531 : vector<8x128xi1>, vector<8x128xf32>
    %619 = vector.broadcast %537 : i32 to vector<8x1xi32>
    %620 = arith.cmpi eq, %0, %619 : vector<8x1xi32>
    %621 = vector.shape_cast %620 : vector<8x1xi1> to vector<8x1xi1>
    %622 = vector.broadcast %621 : vector<8x1xi1> to vector<8x128xi1>
    %623 = arith.select %622, %613, %536 : vector<8x128xi1>, vector<8x128xf32>
    %c7_i32_218 = arith.constant 7 : i32
    %c7_i32_219 = arith.constant 7 : i32
    %624 = arith.subi %c7_i32_219, %c7_i32_218 : i32
    %c8_i32_220 = arith.constant 8 : i32
    %625 = arith.muli %c7_i32_218, %c8_i32_220 : i32
    %626 = tpu.assume_multiple %625, 8 : i32
    %c8_i32_221 = arith.constant 8 : i32
    %627 = arith.muli %624, %c8_i32_221 : i32
    %628 = tpu.assume_multiple %627, 8 : i32
    %629 = arith.index_cast %626 : i32 to index
    %c0_222 = arith.constant 0 : index
    %630 = vector.load %arg13[%629, %c0_222] : memref<64x512xf32, #tpu.memory_space<vmem>>, vector<8x512xf32>
    %c0_223 = arith.constant 0 : index
    %c0_224 = arith.constant 0 : index
    %631 = vector.load %arg6[%c0_223, %c0_224] : memref<128x512xf32, #tpu.memory_space<vmem>>, vector<128x512xf32>
    %cst_225 = arith.constant dense<0.000000e+00> : vector<8x512xf32>
    %632 = tpu.matmul %582, %631, %cst_225 {dimension_numbers = #tpu.dot_dimension_numbers<[1], [0], [0], [1], [0, 0, 1, 1], [], []>} : vector<8x128xf32>, vector<128x512xf32>, vector<8x512xf32> -> vector<8x512xf32>
    %633 = arith.addf %630, %632 : vector<8x512xf32>
    %634 = arith.index_cast %628 : i32 to index
    %c0_226 = arith.constant 0 : index
    %635 = vector.load %arg14[%634, %c0_226] : memref<64x512xf32, #tpu.memory_space<vmem>>, vector<8x512xf32>
    %c0_227 = arith.constant 0 : index
    %c0_228 = arith.constant 0 : index
    %636 = vector.load %arg7[%c0_227, %c0_228] : memref<128x512xf32, #tpu.memory_space<vmem>>, vector<128x512xf32>
    %cst_229 = arith.constant dense<0.000000e+00> : vector<8x512xf32>
    %637 = tpu.matmul %613, %636, %cst_229 {dimension_numbers = #tpu.dot_dimension_numbers<[1], [0], [0], [1], [0, 0, 1, 1], [], []>} : vector<8x128xf32>, vector<128x512xf32>, vector<8x512xf32> -> vector<8x512xf32>
    %638 = arith.addf %635, %637 : vector<8x512xf32>
    %639 = vector.extract_strided_slice %633 {offsets = [0, 0], sizes = [8, 128], strides = [1, 1]} : vector<8x512xf32> to vector<8x128xf32>
    %cst_230 = arith.constant 5.000000e-01 : f32
    %640 = vector.broadcast %cst_230 : f32 to vector<8x128xf32>
    %641 = arith.mulf %640, %639 : vector<8x128xf32>
    %642 = math.tanh %641 : vector<8x128xf32>
    %cst_231 = arith.constant 5.000000e-01 : f32
    %643 = vector.broadcast %cst_231 : f32 to vector<8x128xf32>
    %644 = arith.mulf %643, %642 : vector<8x128xf32>
    %cst_232 = arith.constant 5.000000e-01 : f32
    %645 = vector.broadcast %cst_232 : f32 to vector<8x128xf32>
    %646 = arith.addf %644, %645 : vector<8x128xf32>
    %647 = vector.extract_strided_slice %633 {offsets = [0, 128], sizes = [8, 128], strides = [1, 1]} : vector<8x512xf32> to vector<8x128xf32>
    %cst_233 = arith.constant 5.000000e-01 : f32
    %648 = vector.broadcast %cst_233 : f32 to vector<8x128xf32>
    %649 = arith.mulf %648, %647 : vector<8x128xf32>
    %650 = math.tanh %649 : vector<8x128xf32>
    %cst_234 = arith.constant 5.000000e-01 : f32
    %651 = vector.broadcast %cst_234 : f32 to vector<8x128xf32>
    %652 = arith.mulf %651, %650 : vector<8x128xf32>
    %cst_235 = arith.constant 5.000000e-01 : f32
    %653 = vector.broadcast %cst_235 : f32 to vector<8x128xf32>
    %654 = arith.addf %652, %653 : vector<8x128xf32>
    %655 = vector.extract_strided_slice %633 {offsets = [0, 256], sizes = [8, 128], strides = [1, 1]} : vector<8x512xf32> to vector<8x128xf32>
    %656 = math.tanh %655 : vector<8x128xf32>
    %657 = vector.extract_strided_slice %633 {offsets = [0, 384], sizes = [8, 128], strides = [1, 1]} : vector<8x512xf32> to vector<8x128xf32>
    %cst_236 = arith.constant 5.000000e-01 : f32
    %658 = vector.broadcast %cst_236 : f32 to vector<8x128xf32>
    %659 = arith.mulf %658, %657 : vector<8x128xf32>
    %660 = math.tanh %659 : vector<8x128xf32>
    %cst_237 = arith.constant 5.000000e-01 : f32
    %661 = vector.broadcast %cst_237 : f32 to vector<8x128xf32>
    %662 = arith.mulf %661, %660 : vector<8x128xf32>
    %cst_238 = arith.constant 5.000000e-01 : f32
    %663 = vector.broadcast %cst_238 : f32 to vector<8x128xf32>
    %664 = arith.addf %662, %663 : vector<8x128xf32>
    %665 = arith.mulf %654, %580 : vector<8x128xf32>
    %666 = arith.mulf %646, %656 : vector<8x128xf32>
    %667 = arith.addf %665, %666 : vector<8x128xf32>
    %668 = math.tanh %667 : vector<8x128xf32>
    %669 = arith.mulf %664, %668 : vector<8x128xf32>
    %670 = vector.extract_strided_slice %638 {offsets = [0, 0], sizes = [8, 128], strides = [1, 1]} : vector<8x512xf32> to vector<8x128xf32>
    %cst_239 = arith.constant 5.000000e-01 : f32
    %671 = vector.broadcast %cst_239 : f32 to vector<8x128xf32>
    %672 = arith.mulf %671, %670 : vector<8x128xf32>
    %673 = math.tanh %672 : vector<8x128xf32>
    %cst_240 = arith.constant 5.000000e-01 : f32
    %674 = vector.broadcast %cst_240 : f32 to vector<8x128xf32>
    %675 = arith.mulf %674, %673 : vector<8x128xf32>
    %cst_241 = arith.constant 5.000000e-01 : f32
    %676 = vector.broadcast %cst_241 : f32 to vector<8x128xf32>
    %677 = arith.addf %675, %676 : vector<8x128xf32>
    %678 = vector.extract_strided_slice %638 {offsets = [0, 128], sizes = [8, 128], strides = [1, 1]} : vector<8x512xf32> to vector<8x128xf32>
    %cst_242 = arith.constant 5.000000e-01 : f32
    %679 = vector.broadcast %cst_242 : f32 to vector<8x128xf32>
    %680 = arith.mulf %679, %678 : vector<8x128xf32>
    %681 = math.tanh %680 : vector<8x128xf32>
    %cst_243 = arith.constant 5.000000e-01 : f32
    %682 = vector.broadcast %cst_243 : f32 to vector<8x128xf32>
    %683 = arith.mulf %682, %681 : vector<8x128xf32>
    %cst_244 = arith.constant 5.000000e-01 : f32
    %684 = vector.broadcast %cst_244 : f32 to vector<8x128xf32>
    %685 = arith.addf %683, %684 : vector<8x128xf32>
    %686 = vector.extract_strided_slice %638 {offsets = [0, 256], sizes = [8, 128], strides = [1, 1]} : vector<8x512xf32> to vector<8x128xf32>
    %687 = math.tanh %686 : vector<8x128xf32>
    %688 = vector.extract_strided_slice %638 {offsets = [0, 384], sizes = [8, 128], strides = [1, 1]} : vector<8x512xf32> to vector<8x128xf32>
    %cst_245 = arith.constant 5.000000e-01 : f32
    %689 = vector.broadcast %cst_245 : f32 to vector<8x128xf32>
    %690 = arith.mulf %689, %688 : vector<8x128xf32>
    %691 = math.tanh %690 : vector<8x128xf32>
    %cst_246 = arith.constant 5.000000e-01 : f32
    %692 = vector.broadcast %cst_246 : f32 to vector<8x128xf32>
    %693 = arith.mulf %692, %691 : vector<8x128xf32>
    %cst_247 = arith.constant 5.000000e-01 : f32
    %694 = vector.broadcast %cst_247 : f32 to vector<8x128xf32>
    %695 = arith.addf %693, %694 : vector<8x128xf32>
    %696 = arith.mulf %685, %611 : vector<8x128xf32>
    %697 = arith.mulf %677, %687 : vector<8x128xf32>
    %698 = arith.addf %696, %697 : vector<8x128xf32>
    %699 = math.tanh %698 : vector<8x128xf32>
    %700 = arith.mulf %695, %699 : vector<8x128xf32>
    %701 = vector.broadcast %c7_i32_218 : i32 to vector<8x1xi32>
    %702 = arith.cmpi eq, %0, %701 : vector<8x1xi32>
    %703 = vector.shape_cast %702 : vector<8x1xi1> to vector<8x1xi1>
    %704 = vector.broadcast %703 : vector<8x1xi1> to vector<8x128xi1>
    %705 = arith.select %704, %669, %618 : vector<8x128xi1>, vector<8x128xf32>
    %706 = vector.broadcast %624 : i32 to vector<8x1xi32>
    %707 = arith.cmpi eq, %0, %706 : vector<8x1xi32>
    %708 = vector.shape_cast %707 : vector<8x1xi1> to vector<8x1xi1>
    %709 = vector.broadcast %708 : vector<8x1xi1> to vector<8x128xi1>
    %710 = arith.select %709, %700, %623 : vector<8x128xi1>, vector<8x128xf32>
    %c8_i32_248 = arith.constant 8 : i32
    %711 = vector.extract_strided_slice %705 {offsets = [0, 0], sizes = [4, 128], strides = [1, 1]} : vector<8x128xf32> to vector<4x128xf32>
    %712 = vector.extract_strided_slice %705 {offsets = [0, 0], sizes = [2, 128], strides = [1, 1]} : vector<8x128xf32> to vector<2x128xf32>
    %cst_249 = arith.constant 0.000000e+00 : f32
    %713 = vector.broadcast %cst_249 : f32 to vector<2x128xf32>
    %714 = tpu.concatenate %711, %712, %713 in 0 : vector<4x128xf32>, vector<2x128xf32>, vector<2x128xf32> -> vector<8x128xf32>
    %715 = vector.extract_strided_slice %710 {offsets = [0, 0], sizes = [4, 128], strides = [1, 1]} : vector<8x128xf32> to vector<4x128xf32>
    %716 = vector.extract_strided_slice %710 {offsets = [0, 0], sizes = [2, 128], strides = [1, 1]} : vector<8x128xf32> to vector<2x128xf32>
    %cst_250 = arith.constant 0.000000e+00 : f32
    %717 = vector.broadcast %cst_250 : f32 to vector<2x128xf32>
    %718 = tpu.concatenate %715, %716, %717 in 0 : vector<4x128xf32>, vector<2x128xf32>, vector<2x128xf32> -> vector<8x128xf32>
    %719 = vector.extract_strided_slice %705 {offsets = [2, 0], sizes = [4, 128], strides = [1, 1]} : vector<8x128xf32> to vector<4x128xf32>
    %720 = vector.extract_strided_slice %705 {offsets = [4, 0], sizes = [2, 128], strides = [1, 1]} : vector<8x128xf32> to vector<2x128xf32>
    %cst_251 = arith.constant 0.000000e+00 : f32
    %721 = vector.broadcast %cst_251 : f32 to vector<2x128xf32>
    %722 = tpu.concatenate %719, %720, %721 in 0 : vector<4x128xf32>, vector<2x128xf32>, vector<2x128xf32> -> vector<8x128xf32>
    %723 = vector.extract_strided_slice %710 {offsets = [2, 0], sizes = [4, 128], strides = [1, 1]} : vector<8x128xf32> to vector<4x128xf32>
    %724 = vector.extract_strided_slice %710 {offsets = [4, 0], sizes = [2, 128], strides = [1, 1]} : vector<8x128xf32> to vector<2x128xf32>
    %cst_252 = arith.constant 0.000000e+00 : f32
    %725 = vector.broadcast %cst_252 : f32 to vector<2x128xf32>
    %726 = tpu.concatenate %723, %724, %725 in 0 : vector<4x128xf32>, vector<2x128xf32>, vector<2x128xf32> -> vector<8x128xf32>
    %727 = tpu.concatenate %714, %718, %722, %726 in 1 : vector<8x128xf32>, vector<8x128xf32>, vector<8x128xf32>, vector<8x128xf32> -> vector<8x512xf32>
    %c0_253 = arith.constant 0 : index
    %c0_254 = arith.constant 0 : index
    %728 = vector.load %arg8[%c0_253, %c0_254] : memref<512x128xf32, #tpu.memory_space<vmem>>, vector<512x128xf32>
    %cst_255 = arith.constant dense<0.000000e+00> : vector<8x128xf32>
    %729 = tpu.matmul %727, %728, %cst_255 {dimension_numbers = #tpu.dot_dimension_numbers<[1], [0], [0], [1], [0, 0, 1, 1], [], []>} : vector<8x512xf32>, vector<512x128xf32>, vector<8x128xf32> -> vector<8x128xf32>
    %c0_256 = arith.constant 0 : index
    %c0_257 = arith.constant 0 : index
    %730 = vector.load %arg9[%c0_256, %c0_257] : memref<1x128xf32, #tpu.memory_space<vmem>>, vector<1x128xf32>
    %731 = vector.broadcast %730 : vector<1x128xf32> to vector<8x128xf32>
    %732 = arith.addf %729, %731 : vector<8x128xf32>
    %cst_258 = arith.constant 0.000000e+00 : f32
    %733 = vector.broadcast %cst_258 : f32 to vector<8x128xf32>
    %734 = arith.cmpf ogt, %732, %733 : vector<8x128xf32>
    %cst_259 = arith.constant 2.000000e-01 : f32
    %735 = vector.broadcast %cst_259 : f32 to vector<8x128xf32>
    %736 = arith.mulf %735, %732 : vector<8x128xf32>
    %737 = arith.select %734, %732, %736 : vector<8x128xi1>, vector<8x128xf32>
    %c0_260 = arith.constant 0 : index
    %c0_261 = arith.constant 0 : index
    %738 = vector.load %arg10[%c0_260, %c0_261] : memref<128x128xf32, #tpu.memory_space<vmem>>, vector<128x128xf32>
    %cst_262 = arith.constant dense<0.000000e+00> : vector<8x128xf32>
    %739 = tpu.matmul %737, %738, %cst_262 {dimension_numbers = #tpu.dot_dimension_numbers<[1], [0], [0], [1], [0, 0, 1, 1], [], []>} : vector<8x128xf32>, vector<128x128xf32>, vector<8x128xf32> -> vector<8x128xf32>
    %c0_263 = arith.constant 0 : index
    %c0_264 = arith.constant 0 : index
    %740 = vector.load %arg11[%c0_263, %c0_264] : memref<1x128xf32, #tpu.memory_space<vmem>>, vector<1x128xf32>
    %741 = vector.broadcast %740 : vector<1x128xf32> to vector<8x128xf32>
    %742 = arith.addf %739, %741 : vector<8x128xf32>
    %c0_265 = arith.constant 0 : index
    %c0_266 = arith.constant 0 : index
    %743 = vector.load %arg12[%c0_265, %c0_266] : memref<8x128xf32, #tpu.memory_space<vmem>>, vector<8x128xf32>
    tpu.vector_store %arg12[%c0_265, %c0_266], %742 {strides = array<i32>} : memref<8x128xf32, #tpu.memory_space<vmem>>, vector<8x128xf32>,
    return
  }
}

</mosaic_0001>

<llo_original>
// kernel: forward.1
$region0: #{forward.1}
  #allocation0 [shape = 'u32[]', space=smem, size = 0x4, offset = 0x4, fixed_abs, tag = 'smem constant byte address 0x4 - core index']
  #allocation1 [shape = 'u32[72,128]{1,0:T(1,128)}', space=vmem, size = 0x9000, scoped, tag = 'internal scratch']
  #allocation2 [shape = 'f32[64,512]{1,0:T(8,128)}', space=vmem, size = 0x20000, scoped, tag = 'scratch operand']
  #allocation3 [shape = 'f32[64,512]{1,0:T(8,128)}', space=vmem, size = 0x20000, scoped, tag = 'scratch operand']
  %s0 = inlined_call_operand.vmem [shape: f32[64,128], index: 0, kind: input, shape index: {}]
  %s1 = inlined_call_operand.vmem [shape: s32[8,1], index: 1, kind: input, shape index: {}]
  %s2 = inlined_call_operand.hbm [shape: f32[128,512], index: 2, kind: input, shape index: {}]
  %s3 = inlined_call_operand.vmem [shape: f32[1,512], index: 3, kind: input, shape index: {}]
  %s4 = inlined_call_operand.hbm [shape: f32[128,512], index: 4, kind: input, shape index: {}]
  %s5 = inlined_call_operand.vmem [shape: f32[1,512], index: 5, kind: input, shape index: {}]
  %s6 = inlined_call_operand.hbm [shape: f32[128,512], index: 6, kind: input, shape index: {}]
  %s7 = inlined_call_operand.hbm [shape: f32[128,512], index: 7, kind: input, shape index: {}]
  %s8 = inlined_call_operand.hbm [shape: f32[512,128], index: 8, kind: input, shape index: {}]
  %s9 = inlined_call_operand.vmem [shape: f32[1,128], index: 9, kind: input, shape index: {}]
  %s10 = inlined_call_operand.vmem [shape: f32[128,128], index: 10, kind: input, shape index: {}]
  %s11 = inlined_call_operand.vmem [shape: f32[1,128], index: 11, kind: input, shape index: {}]
  %s12 = inlined_call_operand.vmem [shape: f32[8,128], index: 12, kind: output, shape index: {}]
  %s13 = sld [smem:[#allocation0]]
  $region78: #{forward.1} parent=0
    _
  %s15 = ssub.s32 1, %s13
  %s16 = scalar_select 0, %s15, %s13
  $region1: #{forward.1} parent=0
    #allocation4 [shape = 'u8[262144]{0}', space=vmem, size = 0x40000, scoped, tag = 'input window, operand 2, single buffered']
    #allocation5 [shape = 's32[1]{0}', space=sflag, size = 0x4, scoped, tag = 'scoped memory for forward.1']
    #allocation6 [shape = 'u8[262144]{0}', space=vmem, size = 0x40000, scoped, tag = 'input window, operand 4, single buffered']
    #allocation7 [shape = 's32[1]{0}', space=sflag, size = 0x4, scoped, tag = 'scoped memory for forward.1']
    #allocation8 [shape = 'u8[262144]{0}', space=vmem, size = 0x40000, scoped, tag = 'input window, operand 6, single buffered']
    #allocation9 [shape = 'u8[262144]{0}', space=vmem, size = 0x40000, scoped, tag = 'input window, operand 7, single buffered']
    #allocation10 [shape = 's32[1]{0}', space=sflag, size = 0x4, scoped, tag = 'scoped memory for forward.1']
    #allocation11 [shape = 'u8[262144]{0}', space=vmem, size = 0x40000, scoped, tag = 'input window, operand 8, single buffered']
    %17 = vsyncpa [#allocation5], 0
    %18 = vsyncpa [#allocation7], 0
    %19 = vsyncpa [#allocation10], 0
    // Predicated region
    $region2: #{forward.1} parent=1 // pred_check
      _
    $region3: #{forward.1} parent=1 // pred_check_branch
      %21 = sbr.rel (0) target = $region5
    $region4: #{forward.1} parent=1 // pred_region
      _
    $region5: #{forward.1} parent=1 // pred_fallthru
      _
    // Predicated region
    $region6: #{forward.1} parent=1 // pred_check
      _
    $region7: #{forward.1} parent=1 // pred_check_branch
      %23 = sbr.rel (0) target = $region9
    $region8: #{forward.1} parent=1 // pred_region
      _
    $region9: #{forward.1} parent=1 // pred_fallthru
      _
    // Predicated region
    $region10: #{forward.1} parent=1 // pred_check
      _
    $region11: #{forward.1} parent=1 // pred_check_branch
      %25 = sbr.rel (0) target = $region13
    $region12: #{forward.1} parent=1 // pred_region
      %27 = vsyncadd [#allocation5], 0
      %s28 = sshll.u32 %s2, 4
      %s29 = int_to_ptr.hbm [resolvable:$true] %s28
      %s30 = sshll.u32 [#allocation4], 4
      %s31 = int_to_ptr.vmem [resolvable:$true] %s30
      %36 = dma.hbm_to_vmem [thread:$0]  %s29, 8192, %s31, [#allocation5], 512, 512, 32
    $region13: #{forward.1} parent=1 // pred_fallthru
      _
    // Predicated region
    $region14: #{forward.1} parent=1 // pred_check
      _
    $region15: #{forward.1} parent=1 // pred_check_branch
      %38 = sbr.rel (0) target = $region17
    $region16: #{forward.1} parent=1 // pred_region
      _
    $region17: #{forward.1} parent=1 // pred_fallthru
      _
    // Predicated region
    $region18: #{forward.1} parent=1 // pred_check
      _
    $region19: #{forward.1} parent=1 // pred_check_branch
      %40 = sbr.rel (0) target = $region21
    $region20: #{forward.1} parent=1 // pred_region
      %42 = vsyncadd [#allocation7], 0
      %s43 = sshll.u32 %s4, 4
      %s44 = int_to_ptr.hbm [resolvable:$true] %s43
      %s45 = sshll.u32 [#allocation6], 4
      %s46 = int_to_ptr.vmem [resolvable:$true] %s45
      %51 = dma.hbm_to_vmem [thread:$0]  %s44, 8192, %s46, [#allocation7], 512, 512, 32
    $region21: #{forward.1} parent=1 // pred_fallthru
      _
    // Predicated region
    $region22: #{forward.1} parent=1 // pred_check
      _
    $region23: #{forward.1} parent=1 // pred_check_branch
      %53 = sbr.rel (0) target = $region25
    $region24: #{forward.1} parent=1 // pred_region
      _
    $region25: #{forward.1} parent=1 // pred_fallthru
      _
    // Predicated region
    $region26: #{forward.1} parent=1 // pred_check
      _
    $region27: #{forward.1} parent=1 // pred_check_branch
      %55 = sbr.rel (0) target = $region29
    $region28: #{forward.1} parent=1 // pred_region
      %57 = vsyncadd [#allocation7], 0
      %s58 = sshll.u32 %s6, 4
      %s59 = int_to_ptr.hbm [resolvable:$true] %s58
      %s60 = sshll.u32 [#allocation8], 4
      %s61 = int_to_ptr.vmem [resolvable:$true] %s60
      %66 = dma.hbm_to_vmem [thread:$0]  %s59, 8192, %s61, [#allocation7], 512, 512, 32
    $region29: #{forward.1} parent=1 // pred_fallthru
      _
    // Predicated region
    $region30: #{forward.1} parent=1 // pred_check
      _
    $region31: #{forward.1} parent=1 // pred_check_branch
      %68 = sbr.rel (0) target = $region33
    $region32: #{forward.1} parent=1 // pred_region
      %70 = vsyncadd [#allocation10], 0
      %s71 = sshll.u32 %s7, 4
      %s72 = int_to_ptr.hbm [resolvable:$true] %s71
      %s73 = sshll.u32 [#allocation9], 4
      %s74 = int_to_ptr.vmem [resolvable:$true] %s73
      %79 = dma.hbm_to_vmem [thread:$0]  %s72, 8192, %s74, [#allocation10], 512, 512, 32
    $region33: #{forward.1} parent=1 // pred_fallthru
      _
    // Predicated region
    $region34: #{forward.1} parent=1 // pred_check
      _
    $region35: #{forward.1} parent=1 // pred_check_branch
      %81 = sbr.rel (0) target = $region37
    $region36: #{forward.1} parent=1 // pred_region
      %83 = vsyncadd [#allocation10], 0
      %s84 = sshll.u32 %s8, 4
      %s85 = int_to_ptr.hbm [resolvable:$true] %s84
      %s86 = sshll.u32 [#allocation11], 4
      %s87 = int_to_ptr.vmem [resolvable:$true] %s86
      %92 = dma.hbm_to_vmem [thread:$0]  %s85, 8192, %s87, [#allocation10], 128, 128, 8
    $region37: #{forward.1} parent=1 // pred_fallthru
      _
    // Predicated region
    $region38: #{forward.1} parent=1 // pred_check
      _
    $region39: #{forward.1} parent=1 // pred_check_branch
      %94 = sbr.rel (0) target = $region41
    $region40: #{forward.1} parent=1 // pred_region
      _
    $region41: #{forward.1} parent=1 // pred_fallthru
      _
    // Predicated region
    $region42: #{forward.1} parent=1 // pred_check
      _
    $region43: #{forward.1} parent=1 // pred_check_branch
      %96 = sbr.rel (0) target = $region45
    $region44: #{forward.1} parent=1 // pred_region
      _
    $region45: #{forward.1} parent=1 // pred_fallthru
      _
    // Predicated region
    $region46: #{forward.1} parent=1 // pred_check
      _
    $region47: #{forward.1} parent=1 // pred_check_branch
      %98 = sbr.rel (0) target = $region49
    $region48: #{forward.1} parent=1 // pred_region
      _
    $region49: #{forward.1} parent=1 // pred_fallthru
      _
    // Predicated region
    $region50: #{forward.1} parent=1 // pred_check
      _
    $region51: #{forward.1} parent=1 // pred_check_branch
      %100 = sbr.rel (0) target = $region53
    $region52: #{forward.1} parent=1 // pred_region
      %102 = dma.done [#allocation5], 8192
    $region53: #{forward.1} parent=1 // pred_fallthru
      _
    // Predicated region
    $region54: #{forward.1} parent=1 // pred_check
      _
    $region55: #{forward.1} parent=1 // pred_check_branch
      %104 = sbr.rel (0) target = $region57
    $region56: #{forward.1} parent=1 // pred_region
      %106 = dma.done [#allocation7], 8192
    $region57: #{forward.1} parent=1 // pred_fallthru
      _
    // Predicated region
    $region58: #{forward.1} parent=1 // pred_check
      _
    $region59: #{forward.1} parent=1 // pred_check_branch
      %108 = sbr.rel (0) target = $region61
    $region60: #{forward.1} parent=1 // pred_region
      %110 = dma.done [#allocation7], 8192
    $region61: #{forward.1} parent=1 // pred_fallthru
      _
    // Predicated region
    $region62: #{forward.1} parent=1 // pred_check
      _
    $region63: #{forward.1} parent=1 // pred_check_branch
      %112 = sbr.rel (0) target = $region65
    $region64: #{forward.1} parent=1 // pred_region
      %114 = dma.done [#allocation10], 8192
    $region65: #{forward.1} parent=1 // pred_fallthru
      _
    // Predicated region
    $region66: #{forward.1} parent=1 // pred_check
      _
    $region67: #{forward.1} parent=1 // pred_check_branch
      %116 = sbr.rel (0) target = $region69
    $region68: #{forward.1} parent=1 // pred_region
      %118 = dma.done [#allocation10], 8192
    $region69: #{forward.1} parent=1 // pred_fallthru
      _
    %v119 = vld [vmem:[%s1] sm:$0xff]
    %v120 = vld [vmem:[%s0] sm:$0xff]
    %v121 = vld [vmem:[%s0 + $0x8] sm:$0xff]
    %v122 = vld [vmem:[%s0 + $0x10] sm:$0xff]
    %v123 = vld [vmem:[%s0 + $0x18] sm:$0xff]
    %v124 = vld [vmem:[%s0 + $0x20] sm:$0xff]
    %v125 = vld [vmem:[%s0 + $0x28] sm:$0xff]
    %v126 = vld [vmem:[%s0 + $0x30] sm:$0xff]
    %v127 = vld [vmem:[%s0 + $0x38] sm:$0xff]
    %v128 = vld [vmem:[#allocation4] sm:$0xff]
    %v129 = vld [vmem:[#allocation4 + $0x8] sm:$0xff]
    %v130 = vld [vmem:[#allocation4 + $0x10] sm:$0xff]
    %v131 = vld [vmem:[#allocation4 + $0x18] sm:$0xff]
    %v132 = vld [vmem:[#allocation4 + $0x20] sm:$0xff]
    %v133 = vld [vmem:[#allocation4 + $0x28] sm:$0xff]
    %v134 = vld [vmem:[#allocation4 + $0x30] sm:$0xff]
    %v135 = vld [vmem:[#allocation4 + $0x38] sm:$0xff]
    %v136 = vld [vmem:[#allocation4 + $0x40] sm:$0xff]
    %v137 = vld [vmem:[#allocation4 + $0x48] sm:$0xff]
    %v138 = vld [vmem:[#allocation4 + $0x50] sm:$0xff]
    %v139 = vld [vmem:[#allocation4 + $0x58] sm:$0xff]
    %v140 = vld [vmem:[#allocation4 + $0x60] sm:$0xff]
    %v141 = vld [vmem:[#allocation4 + $0x68] sm:$0xff]
    %v142 = vld [vmem:[#allocation4 + $0x70] sm:$0xff]
    %v143 = vld [vmem:[#allocation4 + $0x78] sm:$0xff]
    %v144 = vld [vmem:[#allocation4 + $0x80] sm:$0xff]
    %v145 = vld [vmem:[#allocation4 + $0x88] sm:$0xff]
    %v146 = vld [vmem:[#allocation4 + $0x90] sm:$0xff]
    %v147 = vld [vmem:[#allocation4 + $0x98] sm:$0xff]
    %v148 = vld [vmem:[#allocation4 + $0xa0] sm:$0xff]
    %v149 = vld [vmem:[#allocation4 + $0xa8] sm:$0xff]
    %v150 = vld [vmem:[#allocation4 + $0xb0] sm:$0xff]
    %v151 = vld [vmem:[#allocation4 + $0xb8] sm:$0xff]
    %v152 = vld [vmem:[#allocation4 + $0xc0] sm:$0xff]
    %v153 = vld [vmem:[#allocation4 + $0xc8] sm:$0xff]
    %v154 = vld [vmem:[#allocation4 + $0xd0] sm:$0xff]
    %v155 = vld [vmem:[#allocation4 + $0xd8] sm:$0xff]
    %v156 = vld [vmem:[#allocation4 + $0xe0] sm:$0xff]
    %v157 = vld [vmem:[#allocation4 + $0xe8] sm:$0xff]
    %v158 = vld [vmem:[#allocation4 + $0xf0] sm:$0xff]
    %v159 = vld [vmem:[#allocation4 + $0xf8] sm:$0xff]
    %v160 = vld [vmem:[#allocation4 + $0x100] sm:$0xff]
    %v161 = vld [vmem:[#allocation4 + $0x108] sm:$0xff]
    %v162 = vld [vmem:[#allocation4 + $0x110] sm:$0xff]
    %v163 = vld [vmem:[#allocation4 + $0x118] sm:$0xff]
    %v164 = vld [vmem:[#allocation4 + $0x120] sm:$0xff]
    %v165 = vld [vmem:[#allocation4 + $0x128] sm:$0xff]
    %v166 = vld [vmem:[#allocation4 + $0x130] sm:$0xff]
    %v167 = vld [vmem:[#allocation4 + $0x138] sm:$0xff]
    %v168 = vld [vmem:[#allocation4 + $0x140] sm:$0xff]
    %v169 = vld [vmem:[#allocation4 + $0x148] sm:$0xff]
    %v170 = vld [vmem:[#allocation4 + $0x150] sm:$0xff]
    %v171 = vld [vmem:[#allocation4 + $0x158] sm:$0xff]
    %v172 = vld [vmem:[#allocation4 + $0x160] sm:$0xff]
    %v173 = vld [vmem:[#allocation4 + $0x168] sm:$0xff]
    %v174 = vld [vmem:[#allocation4 + $0x170] sm:$0xff]
    %v175 = vld [vmem:[#allocation4 + $0x178] sm:$0xff]
    %v176 = vld [vmem:[#allocation4 + $0x180] sm:$0xff]
    %v177 = vld [vmem:[#allocation4 + $0x188] sm:$0xff]
    %v178 = vld [vmem:[#allocation4 + $0x190] sm:$0xff]
    %v179 = vld [vmem:[#allocation4 + $0x198] sm:$0xff]
    %v180 = vld [vmem:[#allocation4 + $0x1a0] sm:$0xff]
    %v181 = vld [vmem:[#allocation4 + $0x1a8] sm:$0xff]
    %v182 = vld [vmem:[#allocation4 + $0x1b0] sm:$0xff]
    %v183 = vld [vmem:[#allocation4 + $0x1b8] sm:$0xff]
    %v184 = vld [vmem:[#allocation4 + $0x1c0] sm:$0xff]
    %v185 = vld [vmem:[#allocation4 + $0x1c8] sm:$0xff]
    %v186 = vld [vmem:[#allocation4 + $0x1d0] sm:$0xff]
    %v187 = vld [vmem:[#allocation4 + $0x1d8] sm:$0xff]
    %v188 = vld [vmem:[#allocation4 + $0x1e0] sm:$0xff]
    %v189 = vld [vmem:[#allocation4 + $0x1e8] sm:$0xff]
    %v190 = vld [vmem:[#allocation4 + $0x1f0] sm:$0xff]
    %v191 = vld [vmem:[#allocation4 + $0x1f8] sm:$0xff]
    %v192 = vld [vmem:[%s3] sm:$0xf]
    %v194 = vperm.slane %v192, 0
    %v195 = vperm.slane %v192, 1
    %v196 = vperm.slane %v192, 2
    %v197 = vperm.slane %v192, 3
    %202 = vmatpush.msra.mxu0 %v188
    %203 = vmatpush.msra.mxu0 %v184
    %204 = vmatpush.msra.mxu0 %v180
    %205 = vmatpush.msra.mxu0 %v176
    %206 = vmatpush.msra.mxu0 %v172
    %207 = vmatpush.msra.mxu0 %v168
    %208 = vmatpush.msra.mxu0 %v164
    %209 = vmatpush.msra.mxu0 %v160
    %210 = vmatpush.msra.mxu0 %v156
    %211 = vmatpush.msra.mxu0 %v152
    %212 = vmatpush.msra.mxu0 %v148
    %213 = vmatpush.msra.mxu0 %v144
    %214 = vmatpush.msra.mxu0 %v140
    %215 = vmatpush.msra.mxu0 %v136
    %216 = vmatpush.msra.mxu0 %v132
    %217 = vmatpush.msra.mxu0 %v128
    %218 = vmatmul.f32.gmra.mxu0 %v120
    %v219 = vpop.f32.mrf.mxu0
    %v220 = vadd.f32 %v194, %v219
    %221 = vmatmul.f32.gmra.mxu0 %v121
    %v222 = vpop.f32.mrf.mxu0
    %v223 = vadd.f32 %v194, %v222
    %224 = vmatmul.f32.gmra.mxu0 %v122
    %v225 = vpop.f32.mrf.mxu0
    %v226 = vadd.f32 %v194, %v225
    %227 = vmatmul.f32.gmra.mxu0 %v123
    %v228 = vpop.f32.mrf.mxu0
    %v229 = vadd.f32 %v194, %v228
    %230 = vmatmul.f32.gmra.mxu0 %v124
    %v231 = vpop.f32.mrf.mxu0
    %v232 = vadd.f32 %v194, %v231
    %233 = vmatmul.f32.gmra.mxu0 %v125
    %v234 = vpop.f32.mrf.mxu0
    %v235 = vadd.f32 %v194, %v234
    %236 = vmatmul.f32.gmra.mxu0 %v126
    %v237 = vpop.f32.mrf.mxu0
    %v238 = vadd.f32 %v194, %v237
    %239 = vmatmul.f32.gmra.mxu0 %v127
    %v240 = vpop.f32.mrf.mxu0
    %v241 = vadd.f32 %v194, %v240
    %242 = vdwg.mxu0
    %243 = vmatpush.msra.mxu0 %v189
    %244 = vmatpush.msra.mxu0 %v185
    %245 = vmatpush.msra.mxu0 %v181
    %246 = vmatpush.msra.mxu0 %v177
    %247 = vmatpush.msra.mxu0 %v173
    %248 = vmatpush.msra.mxu0 %v169
    %249 = vmatpush.msra.mxu0 %v165
    %250 = vmatpush.msra.mxu0 %v161
    %251 = vmatpush.msra.mxu0 %v157
    %252 = vmatpush.msra.mxu0 %v153
    %253 = vmatpush.msra.mxu0 %v149
    %254 = vmatpush.msra.mxu0 %v145
    %255 = vmatpush.msra.mxu0 %v141
    %256 = vmatpush.msra.mxu0 %v137
    %257 = vmatpush.msra.mxu0 %v133
    %258 = vmatpush.msra.mxu0 %v129
    %259 = vmatmul.f32.gmra.mxu0 %v120
    %v260 = vpop.f32.mrf.mxu0
    %v261 = vadd.f32 %v195, %v260
    %262 = vmatmul.f32.gmra.mxu0 %v121
    %v263 = vpop.f32.mrf.mxu0
    %v264 = vadd.f32 %v195, %v263
    %265 = vmatmul.f32.gmra.mxu0 %v122
    %v266 = vpop.f32.mrf.mxu0
    %v267 = vadd.f32 %v195, %v266
    %268 = vmatmul.f32.gmra.mxu0 %v123
    %v269 = vpop.f32.mrf.mxu0
    %v270 = vadd.f32 %v195, %v269
    %271 = vmatmul.f32.gmra.mxu0 %v124
    %v272 = vpop.f32.mrf.mxu0
    %v273 = vadd.f32 %v195, %v272
    %274 = vmatmul.f32.gmra.mxu0 %v125
    %v275 = vpop.f32.mrf.mxu0
    %v276 = vadd.f32 %v195, %v275
    %277 = vmatmul.f32.gmra.mxu0 %v126
    %v278 = vpop.f32.mrf.mxu0
    %v279 = vadd.f32 %v195, %v278
    %280 = vmatmul.f32.gmra.mxu0 %v127
    %v281 = vpop.f32.mrf.mxu0
    %v282 = vadd.f32 %v195, %v281
    %283 = vdwg.mxu0
    %284 = vmatpush.msra.mxu0 %v190
    %285 = vmatpush.msra.mxu0 %v186
    %286 = vmatpush.msra.mxu0 %v182
    %287 = vmatpush.msra.mxu0 %v178
    %288 = vmatpush.msra.mxu0 %v174
    %289 = vmatpush.msra.mxu0 %v170
    %290 = vmatpush.msra.mxu0 %v166
    %291 = vmatpush.msra.mxu0 %v162
    %292 = vmatpush.msra.mxu0 %v158
    %293 = vmatpush.msra.mxu0 %v154
    %294 = vmatpush.msra.mxu0 %v150
    %295 = vmatpush.msra.mxu0 %v146
    %296 = vmatpush.msra.mxu0 %v142
    %297 = vmatpush.msra.mxu0 %v138
    %298 = vmatpush.msra.mxu0 %v134
    %299 = vmatpush.msra.mxu0 %v130
    %300 = vmatmul.f32.gmra.mxu0 %v120
    %v301 = vpop.f32.mrf.mxu0
    %v302 = vadd.f32 %v196, %v301
    %303 = vmatmul.f32.gmra.mxu0 %v121
    %v304 = vpop.f32.mrf.mxu0
    %v305 = vadd.f32 %v196, %v304
    %306 = vmatmul.f32.gmra.mxu0 %v122
    %v307 = vpop.f32.mrf.mxu0
    %v308 = vadd.f32 %v196, %v307
    %309 = vmatmul.f32.gmra.mxu0 %v123
    %v310 = vpop.f32.mrf.mxu0
    %v311 = vadd.f32 %v196, %v310
    %312 = vmatmul.f32.gmra.mxu0 %v124
    %v313 = vpop.f32.mrf.mxu0
    %v314 = vadd.f32 %v196, %v313
    %315 = vmatmul.f32.gmra.mxu0 %v125
    %v316 = vpop.f32.mrf.mxu0
    %v317 = vadd.f32 %v196, %v316
    %318 = vmatmul.f32.gmra.mxu0 %v126
    %v319 = vpop.f32.mrf.mxu0
    %v320 = vadd.f32 %v196, %v319
    %321 = vmatmul.f32.gmra.mxu0 %v127
    %v322 = vpop.f32.mrf.mxu0
    %v323 = vadd.f32 %v196, %v322
    %324 = vdwg.mxu0
    %325 = vmatpush.msra.mxu0 %v191
    %326 = vmatpush.msra.mxu0 %v187
    %327 = vmatpush.msra.mxu0 %v183
    %328 = vmatpush.msra.mxu0 %v179
    %329 = vmatpush.msra.mxu0 %v175
    %330 = vmatpush.msra.mxu0 %v171
    %331 = vmatpush.msra.mxu0 %v167
    %332 = vmatpush.msra.mxu0 %v163
    %333 = vmatpush.msra.mxu0 %v159
    %334 = vmatpush.msra.mxu0 %v155
    %335 = vmatpush.msra.mxu0 %v151
    %336 = vmatpush.msra.mxu0 %v147
    %337 = vmatpush.msra.mxu0 %v143
    %338 = vmatpush.msra.mxu0 %v139
    %339 = vmatpush.msra.mxu0 %v135
    %340 = vmatpush.msra.mxu0 %v131
    %341 = vmatmul.f32.gmra.mxu0 %v120
    %v342 = vpop.f32.mrf.mxu0
    %v343 = vadd.f32 %v197, %v342
    %344 = vmatmul.f32.gmra.mxu0 %v121
    %v345 = vpop.f32.mrf.mxu0
    %v346 = vadd.f32 %v197, %v345
    %347 = vmatmul.f32.gmra.mxu0 %v122
    %v348 = vpop.f32.mrf.mxu0
    %v349 = vadd.f32 %v197, %v348
    %350 = vmatmul.f32.gmra.mxu0 %v123
    %v351 = vpop.f32.mrf.mxu0
    %v352 = vadd.f32 %v197, %v351
    %353 = vmatmul.f32.gmra.mxu0 %v124
    %v354 = vpop.f32.mrf.mxu0
    %v355 = vadd.f32 %v197, %v354
    %356 = vmatmul.f32.gmra.mxu0 %v125
    %v357 = vpop.f32.mrf.mxu0
    %v358 = vadd.f32 %v197, %v357
    %359 = vmatmul.f32.gmra.mxu0 %v126
    %v360 = vpop.f32.mrf.mxu0
    %v361 = vadd.f32 %v197, %v360
    %362 = vmatmul.f32.gmra.mxu0 %v127
    %v363 = vpop.f32.mrf.mxu0
    %v364 = vadd.f32 %v197, %v363
    %365 = vdwg.mxu0
    %366 = vst [vmem:[#allocation2] sm:$0xff] %v220
    %367 = vst [vmem:[#allocation2 + $0x8] sm:$0xff] %v261
    %368 = vst [vmem:[#allocation2 + $0x10] sm:$0xff] %v302
    %369 = vst [vmem:[#allocation2 + $0x18] sm:$0xff] %v343
    %370 = vst [vmem:[#allocation2 + $0x20] sm:$0xff] %v223
    %371 = vst [vmem:[#allocation2 + $0x28] sm:$0xff] %v264
    %372 = vst [vmem:[#allocation2 + $0x30] sm:$0xff] %v305
    %373 = vst [vmem:[#allocation2 + $0x38] sm:$0xff] %v346
    %374 = vst [vmem:[#allocation2 + $0x40] sm:$0xff] %v226
    %375 = vst [vmem:[#allocation2 + $0x48] sm:$0xff] %v267
    %376 = vst [vmem:[#allocation2 + $0x50] sm:$0xff] %v308
    %377 = vst [vmem:[#allocation2 + $0x58] sm:$0xff] %v349
    %378 = vst [vmem:[#allocation2 + $0x60] sm:$0xff] %v229
    %379 = vst [vmem:[#allocation2 + $0x68] sm:$0xff] %v270
    %380 = vst [vmem:[#allocation2 + $0x70] sm:$0xff] %v311
    %381 = vst [vmem:[#allocation2 + $0x78] sm:$0xff] %v352
    %382 = vst [vmem:[#allocation2 + $0x80] sm:$0xff] %v232
    %383 = vst [vmem:[#allocation2 + $0x88] sm:$0xff] %v273
    %384 = vst [vmem:[#allocation2 + $0x90] sm:$0xff] %v314
    %385 = vst [vmem:[#allocation2 + $0x98] sm:$0xff] %v355
    %386 = vst [vmem:[#allocation2 + $0xa0] sm:$0xff] %v235
    %387 = vst [vmem:[#allocation2 + $0xa8] sm:$0xff] %v276
    %388 = vst [vmem:[#allocation2 + $0xb0] sm:$0xff] %v317
    %389 = vst [vmem:[#allocation2 + $0xb8] sm:$0xff] %v358
    %390 = vst [vmem:[#allocation2 + $0xc0] sm:$0xff] %v238
    %391 = vst [vmem:[#allocation2 + $0xc8] sm:$0xff] %v279
    %392 = vst [vmem:[#allocation2 + $0xd0] sm:$0xff] %v320
    %393 = vst [vmem:[#allocation2 + $0xd8] sm:$0xff] %v361
    %394 = vst [vmem:[#allocation2 + $0xe0] sm:$0xff] %v241
    %395 = vst [vmem:[#allocation2 + $0xe8] sm:$0xff] %v282
    %396 = vst [vmem:[#allocation2 + $0xf0] sm:$0xff] %v323
    %397 = vst [vmem:[#allocation2 + $0xf8] sm:$0xff] %v364
    %v398 = vld [vmem:[#allocation6] sm:$0xff]
    %v399 = vld [vmem:[#allocation6 + $0x8] sm:$0xff]
    %v400 = vld [vmem:[#allocation6 + $0x10] sm:$0xff]
    %v401 = vld [vmem:[#allocation6 + $0x18] sm:$0xff]
    %v402 = vld [vmem:[#allocation6 + $0x20] sm:$0xff]
    %v403 = vld [vmem:[#allocation6 + $0x28] sm:$0xff]
    %v404 = vld [vmem:[#allocation6 + $0x30] sm:$0xff]
    %v405 = vld [vmem:[#allocation6 + $0x38] sm:$0xff]
    %v406 = vld [vmem:[#allocation6 + $0x40] sm:$0xff]
    %v407 = vld [vmem:[#allocation6 + $0x48] sm:$0xff]
    %v408 = vld [vmem:[#allocation6 + $0x50] sm:$0xff]
    %v409 = vld [vmem:[#allocation6 + $0x58] sm:$0xff]
    %v410 = vld [vmem:[#allocation6 + $0x60] sm:$0xff]
    %v411 = vld [vmem:[#allocation6 + $0x68] sm:$0xff]
    %v412 = vld [vmem:[#allocation6 + $0x70] sm:$0xff]
    %v413 = vld [vmem:[#allocation6 + $0x78] sm:$0xff]
    %v414 = vld [vmem:[#allocation6 + $0x80] sm:$0xff]
    %v415 = vld [vmem:[#allocation6 + $0x88] sm:$0xff]
    %v416 = vld [vmem:[#allocation6 + $0x90] sm:$0xff]
    %v417 = vld [vmem:[#allocation6 + $0x98] sm:$0xff]
    %v418 = vld [vmem:[#allocation6 + $0xa0] sm:$0xff]
    %v419 = vld [vmem:[#allocation6 + $0xa8] sm:$0xff]
    %v420 = vld [vmem:[#allocation6 + $0xb0] sm:$0xff]
    %v421 = vld [vmem:[#allocation6 + $0xb8] sm:$0xff]
    %v422 = vld [vmem:[#allocation6 + $0xc0] sm:$0xff]
    %v423 = vld [vmem:[#allocation6 + $0xc8] sm:$0xff]
    %v424 = vld [vmem:[#allocation6 + $0xd0] sm:$0xff]
    %v425 = vld [vmem:[#allocation6 + $0xd8] sm:$0xff]
    %v426 = vld [vmem:[#allocation6 + $0xe0] sm:$0xff]
    %v427 = vld [vmem:[#allocation6 + $0xe8] sm:$0xff]
    %v428 = vld [vmem:[#allocation6 + $0xf0] sm:$0xff]
    %v429 = vld [vmem:[#allocation6 + $0xf8] sm:$0xff]
    %v430 = vld [vmem:[#allocation6 + $0x100] sm:$0xff]
    %v431 = vld [vmem:[#allocation6 + $0x108] sm:$0xff]
    %v432 = vld [vmem:[#allocation6 + $0x110] sm:$0xff]
    %v433 = vld [vmem:[#allocation6 + $0x118] sm:$0xff]
    %v434 = vld [vmem:[#allocation6 + $0x120] sm:$0xff]
    %v435 = vld [vmem:[#allocation6 + $0x128] sm:$0xff]
    %v436 = vld [vmem:[#allocation6 + $0x130] sm:$0xff]
    %v437 = vld [vmem:[#allocation6 + $0x138] sm:$0xff]
    %v438 = vld [vmem:[#allocation6 + $0x140] sm:$0xff]
    %v439 = vld [vmem:[#allocation6 + $0x148] sm:$0xff]
    %v440 = vld [vmem:[#allocation6 + $0x150] sm:$0xff]
    %v441 = vld [vmem:[#allocation6 + $0x158] sm:$0xff]
    %v442 = vld [vmem:[#allocation6 + $0x160] sm:$0xff]
    %v443 = vld [vmem:[#allocation6 + $0x168] sm:$0xff]
    %v444 = vld [vmem:[#allocation6 + $0x170] sm:$0xff]
    %v445 = vld [vmem:[#allocation6 + $0x178] sm:$0xff]
    %v446 = vld [vmem:[#allocation6 + $0x180] sm:$0xff]
    %v447 = vld [vmem:[#allocation6 + $0x188] sm:$0xff]
    %v448 = vld [vmem:[#allocation6 + $0x190] sm:$0xff]
    %v449 = vld [vmem:[#allocation6 + $0x198] sm:$0xff]
    %v450 = vld [vmem:[#allocation6 + $0x1a0] sm:$0xff]
    %v451 = vld [vmem:[#allocation6 + $0x1a8] sm:$0xff]
    %v452 = vld [vmem:[#allocation6 + $0x1b0] sm:$0xff]
    %v453 = vld [vmem:[#allocation6 + $0x1b8] sm:$0xff]
    %v454 = vld [vmem:[#allocation6 + $0x1c0] sm:$0xff]
    %v455 = vld [vmem:[#allocation6 + $0x1c8] sm:$0xff]
    %v456 = vld [vmem:[#allocation6 + $0x1d0] sm:$0xff]
    %v457 = vld [vmem:[#allocation6 + $0x1d8] sm:$0xff]
    %v458 = vld [vmem:[#allocation6 + $0x1e0] sm:$0xff]
    %v459 = vld [vmem:[#allocation6 + $0x1e8] sm:$0xff]
    %v460 = vld [vmem:[#allocation6 + $0x1f0] sm:$0xff]
    %v461 = vld [vmem:[#allocation6 + $0x1f8] sm:$0xff]
    %v462 = vld [vmem:[%s5] sm:$0xf]
    %v464 = vperm.slane %v462, 0
    %v465 = vperm.slane %v462, 1
    %v466 = vperm.slane %v462, 2
    %v467 = vperm.slane %v462, 3
    %472 = vmatpush.msra.mxu0 %v458
    %473 = vmatpush.msra.mxu0 %v454
    %474 = vmatpush.msra.mxu0 %v450
    %475 = vmatpush.msra.mxu0 %v446
    %476 = vmatpush.msra.mxu0 %v442
    %477 = vmatpush.msra.mxu0 %v438
    %478 = vmatpush.msra.mxu0 %v434
    %479 = vmatpush.msra.mxu0 %v430
    %480 = vmatpush.msra.mxu0 %v426
    %481 = vmatpush.msra.mxu0 %v422
    %482 = vmatpush.msra.mxu0 %v418
    %483 = vmatpush.msra.mxu0 %v414
    %484 = vmatpush.msra.mxu0 %v410
    %485 = vmatpush.msra.mxu0 %v406
    %486 = vmatpush.msra.mxu0 %v402
    %487 = vmatpush.msra.mxu0 %v398
    %488 = vmatmul.f32.gmra.mxu0 %v120
    %v489 = vpop.f32.mrf.mxu0
    %v490 = vadd.f32 %v464, %v489
    %491 = vmatmul.f32.gmra.mxu0 %v121
    %v492 = vpop.f32.mrf.mxu0
    %v493 = vadd.f32 %v464, %v492
    %494 = vmatmul.f32.gmra.mxu0 %v122
    %v495 = vpop.f32.mrf.mxu0
    %v496 = vadd.f32 %v464, %v495
    %497 = vmatmul.f32.gmra.mxu0 %v123
    %v498 = vpop.f32.mrf.mxu0
    %v499 = vadd.f32 %v464, %v498
    %500 = vmatmul.f32.gmra.mxu0 %v124
    %v501 = vpop.f32.mrf.mxu0
    %v502 = vadd.f32 %v464, %v501
    %503 = vmatmul.f32.gmra.mxu0 %v125
    %v504 = vpop.f32.mrf.mxu0
    %v505 = vadd.f32 %v464, %v504
    %506 = vmatmul.f32.gmra.mxu0 %v126
    %v507 = vpop.f32.mrf.mxu0
    %v508 = vadd.f32 %v464, %v507
    %509 = vmatmul.f32.gmra.mxu0 %v127
    %v510 = vpop.f32.mrf.mxu0
    %v511 = vadd.f32 %v464, %v510
    %512 = vdwg.mxu0
    %513 = vmatpush.msra.mxu0 %v459
    %514 = vmatpush.msra.mxu0 %v455
    %515 = vmatpush.msra.mxu0 %v451
    %516 = vmatpush.msra.mxu0 %v447
    %517 = vmatpush.msra.mxu0 %v443
    %518 = vmatpush.msra.mxu0 %v439
    %519 = vmatpush.msra.mxu0 %v435
    %520 = vmatpush.msra.mxu0 %v431
    %521 = vmatpush.msra.mxu0 %v427
    %522 = vmatpush.msra.mxu0 %v423
    %523 = vmatpush.msra.mxu0 %v419
    %524 = vmatpush.msra.mxu0 %v415
    %525 = vmatpush.msra.mxu0 %v411
    %526 = vmatpush.msra.mxu0 %v407
    %527 = vmatpush.msra.mxu0 %v403
    %528 = vmatpush.msra.mxu0 %v399
    %529 = vmatmul.f32.gmra.mxu0 %v120
    %v530 = vpop.f32.mrf.mxu0
    %v531 = vadd.f32 %v465, %v530
    %532 = vmatmul.f32.gmra.mxu0 %v121
    %v533 = vpop.f32.mrf.mxu0
    %v534 = vadd.f32 %v465, %v533
    %535 = vmatmul.f32.gmra.mxu0 %v122
    %v536 = vpop.f32.mrf.mxu0
    %v537 = vadd.f32 %v465, %v536
    %538 = vmatmul.f32.gmra.mxu0 %v123
    %v539 = vpop.f32.mrf.mxu0
    %v540 = vadd.f32 %v465, %v539
    %541 = vmatmul.f32.gmra.mxu0 %v124
    %v542 = vpop.f32.mrf.mxu0
    %v543 = vadd.f32 %v465, %v542
    %544 = vmatmul.f32.gmra.mxu0 %v125
    %v545 = vpop.f32.mrf.mxu0
    %v546 = vadd.f32 %v465, %v545
    %547 = vmatmul.f32.gmra.mxu0 %v126
    %v548 = vpop.f32.mrf.mxu0
    %v549 = vadd.f32 %v465, %v548
    %550 = vmatmul.f32.gmra.mxu0 %v127
    %v551 = vpop.f32.mrf.mxu0
    %v552 = vadd.f32 %v465, %v551
    %553 = vdwg.mxu0
    %554 = vmatpush.msra.mxu0 %v460
    %555 = vmatpush.msra.mxu0 %v456
    %556 = vmatpush.msra.mxu0 %v452
    %557 = vmatpush.msra.mxu0 %v448
    %558 = vmatpush.msra.mxu0 %v444
    %559 = vmatpush.msra.mxu0 %v440
    %560 = vmatpush.msra.mxu0 %v436
    %561 = vmatpush.msra.mxu0 %v432
    %562 = vmatpush.msra.mxu0 %v428
    %563 = vmatpush.msra.mxu0 %v424
    %564 = vmatpush.msra.mxu0 %v420
    %565 = vmatpush.msra.mxu0 %v416
    %566 = vmatpush.msra.mxu0 %v412
    %567 = vmatpush.msra.mxu0 %v408
    %568 = vmatpush.msra.mxu0 %v404
    %569 = vmatpush.msra.mxu0 %v400
    %570 = vmatmul.f32.gmra.mxu0 %v120
    %v571 = vpop.f32.mrf.mxu0
    %v572 = vadd.f32 %v466, %v571
    %573 = vmatmul.f32.gmra.mxu0 %v121
    %v574 = vpop.f32.mrf.mxu0
    %v575 = vadd.f32 %v466, %v574
    %576 = vmatmul.f32.gmra.mxu0 %v122
    %v577 = vpop.f32.mrf.mxu0
    %v578 = vadd.f32 %v466, %v577
    %579 = vmatmul.f32.gmra.mxu0 %v123
    %v580 = vpop.f32.mrf.mxu0
    %v581 = vadd.f32 %v466, %v580
    %582 = vmatmul.f32.gmra.mxu0 %v124
    %v583 = vpop.f32.mrf.mxu0
    %v584 = vadd.f32 %v466, %v583
    %585 = vmatmul.f32.gmra.mxu0 %v125
    %v586 = vpop.f32.mrf.mxu0
    %v587 = vadd.f32 %v466, %v586
    %588 = vmatmul.f32.gmra.mxu0 %v126
    %v589 = vpop.f32.mrf.mxu0
    %v590 = vadd.f32 %v466, %v589
    %591 = vmatmul.f32.gmra.mxu0 %v127
    %v592 = vpop.f32.mrf.mxu0
    %v593 = vadd.f32 %v466, %v592
    %594 = vdwg.mxu0
    %595 = vmatpush.msra.mxu0 %v461
    %596 = vmatpush.msra.mxu0 %v457
    %597 = vmatpush.msra.mxu0 %v453
    %598 = vmatpush.msra.mxu0 %v449
    %599 = vmatpush.msra.mxu0 %v445
    %600 = vmatpush.msra.mxu0 %v441
    %601 = vmatpush.msra.mxu0 %v437
    %602 = vmatpush.msra.mxu0 %v433
    %603 = vmatpush.msra.mxu0 %v429
    %604 = vmatpush.msra.mxu0 %v425
    %605 = vmatpush.msra.mxu0 %v421
    %606 = vmatpush.msra.mxu0 %v417
    %607 = vmatpush.msra.mxu0 %v413
    %608 = vmatpush.msra.mxu0 %v409
    %609 = vmatpush.msra.mxu0 %v405
    %610 = vmatpush.msra.mxu0 %v401
    %611 = vmatmul.f32.gmra.mxu0 %v120
    %v612 = vpop.f32.mrf.mxu0
    %v613 = vadd.f32 %v467, %v612
    %614 = vmatmul.f32.gmra.mxu0 %v121
    %v615 = vpop.f32.mrf.mxu0
    %v616 = vadd.f32 %v467, %v615
    %617 = vmatmul.f32.gmra.mxu0 %v122
    %v618 = vpop.f32.mrf.mxu0
    %v619 = vadd.f32 %v467, %v618
    %620 = vmatmul.f32.gmra.mxu0 %v123
    %v621 = vpop.f32.mrf.mxu0
    %v622 = vadd.f32 %v467, %v621
    %623 = vmatmul.f32.gmra.mxu0 %v124
    %v624 = vpop.f32.mrf.mxu0
    %v625 = vadd.f32 %v467, %v624
    %626 = vmatmul.f32.gmra.mxu0 %v125
    %v627 = vpop.f32.mrf.mxu0
    %v628 = vadd.f32 %v467, %v627
    %629 = vmatmul.f32.gmra.mxu0 %v126
    %v630 = vpop.f32.mrf.mxu0
    %v631 = vadd.f32 %v467, %v630
    %632 = vmatmul.f32.gmra.mxu0 %v127
    %v633 = vpop.f32.mrf.mxu0
    %v634 = vadd.f32 %v467, %v633
    %635 = vdwg.mxu0
    %636 = vst [vmem:[#allocation3] sm:$0xff] %v490
    %637 = vst [vmem:[#allocation3 + $0x8] sm:$0xff] %v531
    %638 = vst [vmem:[#allocation3 + $0x10] sm:$0xff] %v572
    %639 = vst [vmem:[#allocation3 + $0x18] sm:$0xff] %v613
    %640 = vst [vmem:[#allocation3 + $0x20] sm:$0xff] %v493
    %641 = vst [vmem:[#allocation3 + $0x28] sm:$0xff] %v534
    %642 = vst [vmem:[#allocation3 + $0x30] sm:$0xff] %v575
    %643 = vst [vmem:[#allocation3 + $0x38] sm:$0xff] %v616
    %644 = vst [vmem:[#allocation3 + $0x40] sm:$0xff] %v496
    %645 = vst [vmem:[#allocation3 + $0x48] sm:$0xff] %v537
    %646 = vst [vmem:[#allocation3 + $0x50] sm:$0xff] %v578
    %647 = vst [vmem:[#allocation3 + $0x58] sm:$0xff] %v619
    %648 = vst [vmem:[#allocation3 + $0x60] sm:$0xff] %v499
    %649 = vst [vmem:[#allocation3 + $0x68] sm:$0xff] %v540
    %650 = vst [vmem:[#allocation3 + $0x70] sm:$0xff] %v581
    %651 = vst [vmem:[#allocation3 + $0x78] sm:$0xff] %v622
    %652 = vst [vmem:[#allocation3 + $0x80] sm:$0xff] %v502
    %653 = vst [vmem:[#allocation3 + $0x88] sm:$0xff] %v543
    %654 = vst [vmem:[#allocation3 + $0x90] sm:$0xff] %v584
    %655 = vst [vmem:[#allocation3 + $0x98] sm:$0xff] %v625
    %656 = vst [vmem:[#allocation3 + $0xa0] sm:$0xff] %v505
    %657 = vst [vmem:[#allocation3 + $0xa8] sm:$0xff] %v546
    %658 = vst [vmem:[#allocation3 + $0xb0] sm:$0xff] %v587
    %659 = vst [vmem:[#allocation3 + $0xb8] sm:$0xff] %v628
    %660 = vst [vmem:[#allocation3 + $0xc0] sm:$0xff] %v508
    %661 = vst [vmem:[#allocation3 + $0xc8] sm:$0xff] %v549
    %662 = vst [vmem:[#allocation3 + $0xd0] sm:$0xff] %v590
    %663 = vst [vmem:[#allocation3 + $0xd8] sm:$0xff] %v631
    %664 = vst [vmem:[#allocation3 + $0xe0] sm:$0xff] %v511
    %665 = vst [vmem:[#allocation3 + $0xe8] sm:$0xff] %v552
    %666 = vst [vmem:[#allocation3 + $0xf0] sm:$0xff] %v593
    %667 = vst [vmem:[#allocation3 + $0xf8] sm:$0xff] %v634
    %s668 = smul.u32 0, 4
    %s669 = smul.addr %s668, 8
    %s670 = scalar_lea.vmem [#allocation2], %s669
    %v671 = vld [vmem:[%s670] sm:$0xff]
    %v672 = vld [vmem:[%s670 + $0x8] sm:$0xff]
    %v673 = vld [vmem:[%s670 + $0x10] sm:$0xff]
    %v674 = vld [vmem:[%s670 + $0x18] sm:$0xff]
    %v675 = vld [vmem:[#allocation8] sm:$0xff]
    %v676 = vld [vmem:[#allocation8 + $0x8] sm:$0xff]
    %v677 = vld [vmem:[#allocation8 + $0x10] sm:$0xff]
    %v678 = vld [vmem:[#allocation8 + $0x18] sm:$0xff]
    %v679 = vld [vmem:[#allocation8 + $0x20] sm:$0xff]
    %v680 = vld [vmem:[#allocation8 + $0x28] sm:$0xff]
    %v681 = vld [vmem:[#allocation8 + $0x30] sm:$0xff]
    %v682 = vld [vmem:[#allocation8 + $0x38] sm:$0xff]
    %v683 = vld [vmem:[#allocation8 + $0x40] sm:$0xff]
    %v684 = vld [vmem:[#allocation8 + $0x48] sm:$0xff]
    %v685 = vld [vmem:[#allocation8 + $0x50] sm:$0xff]
    %v686 = vld [vmem:[#allocation8 + $0x58] sm:$0xff]
    %v687 = vld [vmem:[#allocation8 + $0x60] sm:$0xff]
    %v688 = vld [vmem:[#allocation8 + $0x68] sm:$0xff]
    %v689 = vld [vmem:[#allocation8 + $0x70] sm:$0xff]
    %v690 = vld [vmem:[#allocation8 + $0x78] sm:$0xff]
    %v691 = vld [vmem:[#allocation8 + $0x80] sm:$0xff]
    %v692 = vld [vmem:[#allocation8 + $0x88] sm:$0xff]
    %v693 = vld [vmem:[#allocation8 + $0x90] sm:$0xff]
    %v694 = vld [vmem:[#allocation8 + $0x98] sm:$0xff]
    %v695 = vld [vmem:[#allocation8 + $0xa0] sm:$0xff]
    %v696 = vld [vmem:[#allocation8 + $0xa8] sm:$0xff]
    %v697 = vld [vmem:[#allocation8 + $0xb0] sm:$0xff]
    %v698 = vld [vmem:[#allocation8 + $0xb8] sm:$0xff]
    %v699 = vld [vmem:[#allocation8 + $0xc0] sm:$0xff]
    %v700 = vld [vmem:[#allocation8 + $0xc8] sm:$0xff]
    %v701 = vld [vmem:[#allocation8 + $0xd0] sm:$0xff]
    %v702 = vld [vmem:[#allocation8 + $0xd8] sm:$0xff]
    %v703 = vld [vmem:[#allocation8 + $0xe0] sm:$0xff]
    %v704 = vld [vmem:[#allocation8 + $0xe8] sm:$0xff]
    %v705 = vld [vmem:[#allocation8 + $0xf0] sm:$0xff]
    %v706 = vld [vmem:[#allocation8 + $0xf8] sm:$0xff]
    %v707 = vld [vmem:[#allocation8 + $0x100] sm:$0xff]
    %v708 = vld [vmem:[#allocation8 + $0x108] sm:$0xff]
    %v709 = vld [vmem:[#allocation8 + $0x110] sm:$0xff]
    %v710 = vld [vmem:[#allocation8 + $0x118] sm:$0xff]
    %v711 = vld [vmem:[#allocation8 + $0x120] sm:$0xff]
    %v712 = vld [vmem:[#allocation8 + $0x128] sm:$0xff]
    %v713 = vld [vmem:[#allocation8 + $0x130] sm:$0xff]
    %v714 = vld [vmem:[#allocation8 + $0x138] sm:$0xff]
    %v715 = vld [vmem:[#allocation8 + $0x140] sm:$0xff]
    %v716 = vld [vmem:[#allocation8 + $0x148] sm:$0xff]
    %v717 = vld [vmem:[#allocation8 + $0x150] sm:$0xff]
    %v718 = vld [vmem:[#allocation8 + $0x158] sm:$0xff]
    %v719 = vld [vmem:[#allocation8 + $0x160] sm:$0xff]
    %v720 = vld [vmem:[#allocation8 + $0x168] sm:$0xff]
    %v721 = vld [vmem:[#allocation8 + $0x170] sm:$0xff]
    %v722 = vld [vmem:[#allocation8 + $0x178] sm:$0xff]
    %v723 = vld [vmem:[#allocation8 + $0x180] sm:$0xff]
    %v724 = vld [vmem:[#allocation8 + $0x188] sm:$0xff]
    %v725 = vld [vmem:[#allocation8 + $0x190] sm:$0xff]
    %v726 = vld [vmem:[#allocation8 + $0x198] sm:$0xff]
    %v727 = vld [vmem:[#allocation8 + $0x1a0] sm:$0xff]
    %v728 = vld [vmem:[#allocation8 + $0x1a8] sm:$0xff]
    %v729 = vld [vmem:[#allocation8 + $0x1b0] sm:$0xff]
    %v730 = vld [vmem:[#allocation8 + $0x1b8] sm:$0xff]
    %v731 = vld [vmem:[#allocation8 + $0x1c0] sm:$0xff]
    %v732 = vld [vmem:[#allocation8 + $0x1c8] sm:$0xff]
    %v733 = vld [vmem:[#allocation8 + $0x1d0] sm:$0xff]
    %v734 = vld [vmem:[#allocation8 + $0x1d8] sm:$0xff]
    %v735 = vld [vmem:[#allocation8 + $0x1e0] sm:$0xff]
    %v736 = vld [vmem:[#allocation8 + $0x1e8] sm:$0xff]
    %v737 = vld [vmem:[#allocation8 + $0x1f0] sm:$0xff]
    %v738 = vld [vmem:[#allocation8 + $0x1f8] sm:$0xff]
    %739 = vmatpush.msra.mxu0 %v735
    %740 = vmatpush.msra.mxu0 %v731
    %741 = vmatpush.msra.mxu0 %v727
    %742 = vmatpush.msra.mxu0 %v723
    %743 = vmatpush.msra.mxu0 %v719
    %744 = vmatpush.msra.mxu0 %v715
    %745 = vmatpush.msra.mxu0 %v711
    %746 = vmatpush.msra.mxu0 %v707
    %747 = vmatpush.msra.mxu0 %v703
    %748 = vmatpush.msra.mxu0 %v699
    %749 = vmatpush.msra.mxu0 %v695
    %750 = vmatpush.msra.mxu0 %v691
    %751 = vmatpush.msra.mxu0 %v687
    %752 = vmatpush.msra.mxu0 %v683
    %753 = vmatpush.msra.mxu0 %v679
    %754 = vmatpush.msra.mxu0 %v675
    %755 = vmatmul.f32.gmra.mxu0 0.0
    %v756 = vpop.f32.mrf.mxu0
    %v757 = vadd.f32 0.0, %v756
    %758 = vdwg.mxu0
    %759 = vmatpush.msra.mxu0 %v736
    %760 = vmatpush.msra.mxu0 %v732
    %761 = vmatpush.msra.mxu0 %v728
    %762 = vmatpush.msra.mxu0 %v724
    %763 = vmatpush.msra.mxu0 %v720
    %764 = vmatpush.msra.mxu0 %v716
    %765 = vmatpush.msra.mxu0 %v712
    %766 = vmatpush.msra.mxu0 %v708
    %767 = vmatpush.msra.mxu0 %v704
    %768 = vmatpush.msra.mxu0 %v700
    %769 = vmatpush.msra.mxu0 %v696
    %770 = vmatpush.msra.mxu0 %v692
    %771 = vmatpush.msra.mxu0 %v688
    %772 = vmatpush.msra.mxu0 %v684
    %773 = vmatpush.msra.mxu0 %v680
    %774 = vmatpush.msra.mxu0 %v676
    %775 = vmatmul.f32.gmra.mxu0 0.0
    %v776 = vpop.f32.mrf.mxu0
    %v777 = vadd.f32 0.0, %v776
    %778 = vdwg.mxu0
    %779 = vmatpush.msra.mxu0 %v737
    %780 = vmatpush.msra.mxu0 %v733
    %781 = vmatpush.msra.mxu0 %v729
    %782 = vmatpush.msra.mxu0 %v725
    %783 = vmatpush.msra.mxu0 %v721
    %784 = vmatpush.msra.mxu0 %v717
    %785 = vmatpush.msra.mxu0 %v713
    %786 = vmatpush.msra.mxu0 %v709
    %787 = vmatpush.msra.mxu0 %v705
    %788 = vmatpush.msra.mxu0 %v701
    %789 = vmatpush.msra.mxu0 %v697
    %790 = vmatpush.msra.mxu0 %v693
    %791 = vmatpush.msra.mxu0 %v689
    %792 = vmatpush.msra.mxu0 %v685
    %793 = vmatpush.msra.mxu0 %v681
    %794 = vmatpush.msra.mxu0 %v677
    %795 = vmatmul.f32.gmra.mxu0 0.0
    %v796 = vpop.f32.mrf.mxu0
    %v797 = vadd.f32 0.0, %v796
    %798 = vdwg.mxu0
    %799 = vmatpush.msra.mxu0 %v738
    %800 = vmatpush.msra.mxu0 %v734
    %801 = vmatpush.msra.mxu0 %v730
    %802 = vmatpush.msra.mxu0 %v726
    %803 = vmatpush.msra.mxu0 %v722
    %804 = vmatpush.msra.mxu0 %v718
    %805 = vmatpush.msra.mxu0 %v714
    %806 = vmatpush.msra.mxu0 %v710
    %807 = vmatpush.msra.mxu0 %v706
    %808 = vmatpush.msra.mxu0 %v702
    %809 = vmatpush.msra.mxu0 %v698
    %810 = vmatpush.msra.mxu0 %v694
    %811 = vmatpush.msra.mxu0 %v690
    %812 = vmatpush.msra.mxu0 %v686
    %813 = vmatpush.msra.mxu0 %v682
    %814 = vmatpush.msra.mxu0 %v678
    %815 = vmatmul.f32.gmra.mxu0 0.0
    %v816 = vpop.f32.mrf.mxu0
    %v817 = vadd.f32 0.0, %v816
    %818 = vdwg.mxu0
    %v819 = vadd.f32 %v671, %v757
    %v820 = vadd.f32 %v672, %v777
    %v821 = vadd.f32 %v673, %v797
    %v822 = vadd.f32 %v674, %v817
    %s823 = smul.u32 7, 4
    %s824 = smul.addr %s823, 8
    %s825 = scalar_lea.vmem [#allocation3], %s824
    %v826 = vld [vmem:[%s825] sm:$0xff]
    %v827 = vld [vmem:[%s825 + $0x8] sm:$0xff]
    %v828 = vld [vmem:[%s825 + $0x10] sm:$0xff]
    %v829 = vld [vmem:[%s825 + $0x18] sm:$0xff]
    %v830 = vld [vmem:[#allocation9] sm:$0xff]
    %v831 = vld [vmem:[#allocation9 + $0x8] sm:$0xff]
    %v832 = vld [vmem:[#allocation9 + $0x10] sm:$0xff]
    %v833 = vld [vmem:[#allocation9 + $0x18] sm:$0xff]
    %v834 = vld [vmem:[#allocation9 + $0x20] sm:$0xff]
    %v835 = vld [vmem:[#allocation9 + $0x28] sm:$0xff]
    %v836 = vld [vmem:[#allocation9 + $0x30] sm:$0xff]
    %v837 = vld [vmem:[#allocation9 + $0x38] sm:$0xff]
    %v838 = vld [vmem:[#allocation9 + $0x40] sm:$0xff]
    %v839 = vld [vmem:[#allocation9 + $0x48] sm:$0xff]
    %v840 = vld [vmem:[#allocation9 + $0x50] sm:$0xff]
    %v841 = vld [vmem:[#allocation9 + $0x58] sm:$0xff]
    %v842 = vld [vmem:[#allocation9 + $0x60] sm:$0xff]
    %v843 = vld [vmem:[#allocation9 + $0x68] sm:$0xff]
    %v844 = vld [vmem:[#allocation9 + $0x70] sm:$0xff]
    %v845 = vld [vmem:[#allocation9 + $0x78] sm:$0xff]
    %v846 = vld [vmem:[#allocation9 + $0x80] sm:$0xff]
    %v847 = vld [vmem:[#allocation9 + $0x88] sm:$0xff]
    %v848 = vld [vmem:[#allocation9 + $0x90] sm:$0xff]
    %v849 = vld [vmem:[#allocation9 + $0x98] sm:$0xff]
    %v850 = vld [vmem:[#allocation9 + $0xa0] sm:$0xff]
    %v851 = vld [vmem:[#allocation9 + $0xa8] sm:$0xff]
    %v852 = vld [vmem:[#allocation9 + $0xb0] sm:$0xff]
    %v853 = vld [vmem:[#allocation9 + $0xb8] sm:$0xff]
    %v854 = vld [vmem:[#allocation9 + $0xc0] sm:$0xff]
    %v855 = vld [vmem:[#allocation9 + $0xc8] sm:$0xff]
    %v856 = vld [vmem:[#allocation9 + $0xd0] sm:$0xff]
    %v857 = vld [vmem:[#allocation9 + $0xd8] sm:$0xff]
    %v858 = vld [vmem:[#allocation9 + $0xe0] sm:$0xff]
    %v859 = vld [vmem:[#allocation9 + $0xe8] sm:$0xff]
    %v860 = vld [vmem:[#allocation9 + $0xf0] sm:$0xff]
    %v861 = vld [vmem:[#allocation9 + $0xf8] sm:$0xff]
    %v862 = vld [vmem:[#allocation9 + $0x100] sm:$0xff]
    %v863 = vld [vmem:[#allocation9 + $0x108] sm:$0xff]
    %v864 = vld [vmem:[#allocation9 + $0x110] sm:$0xff]
    %v865 = vld [vmem:[#allocation9 + $0x118] sm:$0xff]
    %v866 = vld [vmem:[#allocation9 + $0x120] sm:$0xff]
    %v867 = vld [vmem:[#allocation9 + $0x128] sm:$0xff]
    %v868 = vld [vmem:[#allocation9 + $0x130] sm:$0xff]
    %v869 = vld [vmem:[#allocation9 + $0x138] sm:$0xff]
    %v870 = vld [vmem:[#allocation9 + $0x140] sm:$0xff]
    %v871 = vld [vmem:[#allocation9 + $0x148] sm:$0xff]
    %v872 = vld [vmem:[#allocation9 + $0x150] sm:$0xff]
    %v873 = vld [vmem:[#allocation9 + $0x158] sm:$0xff]
    %v874 = vld [vmem:[#allocation9 + $0x160] sm:$0xff]
    %v875 = vld [vmem:[#allocation9 + $0x168] sm:$0xff]
    %v876 = vld [vmem:[#allocation9 + $0x170] sm:$0xff]
    %v877 = vld [vmem:[#allocation9 + $0x178] sm:$0xff]
    %v878 = vld [vmem:[#allocation9 + $0x180] sm:$0xff]
    %v879 = vld [vmem:[#allocation9 + $0x188] sm:$0xff]
    %v880 = vld [vmem:[#allocation9 + $0x190] sm:$0xff]
    %v881 = vld [vmem:[#allocation9 + $0x198] sm:$0xff]
    %v882 = vld [vmem:[#allocation9 + $0x1a0] sm:$0xff]
    %v883 = vld [vmem:[#allocation9 + $0x1a8] sm:$0xff]
    %v884 = vld [vmem:[#allocation9 + $0x1b0] sm:$0xff]
    %v885 = vld [vmem:[#allocation9 + $0x1b8] sm:$0xff]
    %v886 = vld [vmem:[#allocation9 + $0x1c0] sm:$0xff]
    %v887 = vld [vmem:[#allocation9 + $0x1c8] sm:$0xff]
    %v888 = vld [vmem:[#allocation9 + $0x1d0] sm:$0xff]
    %v889 = vld [vmem:[#allocation9 + $0x1d8] sm:$0xff]
    %v890 = vld [vmem:[#allocation9 + $0x1e0] sm:$0xff]
    %v891 = vld [vmem:[#allocation9 + $0x1e8] sm:$0xff]
    %v892 = vld [vmem:[#allocation9 + $0x1f0] sm:$0xff]
    %v893 = vld [vmem:[#allocation9 + $0x1f8] sm:$0xff]
    %894 = vmatpush.msra.mxu0 %v890
    %895 = vmatpush.msra.mxu0 %v886
    %896 = vmatpush.msra.mxu0 %v882
    %897 = vmatpush.msra.mxu0 %v878
    %898 = vmatpush.msra.mxu0 %v874
    %899 = vmatpush.msra.mxu0 %v870
    %900 = vmatpush.msra.mxu0 %v866
    %901 = vmatpush.msra.mxu0 %v862
    %902 = vmatpush.msra.mxu0 %v858
    %903 = vmatpush.msra.mxu0 %v854
    %904 = vmatpush.msra.mxu0 %v850
    %905 = vmatpush.msra.mxu0 %v846
    %906 = vmatpush.msra.mxu0 %v842
    %907 = vmatpush.msra.mxu0 %v838
    %908 = vmatpush.msra.mxu0 %v834
    %909 = vmatpush.msra.mxu0 %v830
    %910 = vmatmul.f32.gmra.mxu0 0.0
    %v911 = vpop.f32.mrf.mxu0
    %v912 = vadd.f32 0.0, %v911
    %913 = vdwg.mxu0
    %914 = vmatpush.msra.mxu0 %v891
    %915 = vmatpush.msra.mxu0 %v887
    %916 = vmatpush.msra.mxu0 %v883
    %917 = vmatpush.msra.mxu0 %v879
    %918 = vmatpush.msra.mxu0 %v875
    %919 = vmatpush.msra.mxu0 %v871
    %920 = vmatpush.msra.mxu0 %v867
    %921 = vmatpush.msra.mxu0 %v863
    %922 = vmatpush.msra.mxu0 %v859
    %923 = vmatpush.msra.mxu0 %v855
    %924 = vmatpush.msra.mxu0 %v851
    %925 = vmatpush.msra.mxu0 %v847
    %926 = vmatpush.msra.mxu0 %v843
    %927 = vmatpush.msra.mxu0 %v839
    %928 = vmatpush.msra.mxu0 %v835
    %929 = vmatpush.msra.mxu0 %v831
    %930 = vmatmul.f32.gmra.mxu0 0.0
    %v931 = vpop.f32.mrf.mxu0
    %v932 = vadd.f32 0.0, %v931
    %933 = vdwg.mxu0
    %934 = vmatpush.msra.mxu0 %v892
    %935 = vmatpush.msra.mxu0 %v888
    %936 = vmatpush.msra.mxu0 %v884
    %937 = vmatpush.msra.mxu0 %v880
    %938 = vmatpush.msra.mxu0 %v876
    %939 = vmatpush.msra.mxu0 %v872
    %940 = vmatpush.msra.mxu0 %v868
    %941 = vmatpush.msra.mxu0 %v864
    %942 = vmatpush.msra.mxu0 %v860
    %943 = vmatpush.msra.mxu0 %v856
    %944 = vmatpush.msra.mxu0 %v852
    %945 = vmatpush.msra.mxu0 %v848
    %946 = vmatpush.msra.mxu0 %v844
    %947 = vmatpush.msra.mxu0 %v840
    %948 = vmatpush.msra.mxu0 %v836
    %949 = vmatpush.msra.mxu0 %v832
    %950 = vmatmul.f32.gmra.mxu0 0.0
    %v951 = vpop.f32.mrf.mxu0
    %v952 = vadd.f32 0.0, %v951
    %953 = vdwg.mxu0
    %954 = vmatpush.msra.mxu0 %v893
    %955 = vmatpush.msra.mxu0 %v889
    %956 = vmatpush.msra.mxu0 %v885
    %957 = vmatpush.msra.mxu0 %v881
    %958 = vmatpush.msra.mxu0 %v877
    %959 = vmatpush.msra.mxu0 %v873
    %960 = vmatpush.msra.mxu0 %v869
    %961 = vmatpush.msra.mxu0 %v865
    %962 = vmatpush.msra.mxu0 %v861
    %963 = vmatpush.msra.mxu0 %v857
    %964 = vmatpush.msra.mxu0 %v853
    %965 = vmatpush.msra.mxu0 %v849
    %966 = vmatpush.msra.mxu0 %v845
    %967 = vmatpush.msra.mxu0 %v841
    %968 = vmatpush.msra.mxu0 %v837
    %969 = vmatpush.msra.mxu0 %v833
    %970 = vmatmul.f32.gmra.mxu0 0.0
    %v971 = vpop.f32.mrf.mxu0
    %v972 = vadd.f32 0.0, %v971
    %973 = vdwg.mxu0
    %v974 = vadd.f32 %v826, %v912
    %v975 = vadd.f32 %v827, %v932
    %v976 = vadd.f32 %v828, %v952
    %v977 = vadd.f32 %v829, %v972
    %v978 = vmul.f32 %v819, 0.5
    %v979 = vtanh.pop %v978
    %v980 = vmul.f32 %v979, 0.5
    %v981 = vadd.f32 %v980, 0.5
    %v982 = vmul.f32 %v820, 0.5
    %v983 = vtanh.pop %v982
    %v984 = vmul.f32 %v983, 0.5
    %v985 = vadd.f32 %v984, 0.5
    %v986 = vtanh.pop %v821
    %v987 = vmul.f32 %v822, 0.5
    %v988 = vtanh.pop %v987
    %v989 = vmul.f32 %v988, 0.5
    %v990 = vadd.f32 %v989, 0.5
    %v991 = vmul.f32 %v985, 0.0
    %v992 = vmul.f32 %v981, %v986
    %v993 = vadd.f32 %v991, %v992
    %v994 = vtanh.pop %v993
    %v995 = vmul.f32 %v990, %v994
    %v996 = vmul.f32 %v974, 0.5
    %v997 = vtanh.pop %v996
    %v998 = vmul.f32 %v997, 0.5
    %v999 = vadd.f32 %v998, 0.5
    %v1000 = vmul.f32 %v975, 0.5
    %v1001 = vtanh.pop %v1000
    %v1002 = vmul.f32 %v1001, 0.5
    %v1003 = vadd.f32 %v1002, 0.5
    %v1004 = vtanh.pop %v976
    %v1005 = vmul.f32 %v977, 0.5
    %v1006 = vtanh.pop %v1005
    %v1007 = vmul.f32 %v1006, 0.5
    %v1008 = vadd.f32 %v1007, 0.5
    %v1009 = vmul.f32 %v1003, 0.0
    %v1010 = vmul.f32 %v999, %v1004
    %v1011 = vadd.f32 %v1009, %v1010
    %v1012 = vtanh.pop %v1011
    %v1013 = vmul.f32 %v1008, %v1012
    %vm1014 = vcmp.eq.s32.totalorder %v119, 0
    %v1015 = vsel %vm1014, 1, 0
    %1016 = vset.pattern.permute.xlu0 0
    %1017 = vperm.xlu0 %1016, %v1015
    %v1018 = vpop.permute.xlu0 %1017
    %vm1019 = vcmp.eq.s32.totalorder %v1018, 1
    %v1020 = vsel %vm1019, %v995, 0.0
    %vm1021 = vcmp.eq.s32.totalorder %v119, 7
    %v1022 = vsel %vm1021, 1, 0
    %1023 = vset.pattern.permute.xlu0 0
    %1024 = vperm.xlu0 %1023, %v1022
    %v1025 = vpop.permute.xlu0 %1024
    %vm1026 = vcmp.eq.s32.totalorder %v1025, 1
    %v1027 = vsel %vm1026, %v1013, 0.0
    %s1028 = smul.u32 1, 4
    %s1029 = smul.addr %s1028, 8
    %s1030 = scalar_lea.vmem [#allocation2], %s1029
    %v1031 = vld [vmem:[%s1030] sm:$0xff]
    %v1032 = vld [vmem:[%s1030 + $0x8] sm:$0xff]
    %v1033 = vld [vmem:[%s1030 + $0x10] sm:$0xff]
    %v1034 = vld [vmem:[%s1030 + $0x18] sm:$0xff]
    %1035 = vmatpush.msra.mxu0 %v735
    %1036 = vmatpush.msra.mxu0 %v731
    %1037 = vmatpush.msra.mxu0 %v727
    %1038 = vmatpush.msra.mxu0 %v723
    %1039 = vmatpush.msra.mxu0 %v719
    %1040 = vmatpush.msra.mxu0 %v715
    %1041 = vmatpush.msra.mxu0 %v711
    %1042 = vmatpush.msra.mxu0 %v707
    %1043 = vmatpush.msra.mxu0 %v703
    %1044 = vmatpush.msra.mxu0 %v699
    %1045 = vmatpush.msra.mxu0 %v695
    %1046 = vmatpush.msra.mxu0 %v691
    %1047 = vmatpush.msra.mxu0 %v687
    %1048 = vmatpush.msra.mxu0 %v683
    %1049 = vmatpush.msra.mxu0 %v679
    %1050 = vmatpush.msra.mxu0 %v675
    %1051 = vmatmul.f32.gmra.mxu0 %v995
    %v1052 = vpop.f32.mrf.mxu0
    %v1053 = vadd.f32 0.0, %v1052
    %1054 = vdwg.mxu0
    %1055 = vmatpush.msra.mxu0 %v736
    %1056 = vmatpush.msra.mxu0 %v732
    %1057 = vmatpush.msra.mxu0 %v728
    %1058 = vmatpush.msra.mxu0 %v724
    %1059 = vmatpush.msra.mxu0 %v720
    %1060 = vmatpush.msra.mxu0 %v716
    %1061 = vmatpush.msra.mxu0 %v712
    %1062 = vmatpush.msra.mxu0 %v708
    %1063 = vmatpush.msra.mxu0 %v704
    %1064 = vmatpush.msra.mxu0 %v700
    %1065 = vmatpush.msra.mxu0 %v696
    %1066 = vmatpush.msra.mxu0 %v692
    %1067 = vmatpush.msra.mxu0 %v688
    %1068 = vmatpush.msra.mxu0 %v684
    %1069 = vmatpush.msra.mxu0 %v680
    %1070 = vmatpush.msra.mxu0 %v676
    %1071 = vmatmul.f32.gmra.mxu0 %v995
    %v1072 = vpop.f32.mrf.mxu0
    %v1073 = vadd.f32 0.0, %v1072
    %1074 = vdwg.mxu0
    %1075 = vmatpush.msra.mxu0 %v737
    %1076 = vmatpush.msra.mxu0 %v733
    %1077 = vmatpush.msra.mxu0 %v729
    %1078 = vmatpush.msra.mxu0 %v725
    %1079 = vmatpush.msra.mxu0 %v721
    %1080 = vmatpush.msra.mxu0 %v717
    %1081 = vmatpush.msra.mxu0 %v713
    %1082 = vmatpush.msra.mxu0 %v709
    %1083 = vmatpush.msra.mxu0 %v705
    %1084 = vmatpush.msra.mxu0 %v701
    %1085 = vmatpush.msra.mxu0 %v697
    %1086 = vmatpush.msra.mxu0 %v693
    %1087 = vmatpush.msra.mxu0 %v689
    %1088 = vmatpush.msra.mxu0 %v685
    %1089 = vmatpush.msra.mxu0 %v681
    %1090 = vmatpush.msra.mxu0 %v677
    %1091 = vmatmul.f32.gmra.mxu0 %v995
    %v1092 = vpop.f32.mrf.mxu0
    %v1093 = vadd.f32 0.0, %v1092
    %1094 = vdwg.mxu0
    %1095 = vmatpush.msra.mxu0 %v738
    %1096 = vmatpush.msra.mxu0 %v734
    %1097 = vmatpush.msra.mxu0 %v730
    %1098 = vmatpush.msra.mxu0 %v726
    %1099 = vmatpush.msra.mxu0 %v722
    %1100 = vmatpush.msra.mxu0 %v718
    %1101 = vmatpush.msra.mxu0 %v714
    %1102 = vmatpush.msra.mxu0 %v710
    %1103 = vmatpush.msra.mxu0 %v706
    %1104 = vmatpush.msra.mxu0 %v702
    %1105 = vmatpush.msra.mxu0 %v698
    %1106 = vmatpush.msra.mxu0 %v694
    %1107 = vmatpush.msra.mxu0 %v690
    %1108 = vmatpush.msra.mxu0 %v686
    %1109 = vmatpush.msra.mxu0 %v682
    %1110 = vmatpush.msra.mxu0 %v678
    %1111 = vmatmul.f32.gmra.mxu0 %v995
    %v1112 = vpop.f32.mrf.mxu0
    %v1113 = vadd.f32 0.0, %v1112
    %1114 = vdwg.mxu0
    %v1115 = vadd.f32 %v1031, %v1053
    %v1116 = vadd.f32 %v1032, %v1073
    %v1117 = vadd.f32 %v1033, %v1093
    %v1118 = vadd.f32 %v1034, %v1113
    %s1119 = smul.u32 6, 4
    %s1120 = smul.addr %s1119, 8
    %s1121 = scalar_lea.vmem [#allocation3], %s1120
    %v1122 = vld [vmem:[%s1121] sm:$0xff]
    %v1123 = vld [vmem:[%s1121 + $0x8] sm:$0xff]
    %v1124 = vld [vmem:[%s1121 + $0x10] sm:$0xff]
    %v1125 = vld [vmem:[%s1121 + $0x18] sm:$0xff]
    %1126 = vmatpush.msra.mxu0 %v890
    %1127 = vmatpush.msra.mxu0 %v886
    %1128 = vmatpush.msra.mxu0 %v882
    %1129 = vmatpush.msra.mxu0 %v878
    %1130 = vmatpush.msra.mxu0 %v874
    %1131 = vmatpush.msra.mxu0 %v870
    %1132 = vmatpush.msra.mxu0 %v866
    %1133 = vmatpush.msra.mxu0 %v862
    %1134 = vmatpush.msra.mxu0 %v858
    %1135 = vmatpush.msra.mxu0 %v854
    %1136 = vmatpush.msra.mxu0 %v850
    %1137 = vmatpush.msra.mxu0 %v846
    %1138 = vmatpush.msra.mxu0 %v842
    %1139 = vmatpush.msra.mxu0 %v838
    %1140 = vmatpush.msra.mxu0 %v834
    %1141 = vmatpush.msra.mxu0 %v830
    %1142 = vmatmul.f32.gmra.mxu0 %v1013
    %v1143 = vpop.f32.mrf.mxu0
    %v1144 = vadd.f32 0.0, %v1143
    %1145 = vdwg.mxu0
    %1146 = vmatpush.msra.mxu0 %v891
    %1147 = vmatpush.msra.mxu0 %v887
    %1148 = vmatpush.msra.mxu0 %v883
    %1149 = vmatpush.msra.mxu0 %v879
    %1150 = vmatpush.msra.mxu0 %v875
    %1151 = vmatpush.msra.mxu0 %v871
    %1152 = vmatpush.msra.mxu0 %v867
    %1153 = vmatpush.msra.mxu0 %v863
    %1154 = vmatpush.msra.mxu0 %v859
    %1155 = vmatpush.msra.mxu0 %v855
    %1156 = vmatpush.msra.mxu0 %v851
    %1157 = vmatpush.msra.mxu0 %v847
    %1158 = vmatpush.msra.mxu0 %v843
    %1159 = vmatpush.msra.mxu0 %v839
    %1160 = vmatpush.msra.mxu0 %v835
    %1161 = vmatpush.msra.mxu0 %v831
    %1162 = vmatmul.f32.gmra.mxu0 %v1013
    %v1163 = vpop.f32.mrf.mxu0
    %v1164 = vadd.f32 0.0, %v1163
    %1165 = vdwg.mxu0
    %1166 = vmatpush.msra.mxu0 %v892
    %1167 = vmatpush.msra.mxu0 %v888
    %1168 = vmatpush.msra.mxu0 %v884
    %1169 = vmatpush.msra.mxu0 %v880
    %1170 = vmatpush.msra.mxu0 %v876
    %1171 = vmatpush.msra.mxu0 %v872
    %1172 = vmatpush.msra.mxu0 %v868
    %1173 = vmatpush.msra.mxu0 %v864
    %1174 = vmatpush.msra.mxu0 %v860
    %1175 = vmatpush.msra.mxu0 %v856
    %1176 = vmatpush.msra.mxu0 %v852
    %1177 = vmatpush.msra.mxu0 %v848
    %1178 = vmatpush.msra.mxu0 %v844
    %1179 = vmatpush.msra.mxu0 %v840
    %1180 = vmatpush.msra.mxu0 %v836
    %1181 = vmatpush.msra.mxu0 %v832
    %1182 = vmatmul.f32.gmra.mxu0 %v1013
    %v1183 = vpop.f32.mrf.mxu0
    %v1184 = vadd.f32 0.0, %v1183
    %1185 = vdwg.mxu0
    %1186 = vmatpush.msra.mxu0 %v893
    %1187 = vmatpush.msra.mxu0 %v889
    %1188 = vmatpush.msra.mxu0 %v885
    %1189 = vmatpush.msra.mxu0 %v881
    %1190 = vmatpush.msra.mxu0 %v877
    %1191 = vmatpush.msra.mxu0 %v873
    %1192 = vmatpush.msra.mxu0 %v869
    %1193 = vmatpush.msra.mxu0 %v865
    %1194 = vmatpush.msra.mxu0 %v861
    %1195 = vmatpush.msra.mxu0 %v857
    %1196 = vmatpush.msra.mxu0 %v853
    %1197 = vmatpush.msra.mxu0 %v849
    %1198 = vmatpush.msra.mxu0 %v845
    %1199 = vmatpush.msra.mxu0 %v841
    %1200 = vmatpush.msra.mxu0 %v837
    %1201 = vmatpush.msra.mxu0 %v833
    %1202 = vmatmul.f32.gmra.mxu0 %v1013
    %v1203 = vpop.f32.mrf.mxu0
    %v1204 = vadd.f32 0.0, %v1203
    %1205 = vdwg.mxu0
    %v1206 = vadd.f32 %v1122, %v1144
    %v1207 = vadd.f32 %v1123, %v1164
    %v1208 = vadd.f32 %v1124, %v1184
    %v1209 = vadd.f32 %v1125, %v1204
    %v1210 = vmul.f32 %v1115, 0.5
    %v1211 = vtanh.pop %v1210
    %v1212 = vmul.f32 %v1211, 0.5
    %v1213 = vadd.f32 %v1212, 0.5
    %v1214 = vmul.f32 %v1116, 0.5
    %v1215 = vtanh.pop %v1214
    %v1216 = vmul.f32 %v1215, 0.5
    %v1217 = vadd.f32 %v1216, 0.5
    %v1218 = vtanh.pop %v1117
    %v1219 = vmul.f32 %v1118, 0.5
    %v1220 = vtanh.pop %v1219
    %v1221 = vmul.f32 %v1220, 0.5
    %v1222 = vadd.f32 %v1221, 0.5
    %v1223 = vmul.f32 %v1217, %v993
    %v1224 = vmul.f32 %v1213, %v1218
    %v1225 = vadd.f32 %v1223, %v1224
    %v1226 = vtanh.pop %v1225
    %v1227 = vmul.f32 %v1222, %v1226
    %v1228 = vmul.f32 %v1206, 0.5
    %v1229 = vtanh.pop %v1228
    %v1230 = vmul.f32 %v1229, 0.5
    %v1231 = vadd.f32 %v1230, 0.5
    %v1232 = vmul.f32 %v1207, 0.5
    %v1233 = vtanh.pop %v1232
    %v1234 = vmul.f32 %v1233, 0.5
    %v1235 = vadd.f32 %v1234, 0.5
    %v1236 = vtanh.pop %v1208
    %v1237 = vmul.f32 %v1209, 0.5
    %v1238 = vtanh.pop %v1237
    %v1239 = vmul.f32 %v1238, 0.5
    %v1240 = vadd.f32 %v1239, 0.5
    %v1241 = vmul.f32 %v1235, %v1011
    %v1242 = vmul.f32 %v1231, %v1236
    %v1243 = vadd.f32 %v1241, %v1242
    %v1244 = vtanh.pop %v1243
    %v1245 = vmul.f32 %v1240, %v1244
    %vm1246 = vcmp.eq.s32.totalorder %v119, 1
    %v1247 = vsel %vm1246, 1, 0
    %1248 = vset.pattern.permute.xlu0 0
    %1249 = vperm.xlu0 %1248, %v1247
    %v1250 = vpop.permute.xlu0 %1249
    %vm1251 = vcmp.eq.s32.totalorder %v1250, 1
    %v1252 = vsel %vm1251, %v1227, %v1020
    %vm1253 = vcmp.eq.s32.totalorder %v119, 6
    %v1254 = vsel %vm1253, 1, 0
    %1255 = vset.pattern.permute.xlu0 0
    %1256 = vperm.xlu0 %1255, %v1254
    %v1257 = vpop.permute.xlu0 %1256
    %vm1258 = vcmp.eq.s32.totalorder %v1257, 1
    %v1259 = vsel %vm1258, %v1245, %v1027
    %s1260 = smul.u32 2, 4
    %s1261 = smul.addr %s1260, 8
    %s1262 = scalar_lea.vmem [#allocation2], %s1261
    %v1263 = vld [vmem:[%s1262] sm:$0xff]
    %v1264 = vld [vmem:[%s1262 + $0x8] sm:$0xff]
    %v1265 = vld [vmem:[%s1262 + $0x10] sm:$0xff]
    %v1266 = vld [vmem:[%s1262 + $0x18] sm:$0xff]
    %1267 = vmatpush.msra.mxu0 %v735
    %1268 = vmatpush.msra.mxu0 %v731
    %1269 = vmatpush.msra.mxu0 %v727
    %1270 = vmatpush.msra.mxu0 %v723
    %1271 = vmatpush.msra.mxu0 %v719
    %1272 = vmatpush.msra.mxu0 %v715
    %1273 = vmatpush.msra.mxu0 %v711
    %1274 = vmatpush.msra.mxu0 %v707
    %1275 = vmatpush.msra.mxu0 %v703
    %1276 = vmatpush.msra.mxu0 %v699
    %1277 = vmatpush.msra.mxu0 %v695
    %1278 = vmatpush.msra.mxu0 %v691
    %1279 = vmatpush.msra.mxu0 %v687
    %1280 = vmatpush.msra.mxu0 %v683
    %1281 = vmatpush.msra.mxu0 %v679
    %1282 = vmatpush.msra.mxu0 %v675
    %1283 = vmatmul.f32.gmra.mxu0 %v1227
    %v1284 = vpop.f32.mrf.mxu0
    %v1285 = vadd.f32 0.0, %v1284
    %1286 = vdwg.mxu0
    %1287 = vmatpush.msra.mxu0 %v736
    %1288 = vmatpush.msra.mxu0 %v732
    %1289 = vmatpush.msra.mxu0 %v728
    %1290 = vmatpush.msra.mxu0 %v724
    %1291 = vmatpush.msra.mxu0 %v720
    %1292 = vmatpush.msra.mxu0 %v716
    %1293 = vmatpush.msra.mxu0 %v712
    %1294 = vmatpush.msra.mxu0 %v708
    %1295 = vmatpush.msra.mxu0 %v704
    %1296 = vmatpush.msra.mxu0 %v700
    %1297 = vmatpush.msra.mxu0 %v696
    %1298 = vmatpush.msra.mxu0 %v692
    %1299 = vmatpush.msra.mxu0 %v688
    %1300 = vmatpush.msra.mxu0 %v684
    %1301 = vmatpush.msra.mxu0 %v680
    %1302 = vmatpush.msra.mxu0 %v676
    %1303 = vmatmul.f32.gmra.mxu0 %v1227
    %v1304 = vpop.f32.mrf.mxu0
    %v1305 = vadd.f32 0.0, %v1304
    %1306 = vdwg.mxu0
    %1307 = vmatpush.msra.mxu0 %v737
    %1308 = vmatpush.msra.mxu0 %v733
    %1309 = vmatpush.msra.mxu0 %v729
    %1310 = vmatpush.msra.mxu0 %v725
    %1311 = vmatpush.msra.mxu0 %v721
    %1312 = vmatpush.msra.mxu0 %v717
    %1313 = vmatpush.msra.mxu0 %v713
    %1314 = vmatpush.msra.mxu0 %v709
    %1315 = vmatpush.msra.mxu0 %v705
    %1316 = vmatpush.msra.mxu0 %v701
    %1317 = vmatpush.msra.mxu0 %v697
    %1318 = vmatpush.msra.mxu0 %v693
    %1319 = vmatpush.msra.mxu0 %v689
    %1320 = vmatpush.msra.mxu0 %v685
    %1321 = vmatpush.msra.mxu0 %v681
    %1322 = vmatpush.msra.mxu0 %v677
    %1323 = vmatmul.f32.gmra.mxu0 %v1227
    %v1324 = vpop.f32.mrf.mxu0
    %v1325 = vadd.f32 0.0, %v1324
    %1326 = vdwg.mxu0
    %1327 = vmatpush.msra.mxu0 %v738
    %1328 = vmatpush.msra.mxu0 %v734
    %1329 = vmatpush.msra.mxu0 %v730
    %1330 = vmatpush.msra.mxu0 %v726
    %1331 = vmatpush.msra.mxu0 %v722
    %1332 = vmatpush.msra.mxu0 %v718
    %1333 = vmatpush.msra.mxu0 %v714
    %1334 = vmatpush.msra.mxu0 %v710
    %1335 = vmatpush.msra.mxu0 %v706
    %1336 = vmatpush.msra.mxu0 %v702
    %1337 = vmatpush.msra.mxu0 %v698
    %1338 = vmatpush.msra.mxu0 %v694
    %1339 = vmatpush.msra.mxu0 %v690
    %1340 = vmatpush.msra.mxu0 %v686
    %1341 = vmatpush.msra.mxu0 %v682
    %1342 = vmatpush.msra.mxu0 %v678
    %1343 = vmatmul.f32.gmra.mxu0 %v1227
    %v1344 = vpop.f32.mrf.mxu0
    %v1345 = vadd.f32 0.0, %v1344
    %1346 = vdwg.mxu0
    %v1347 = vadd.f32 %v1263, %v1285
    %v1348 = vadd.f32 %v1264, %v1305
    %v1349 = vadd.f32 %v1265, %v1325
    %v1350 = vadd.f32 %v1266, %v1345
    %s1351 = smul.u32 5, 4
    %s1352 = smul.addr %s1351, 8
    %s1353 = scalar_lea.vmem [#allocation3], %s1352
    %v1354 = vld [vmem:[%s1353] sm:$0xff]
    %v1355 = vld [vmem:[%s1353 + $0x8] sm:$0xff]
    %v1356 = vld [vmem:[%s1353 + $0x10] sm:$0xff]
    %v1357 = vld [vmem:[%s1353 + $0x18] sm:$0xff]
    %1358 = vmatpush.msra.mxu0 %v890
    %1359 = vmatpush.msra.mxu0 %v886
    %1360 = vmatpush.msra.mxu0 %v882
    %1361 = vmatpush.msra.mxu0 %v878
    %1362 = vmatpush.msra.mxu0 %v874
    %1363 = vmatpush.msra.mxu0 %v870
    %1364 = vmatpush.msra.mxu0 %v866
    %1365 = vmatpush.msra.mxu0 %v862
    %1366 = vmatpush.msra.mxu0 %v858
    %1367 = vmatpush.msra.mxu0 %v854
    %1368 = vmatpush.msra.mxu0 %v850
    %1369 = vmatpush.msra.mxu0 %v846
    %1370 = vmatpush.msra.mxu0 %v842
    %1371 = vmatpush.msra.mxu0 %v838
    %1372 = vmatpush.msra.mxu0 %v834
    %1373 = vmatpush.msra.mxu0 %v830
    %1374 = vmatmul.f32.gmra.mxu0 %v1245
    %v1375 = vpop.f32.mrf.mxu0
    %v1376 = vadd.f32 0.0, %v1375
    %1377 = vdwg.mxu0
    %1378 = vmatpush.msra.mxu0 %v891
    %1379 = vmatpush.msra.mxu0 %v887
    %1380 = vmatpush.msra.mxu0 %v883
    %1381 = vmatpush.msra.mxu0 %v879
    %1382 = vmatpush.msra.mxu0 %v875
    %1383 = vmatpush.msra.mxu0 %v871
    %1384 = vmatpush.msra.mxu0 %v867
    %1385 = vmatpush.msra.mxu0 %v863
    %1386 = vmatpush.msra.mxu0 %v859
    %1387 = vmatpush.msra.mxu0 %v855
    %1388 = vmatpush.msra.mxu0 %v851
    %1389 = vmatpush.msra.mxu0 %v847
    %1390 = vmatpush.msra.mxu0 %v843
    %1391 = vmatpush.msra.mxu0 %v839
    %1392 = vmatpush.msra.mxu0 %v835
    %1393 = vmatpush.msra.mxu0 %v831
    %1394 = vmatmul.f32.gmra.mxu0 %v1245
    %v1395 = vpop.f32.mrf.mxu0
    %v1396 = vadd.f32 0.0, %v1395
    %1397 = vdwg.mxu0
    %1398 = vmatpush.msra.mxu0 %v892
    %1399 = vmatpush.msra.mxu0 %v888
    %1400 = vmatpush.msra.mxu0 %v884
    %1401 = vmatpush.msra.mxu0 %v880
    %1402 = vmatpush.msra.mxu0 %v876
    %1403 = vmatpush.msra.mxu0 %v872
    %1404 = vmatpush.msra.mxu0 %v868
    %1405 = vmatpush.msra.mxu0 %v864
    %1406 = vmatpush.msra.mxu0 %v860
    %1407 = vmatpush.msra.mxu0 %v856
    %1408 = vmatpush.msra.mxu0 %v852
    %1409 = vmatpush.msra.mxu0 %v848
    %1410 = vmatpush.msra.mxu0 %v844
    %1411 = vmatpush.msra.mxu0 %v840
    %1412 = vmatpush.msra.mxu0 %v836
    %1413 = vmatpush.msra.mxu0 %v832
    %1414 = vmatmul.f32.gmra.mxu0 %v1245
    %v1415 = vpop.f32.mrf.mxu0
    %v1416 = vadd.f32 0.0, %v1415
    %1417 = vdwg.mxu0
    %1418 = vmatpush.msra.mxu0 %v893
    %1419 = vmatpush.msra.mxu0 %v889
    %1420 = vmatpush.msra.mxu0 %v885
    %1421 = vmatpush.msra.mxu0 %v881
    %1422 = vmatpush.msra.mxu0 %v877
    %1423 = vmatpush.msra.mxu0 %v873
    %1424 = vmatpush.msra.mxu0 %v869
    %1425 = vmatpush.msra.mxu0 %v865
    %1426 = vmatpush.msra.mxu0 %v861
    %1427 = vmatpush.msra.mxu0 %v857
    %1428 = vmatpush.msra.mxu0 %v853
    %1429 = vmatpush.msra.mxu0 %v849
    %1430 = vmatpush.msra.mxu0 %v845
    %1431 = vmatpush.msra.mxu0 %v841
    %1432 = vmatpush.msra.mxu0 %v837
    %1433 = vmatpush.msra.mxu0 %v833
    %1434 = vmatmul.f32.gmra.mxu0 %v1245
    %v1435 = vpop.f32.mrf.mxu0
    %v1436 = vadd.f32 0.0, %v1435
    %1437 = vdwg.mxu0
    %v1438 = vadd.f32 %v1354, %v1376
    %v1439 = vadd.f32 %v1355, %v1396
    %v1440 = vadd.f32 %v1356, %v1416
    %v1441 = vadd.f32 %v1357, %v1436
    %v1442 = vmul.f32 %v1347, 0.5
    %v1443 = vtanh.pop %v1442
    %v1444 = vmul.f32 %v1443, 0.5
    %v1445 = vadd.f32 %v1444, 0.5
    %v1446 = vmul.f32 %v1348, 0.5
    %v1447 = vtanh.pop %v1446
    %v1448 = vmul.f32 %v1447, 0.5
    %v1449 = vadd.f32 %v1448, 0.5
    %v1450 = vtanh.pop %v1349
    %v1451 = vmul.f32 %v1350, 0.5
    %v1452 = vtanh.pop %v1451
    %v1453 = vmul.f32 %v1452, 0.5
    %v1454 = vadd.f32 %v1453, 0.5
    %v1455 = vmul.f32 %v1449, %v1225
    %v1456 = vmul.f32 %v1445, %v1450
    %v1457 = vadd.f32 %v1455, %v1456
    %v1458 = vtanh.pop %v1457
    %v1459 = vmul.f32 %v1454, %v1458
    %v1460 = vmul.f32 %v1438, 0.5
    %v1461 = vtanh.pop %v1460
    %v1462 = vmul.f32 %v1461, 0.5
    %v1463 = vadd.f32 %v1462, 0.5
    %v1464 = vmul.f32 %v1439, 0.5
    %v1465 = vtanh.pop %v1464
    %v1466 = vmul.f32 %v1465, 0.5
    %v1467 = vadd.f32 %v1466, 0.5
    %v1468 = vtanh.pop %v1440
    %v1469 = vmul.f32 %v1441, 0.5
    %v1470 = vtanh.pop %v1469
    %v1471 = vmul.f32 %v1470, 0.5
    %v1472 = vadd.f32 %v1471, 0.5
    %v1473 = vmul.f32 %v1467, %v1243
    %v1474 = vmul.f32 %v1463, %v1468
    %v1475 = vadd.f32 %v1473, %v1474
    %v1476 = vtanh.pop %v1475
    %v1477 = vmul.f32 %v1472, %v1476
    %vm1478 = vcmp.eq.s32.totalorder %v119, 2
    %v1479 = vsel %vm1478, 1, 0
    %1480 = vset.pattern.permute.xlu0 0
    %1481 = vperm.xlu0 %1480, %v1479
    %v1482 = vpop.permute.xlu0 %1481
    %vm1483 = vcmp.eq.s32.totalorder %v1482, 1
    %v1484 = vsel %vm1483, %v1459, %v1252
    %vm1485 = vcmp.eq.s32.totalorder %v119, 5
    %v1486 = vsel %vm1485, 1, 0
    %1487 = vset.pattern.permute.xlu0 0
    %1488 = vperm.xlu0 %1487, %v1486
    %v1489 = vpop.permute.xlu0 %1488
    %vm1490 = vcmp.eq.s32.totalorder %v1489, 1
    %v1491 = vsel %vm1490, %v1477, %v1259
    %s1492 = smul.u32 3, 4
    %s1493 = smul.addr %s1492, 8
    %s1494 = scalar_lea.vmem [#allocation2], %s1493
    %v1495 = vld [vmem:[%s1494] sm:$0xff]
    %v1496 = vld [vmem:[%s1494 + $0x8] sm:$0xff]
    %v1497 = vld [vmem:[%s1494 + $0x10] sm:$0xff]
    %v1498 = vld [vmem:[%s1494 + $0x18] sm:$0xff]
    %1499 = vmatpush.msra.mxu0 %v735
    %1500 = vmatpush.msra.mxu0 %v731
    %1501 = vmatpush.msra.mxu0 %v727
    %1502 = vmatpush.msra.mxu0 %v723
    %1503 = vmatpush.msra.mxu0 %v719
    %1504 = vmatpush.msra.mxu0 %v715
    %1505 = vmatpush.msra.mxu0 %v711
    %1506 = vmatpush.msra.mxu0 %v707
    %1507 = vmatpush.msra.mxu0 %v703
    %1508 = vmatpush.msra.mxu0 %v699
    %1509 = vmatpush.msra.mxu0 %v695
    %1510 = vmatpush.msra.mxu0 %v691
    %1511 = vmatpush.msra.mxu0 %v687
    %1512 = vmatpush.msra.mxu0 %v683
    %1513 = vmatpush.msra.mxu0 %v679
    %1514 = vmatpush.msra.mxu0 %v675
    %1515 = vmatmul.f32.gmra.mxu0 %v1459
    %v1516 = vpop.f32.mrf.mxu0
    %v1517 = vadd.f32 0.0, %v1516
    %1518 = vdwg.mxu0
    %1519 = vmatpush.msra.mxu0 %v736
    %1520 = vmatpush.msra.mxu0 %v732
    %1521 = vmatpush.msra.mxu0 %v728
    %1522 = vmatpush.msra.mxu0 %v724
    %1523 = vmatpush.msra.mxu0 %v720
    %1524 = vmatpush.msra.mxu0 %v716
    %1525 = vmatpush.msra.mxu0 %v712
    %1526 = vmatpush.msra.mxu0 %v708
    %1527 = vmatpush.msra.mxu0 %v704
    %1528 = vmatpush.msra.mxu0 %v700
    %1529 = vmatpush.msra.mxu0 %v696
    %1530 = vmatpush.msra.mxu0 %v692
    %1531 = vmatpush.msra.mxu0 %v688
    %1532 = vmatpush.msra.mxu0 %v684
    %1533 = vmatpush.msra.mxu0 %v680
    %1534 = vmatpush.msra.mxu0 %v676
    %1535 = vmatmul.f32.gmra.mxu0 %v1459
    %v1536 = vpop.f32.mrf.mxu0
    %v1537 = vadd.f32 0.0, %v1536
    %1538 = vdwg.mxu0
    %1539 = vmatpush.msra.mxu0 %v737
    %1540 = vmatpush.msra.mxu0 %v733
    %1541 = vmatpush.msra.mxu0 %v729
    %1542 = vmatpush.msra.mxu0 %v725
    %1543 = vmatpush.msra.mxu0 %v721
    %1544 = vmatpush.msra.mxu0 %v717
    %1545 = vmatpush.msra.mxu0 %v713
    %1546 = vmatpush.msra.mxu0 %v709
    %1547 = vmatpush.msra.mxu0 %v705
    %1548 = vmatpush.msra.mxu0 %v701
    %1549 = vmatpush.msra.mxu0 %v697
    %1550 = vmatpush.msra.mxu0 %v693
    %1551 = vmatpush.msra.mxu0 %v689
    %1552 = vmatpush.msra.mxu0 %v685
    %1553 = vmatpush.msra.mxu0 %v681
    %1554 = vmatpush.msra.mxu0 %v677
    %1555 = vmatmul.f32.gmra.mxu0 %v1459
    %v1556 = vpop.f32.mrf.mxu0
    %v1557 = vadd.f32 0.0, %v1556
    %1558 = vdwg.mxu0
    %1559 = vmatpush.msra.mxu0 %v738
    %1560 = vmatpush.msra.mxu0 %v734
    %1561 = vmatpush.msra.mxu0 %v730
    %1562 = vmatpush.msra.mxu0 %v726
    %1563 = vmatpush.msra.mxu0 %v722
    %1564 = vmatpush.msra.mxu0 %v718
    %1565 = vmatpush.msra.mxu0 %v714
    %1566 = vmatpush.msra.mxu0 %v710
    %1567 = vmatpush.msra.mxu0 %v706
    %1568 = vmatpush.msra.mxu0 %v702
    %1569 = vmatpush.msra.mxu0 %v698
    %1570 = vmatpush.msra.mxu0 %v694
    %1571 = vmatpush.msra.mxu0 %v690
    %1572 = vmatpush.msra.mxu0 %v686
    %1573 = vmatpush.msra.mxu0 %v682
    %1574 = vmatpush.msra.mxu0 %v678
    %1575 = vmatmul.f32.gmra.mxu0 %v1459
    %v1576 = vpop.f32.mrf.mxu0
    %v1577 = vadd.f32 0.0, %v1576
    %1578 = vdwg.mxu0
    %v1579 = vadd.f32 %v1495, %v1517
    %v1580 = vadd.f32 %v1496, %v1537
    %v1581 = vadd.f32 %v1497, %v1557
    %v1582 = vadd.f32 %v1498, %v1577
    %s1583 = smul.u32 4, 4
    %s1584 = smul.addr %s1583, 8
    %s1585 = scalar_lea.vmem [#allocation3], %s1584
    %v1586 = vld [vmem:[%s1585] sm:$0xff]
    %v1587 = vld [vmem:[%s1585 + $0x8] sm:$0xff]
    %v1588 = vld [vmem:[%s1585 + $0x10] sm:$0xff]
    %v1589 = vld [vmem:[%s1585 + $0x18] sm:$0xff]
    %1590 = vmatpush.msra.mxu0 %v890
    %1591 = vmatpush.msra.mxu0 %v886
    %1592 = vmatpush.msra.mxu0 %v882
    %1593 = vmatpush.msra.mxu0 %v878
    %1594 = vmatpush.msra.mxu0 %v874
    %1595 = vmatpush.msra.mxu0 %v870
    %1596 = vmatpush.msra.mxu0 %v866
    %1597 = vmatpush.msra.mxu0 %v862
    %1598 = vmatpush.msra.mxu0 %v858
    %1599 = vmatpush.msra.mxu0 %v854
    %1600 = vmatpush.msra.mxu0 %v850
    %1601 = vmatpush.msra.mxu0 %v846
    %1602 = vmatpush.msra.mxu0 %v842
    %1603 = vmatpush.msra.mxu0 %v838
    %1604 = vmatpush.msra.mxu0 %v834
    %1605 = vmatpush.msra.mxu0 %v830
    %1606 = vmatmul.f32.gmra.mxu0 %v1477
    %v1607 = vpop.f32.mrf.mxu0
    %v1608 = vadd.f32 0.0, %v1607
    %1609 = vdwg.mxu0
    %1610 = vmatpush.msra.mxu0 %v891
    %1611 = vmatpush.msra.mxu0 %v887
    %1612 = vmatpush.msra.mxu0 %v883
    %1613 = vmatpush.msra.mxu0 %v879
    %1614 = vmatpush.msra.mxu0 %v875
    %1615 = vmatpush.msra.mxu0 %v871
    %1616 = vmatpush.msra.mxu0 %v867
    %1617 = vmatpush.msra.mxu0 %v863
    %1618 = vmatpush.msra.mxu0 %v859
    %1619 = vmatpush.msra.mxu0 %v855
    %1620 = vmatpush.msra.mxu0 %v851
    %1621 = vmatpush.msra.mxu0 %v847
    %1622 = vmatpush.msra.mxu0 %v843
    %1623 = vmatpush.msra.mxu0 %v839
    %1624 = vmatpush.msra.mxu0 %v835
    %1625 = vmatpush.msra.mxu0 %v831
    %1626 = vmatmul.f32.gmra.mxu0 %v1477
    %v1627 = vpop.f32.mrf.mxu0
    %v1628 = vadd.f32 0.0, %v1627
    %1629 = vdwg.mxu0
    %1630 = vmatpush.msra.mxu0 %v892
    %1631 = vmatpush.msra.mxu0 %v888
    %1632 = vmatpush.msra.mxu0 %v884
    %1633 = vmatpush.msra.mxu0 %v880
    %1634 = vmatpush.msra.mxu0 %v876
    %1635 = vmatpush.msra.mxu0 %v872
    %1636 = vmatpush.msra.mxu0 %v868
    %1637 = vmatpush.msra.mxu0 %v864
    %1638 = vmatpush.msra.mxu0 %v860
    %1639 = vmatpush.msra.mxu0 %v856
    %1640 = vmatpush.msra.mxu0 %v852
    %1641 = vmatpush.msra.mxu0 %v848
    %1642 = vmatpush.msra.mxu0 %v844
    %1643 = vmatpush.msra.mxu0 %v840
    %1644 = vmatpush.msra.mxu0 %v836
    %1645 = vmatpush.msra.mxu0 %v832
    %1646 = vmatmul.f32.gmra.mxu0 %v1477
    %v1647 = vpop.f32.mrf.mxu0
    %v1648 = vadd.f32 0.0, %v1647
    %1649 = vdwg.mxu0
    %1650 = vmatpush.msra.mxu0 %v893
    %1651 = vmatpush.msra.mxu0 %v889
    %1652 = vmatpush.msra.mxu0 %v885
    %1653 = vmatpush.msra.mxu0 %v881
    %1654 = vmatpush.msra.mxu0 %v877
    %1655 = vmatpush.msra.mxu0 %v873
    %1656 = vmatpush.msra.mxu0 %v869
    %1657 = vmatpush.msra.mxu0 %v865
    %1658 = vmatpush.msra.mxu0 %v861
    %1659 = vmatpush.msra.mxu0 %v857
    %1660 = vmatpush.msra.mxu0 %v853
    %1661 = vmatpush.msra.mxu0 %v849
    %1662 = vmatpush.msra.mxu0 %v845
    %1663 = vmatpush.msra.mxu0 %v841
    %1664 = vmatpush.msra.mxu0 %v837
    %1665 = vmatpush.msra.mxu0 %v833
    %1666 = vmatmul.f32.gmra.mxu0 %v1477
    %v1667 = vpop.f32.mrf.mxu0
    %v1668 = vadd.f32 0.0, %v1667
    %1669 = vdwg.mxu0
    %v1670 = vadd.f32 %v1586, %v1608
    %v1671 = vadd.f32 %v1587, %v1628
    %v1672 = vadd.f32 %v1588, %v1648
    %v1673 = vadd.f32 %v1589, %v1668
    %v1674 = vmul.f32 %v1579, 0.5
    %v1675 = vtanh.pop %v1674
    %v1676 = vmul.f32 %v1675, 0.5
    %v1677 = vadd.f32 %v1676, 0.5
    %v1678 = vmul.f32 %v1580, 0.5
    %v1679 = vtanh.pop %v1678
    %v1680 = vmul.f32 %v1679, 0.5
    %v1681 = vadd.f32 %v1680, 0.5
    %v1682 = vtanh.pop %v1581
    %v1683 = vmul.f32 %v1582, 0.5
    %v1684 = vtanh.pop %v1683
    %v1685 = vmul.f32 %v1684, 0.5
    %v1686 = vadd.f32 %v1685, 0.5
    %v1687 = vmul.f32 %v1681, %v1457
    %v1688 = vmul.f32 %v1677, %v1682
    %v1689 = vadd.f32 %v1687, %v1688
    %v1690 = vtanh.pop %v1689
    %v1691 = vmul.f32 %v1686, %v1690
    %v1692 = vmul.f32 %v1670, 0.5
    %v1693 = vtanh.pop %v1692
    %v1694 = vmul.f32 %v1693, 0.5
    %v1695 = vadd.f32 %v1694, 0.5
    %v1696 = vmul.f32 %v1671, 0.5
    %v1697 = vtanh.pop %v1696
    %v1698 = vmul.f32 %v1697, 0.5
    %v1699 = vadd.f32 %v1698, 0.5
    %v1700 = vtanh.pop %v1672
    %v1701 = vmul.f32 %v1673, 0.5
    %v1702 = vtanh.pop %v1701
    %v1703 = vmul.f32 %v1702, 0.5
    %v1704 = vadd.f32 %v1703, 0.5
    %v1705 = vmul.f32 %v1699, %v1475
    %v1706 = vmul.f32 %v1695, %v1700
    %v1707 = vadd.f32 %v1705, %v1706
    %v1708 = vtanh.pop %v1707
    %v1709 = vmul.f32 %v1704, %v1708
    %vm1710 = vcmp.eq.s32.totalorder %v119, 3
    %v1711 = vsel %vm1710, 1, 0
    %1712 = vset.pattern.permute.xlu0 0
    %1713 = vperm.xlu0 %1712, %v1711
    %v1714 = vpop.permute.xlu0 %1713
    %vm1715 = vcmp.eq.s32.totalorder %v1714, 1
    %v1716 = vsel %vm1715, %v1691, %v1484
    %vm1717 = vcmp.eq.s32.totalorder %v119, 4
    %v1718 = vsel %vm1717, 1, 0
    %1719 = vset.pattern.permute.xlu0 0
    %1720 = vperm.xlu0 %1719, %v1718
    %v1721 = vpop.permute.xlu0 %1720
    %vm1722 = vcmp.eq.s32.totalorder %v1721, 1
    %v1723 = vsel %vm1722, %v1709, %v1491
    %s1724 = smul.addr %s1583, 8
    %s1725 = scalar_lea.vmem [#allocation2], %s1724
    %v1726 = vld [vmem:[%s1725] sm:$0xff]
    %v1727 = vld [vmem:[%s1725 + $0x8] sm:$0xff]
    %v1728 = vld [vmem:[%s1725 + $0x10] sm:$0xff]
    %v1729 = vld [vmem:[%s1725 + $0x18] sm:$0xff]
    %1730 = vmatpush.msra.mxu0 %v735
    %1731 = vmatpush.msra.mxu0 %v731
    %1732 = vmatpush.msra.mxu0 %v727
    %1733 = vmatpush.msra.mxu0 %v723
    %1734 = vmatpush.msra.mxu0 %v719
    %1735 = vmatpush.msra.mxu0 %v715
    %1736 = vmatpush.msra.mxu0 %v711
    %1737 = vmatpush.msra.mxu0 %v707
    %1738 = vmatpush.msra.mxu0 %v703
    %1739 = vmatpush.msra.mxu0 %v699
    %1740 = vmatpush.msra.mxu0 %v695
    %1741 = vmatpush.msra.mxu0 %v691
    %1742 = vmatpush.msra.mxu0 %v687
    %1743 = vmatpush.msra.mxu0 %v683
    %1744 = vmatpush.msra.mxu0 %v679
    %1745 = vmatpush.msra.mxu0 %v675
    %1746 = vmatmul.f32.gmra.mxu0 %v1691
    %v1747 = vpop.f32.mrf.mxu0
    %v1748 = vadd.f32 0.0, %v1747
    %1749 = vdwg.mxu0
    %1750 = vmatpush.msra.mxu0 %v736
    %1751 = vmatpush.msra.mxu0 %v732
    %1752 = vmatpush.msra.mxu0 %v728
    %1753 = vmatpush.msra.mxu0 %v724
    %1754 = vmatpush.msra.mxu0 %v720
    %1755 = vmatpush.msra.mxu0 %v716
    %1756 = vmatpush.msra.mxu0 %v712
    %1757 = vmatpush.msra.mxu0 %v708
    %1758 = vmatpush.msra.mxu0 %v704
    %1759 = vmatpush.msra.mxu0 %v700
    %1760 = vmatpush.msra.mxu0 %v696
    %1761 = vmatpush.msra.mxu0 %v692
    %1762 = vmatpush.msra.mxu0 %v688
    %1763 = vmatpush.msra.mxu0 %v684
    %1764 = vmatpush.msra.mxu0 %v680
    %1765 = vmatpush.msra.mxu0 %v676
    %1766 = vmatmul.f32.gmra.mxu0 %v1691
    %v1767 = vpop.f32.mrf.mxu0
    %v1768 = vadd.f32 0.0, %v1767
    %1769 = vdwg.mxu0
    %1770 = vmatpush.msra.mxu0 %v737
    %1771 = vmatpush.msra.mxu0 %v733
    %1772 = vmatpush.msra.mxu0 %v729
    %1773 = vmatpush.msra.mxu0 %v725
    %1774 = vmatpush.msra.mxu0 %v721
    %1775 = vmatpush.msra.mxu0 %v717
    %1776 = vmatpush.msra.mxu0 %v713
    %1777 = vmatpush.msra.mxu0 %v709
    %1778 = vmatpush.msra.mxu0 %v705
    %1779 = vmatpush.msra.mxu0 %v701
    %1780 = vmatpush.msra.mxu0 %v697
    %1781 = vmatpush.msra.mxu0 %v693
    %1782 = vmatpush.msra.mxu0 %v689
    %1783 = vmatpush.msra.mxu0 %v685
    %1784 = vmatpush.msra.mxu0 %v681
    %1785 = vmatpush.msra.mxu0 %v677
    %1786 = vmatmul.f32.gmra.mxu0 %v1691
    %v1787 = vpop.f32.mrf.mxu0
    %v1788 = vadd.f32 0.0, %v1787
    %1789 = vdwg.mxu0
    %1790 = vmatpush.msra.mxu0 %v738
    %1791 = vmatpush.msra.mxu0 %v734
    %1792 = vmatpush.msra.mxu0 %v730
    %1793 = vmatpush.msra.mxu0 %v726
    %1794 = vmatpush.msra.mxu0 %v722
    %1795 = vmatpush.msra.mxu0 %v718
    %1796 = vmatpush.msra.mxu0 %v714
    %1797 = vmatpush.msra.mxu0 %v710
    %1798 = vmatpush.msra.mxu0 %v706
    %1799 = vmatpush.msra.mxu0 %v702
    %1800 = vmatpush.msra.mxu0 %v698
    %1801 = vmatpush.msra.mxu0 %v694
    %1802 = vmatpush.msra.mxu0 %v690
    %1803 = vmatpush.msra.mxu0 %v686
    %1804 = vmatpush.msra.mxu0 %v682
    %1805 = vmatpush.msra.mxu0 %v678
    %1806 = vmatmul.f32.gmra.mxu0 %v1691
    %v1807 = vpop.f32.mrf.mxu0
    %v1808 = vadd.f32 0.0, %v1807
    %1809 = vdwg.mxu0
    %v1810 = vadd.f32 %v1726, %v1748
    %v1811 = vadd.f32 %v1727, %v1768
    %v1812 = vadd.f32 %v1728, %v1788
    %v1813 = vadd.f32 %v1729, %v1808
    %s1814 = smul.addr %s1492, 8
    %s1815 = scalar_lea.vmem [#allocation3], %s1814
    %v1816 = vld [vmem:[%s1815] sm:$0xff]
    %v1817 = vld [vmem:[%s1815 + $0x8] sm:$0xff]
    %v1818 = vld [vmem:[%s1815 + $0x10] sm:$0xff]
    %v1819 = vld [vmem:[%s1815 + $0x18] sm:$0xff]
    %1820 = vmatpush.msra.mxu0 %v890
    %1821 = vmatpush.msra.mxu0 %v886
    %1822 = vmatpush.msra.mxu0 %v882
    %1823 = vmatpush.msra.mxu0 %v878
    %1824 = vmatpush.msra.mxu0 %v874
    %1825 = vmatpush.msra.mxu0 %v870
    %1826 = vmatpush.msra.mxu0 %v866
    %1827 = vmatpush.msra.mxu0 %v862
    %1828 = vmatpush.msra.mxu0 %v858
    %1829 = vmatpush.msra.mxu0 %v854
    %1830 = vmatpush.msra.mxu0 %v850
    %1831 = vmatpush.msra.mxu0 %v846
    %1832 = vmatpush.msra.mxu0 %v842
    %1833 = vmatpush.msra.mxu0 %v838
    %1834 = vmatpush.msra.mxu0 %v834
    %1835 = vmatpush.msra.mxu0 %v830
    %1836 = vmatmul.f32.gmra.mxu0 %v1709
    %v1837 = vpop.f32.mrf.mxu0
    %v1838 = vadd.f32 0.0, %v1837
    %1839 = vdwg.mxu0
    %1840 = vmatpush.msra.mxu0 %v891
    %1841 = vmatpush.msra.mxu0 %v887
    %1842 = vmatpush.msra.mxu0 %v883
    %1843 = vmatpush.msra.mxu0 %v879
    %1844 = vmatpush.msra.mxu0 %v875
    %1845 = vmatpush.msra.mxu0 %v871
    %1846 = vmatpush.msra.mxu0 %v867
    %1847 = vmatpush.msra.mxu0 %v863
    %1848 = vmatpush.msra.mxu0 %v859
    %1849 = vmatpush.msra.mxu0 %v855
    %1850 = vmatpush.msra.mxu0 %v851
    %1851 = vmatpush.msra.mxu0 %v847
    %1852 = vmatpush.msra.mxu0 %v843
    %1853 = vmatpush.msra.mxu0 %v839
    %1854 = vmatpush.msra.mxu0 %v835
    %1855 = vmatpush.msra.mxu0 %v831
    %1856 = vmatmul.f32.gmra.mxu0 %v1709
    %v1857 = vpop.f32.mrf.mxu0
    %v1858 = vadd.f32 0.0, %v1857
    %1859 = vdwg.mxu0
    %1860 = vmatpush.msra.mxu0 %v892
    %1861 = vmatpush.msra.mxu0 %v888
    %1862 = vmatpush.msra.mxu0 %v884
    %1863 = vmatpush.msra.mxu0 %v880
    %1864 = vmatpush.msra.mxu0 %v876
    %1865 = vmatpush.msra.mxu0 %v872
    %1866 = vmatpush.msra.mxu0 %v868
    %1867 = vmatpush.msra.mxu0 %v864
    %1868 = vmatpush.msra.mxu0 %v860
    %1869 = vmatpush.msra.mxu0 %v856
    %1870 = vmatpush.msra.mxu0 %v852
    %1871 = vmatpush.msra.mxu0 %v848
    %1872 = vmatpush.msra.mxu0 %v844
    %1873 = vmatpush.msra.mxu0 %v840
    %1874 = vmatpush.msra.mxu0 %v836
    %1875 = vmatpush.msra.mxu0 %v832
    %1876 = vmatmul.f32.gmra.mxu0 %v1709
    %v1877 = vpop.f32.mrf.mxu0
    %v1878 = vadd.f32 0.0, %v1877
    %1879 = vdwg.mxu0
    %1880 = vmatpush.msra.mxu0 %v893
    %1881 = vmatpush.msra.mxu0 %v889
    %1882 = vmatpush.msra.mxu0 %v885
    %1883 = vmatpush.msra.mxu0 %v881
    %1884 = vmatpush.msra.mxu0 %v877
    %1885 = vmatpush.msra.mxu0 %v873
    %1886 = vmatpush.msra.mxu0 %v869
    %1887 = vmatpush.msra.mxu0 %v865
    %1888 = vmatpush.msra.mxu0 %v861
    %1889 = vmatpush.msra.mxu0 %v857
    %1890 = vmatpush.msra.mxu0 %v853
    %1891 = vmatpush.msra.mxu0 %v849
    %1892 = vmatpush.msra.mxu0 %v845
    %1893 = vmatpush.msra.mxu0 %v841
    %1894 = vmatpush.msra.mxu0 %v837
    %1895 = vmatpush.msra.mxu0 %v833
    %1896 = vmatmul.f32.gmra.mxu0 %v1709
    %v1897 = vpop.f32.mrf.mxu0
    %v1898 = vadd.f32 0.0, %v1897
    %1899 = vdwg.mxu0
    %v1900 = vadd.f32 %v1816, %v1838
    %v1901 = vadd.f32 %v1817, %v1858
    %v1902 = vadd.f32 %v1818, %v1878
    %v1903 = vadd.f32 %v1819, %v1898
    %v1904 = vmul.f32 %v1810, 0.5
    %v1905 = vtanh.pop %v1904
    %v1906 = vmul.f32 %v1905, 0.5
    %v1907 = vadd.f32 %v1906, 0.5
    %v1908 = vmul.f32 %v1811, 0.5
    %v1909 = vtanh.pop %v1908
    %v1910 = vmul.f32 %v1909, 0.5
    %v1911 = vadd.f32 %v1910, 0.5
    %v1912 = vtanh.pop %v1812
    %v1913 = vmul.f32 %v1813, 0.5
    %v1914 = vtanh.pop %v1913
    %v1915 = vmul.f32 %v1914, 0.5
    %v1916 = vadd.f32 %v1915, 0.5
    %v1917 = vmul.f32 %v1911, %v1689
    %v1918 = vmul.f32 %v1907, %v1912
    %v1919 = vadd.f32 %v1917, %v1918
    %v1920 = vtanh.pop %v1919
    %v1921 = vmul.f32 %v1916, %v1920
    %v1922 = vmul.f32 %v1900, 0.5
    %v1923 = vtanh.pop %v1922
    %v1924 = vmul.f32 %v1923, 0.5
    %v1925 = vadd.f32 %v1924, 0.5
    %v1926 = vmul.f32 %v1901, 0.5
    %v1927 = vtanh.pop %v1926
    %v1928 = vmul.f32 %v1927, 0.5
    %v1929 = vadd.f32 %v1928, 0.5
    %v1930 = vtanh.pop %v1902
    %v1931 = vmul.f32 %v1903, 0.5
    %v1932 = vtanh.pop %v1931
    %v1933 = vmul.f32 %v1932, 0.5
    %v1934 = vadd.f32 %v1933, 0.5
    %v1935 = vmul.f32 %v1929, %v1707
    %v1936 = vmul.f32 %v1925, %v1930
    %v1937 = vadd.f32 %v1935, %v1936
    %v1938 = vtanh.pop %v1937
    %v1939 = vmul.f32 %v1934, %v1938
    %v1940 = vsel %vm1722, %v1921, %v1716
    %v1941 = vsel %vm1715, %v1939, %v1723
    %s1942 = smul.addr %s1351, 8
    %s1943 = scalar_lea.vmem [#allocation2], %s1942
    %v1944 = vld [vmem:[%s1943] sm:$0xff]
    %v1945 = vld [vmem:[%s1943 + $0x8] sm:$0xff]
    %v1946 = vld [vmem:[%s1943 + $0x10] sm:$0xff]
    %v1947 = vld [vmem:[%s1943 + $0x18] sm:$0xff]
    %1948 = vmatpush.msra.mxu0 %v735
    %1949 = vmatpush.msra.mxu0 %v731
    %1950 = vmatpush.msra.mxu0 %v727
    %1951 = vmatpush.msra.mxu0 %v723
    %1952 = vmatpush.msra.mxu0 %v719
    %1953 = vmatpush.msra.mxu0 %v715
    %1954 = vmatpush.msra.mxu0 %v711
    %1955 = vmatpush.msra.mxu0 %v707
    %1956 = vmatpush.msra.mxu0 %v703
    %1957 = vmatpush.msra.mxu0 %v699
    %1958 = vmatpush.msra.mxu0 %v695
    %1959 = vmatpush.msra.mxu0 %v691
    %1960 = vmatpush.msra.mxu0 %v687
    %1961 = vmatpush.msra.mxu0 %v683
    %1962 = vmatpush.msra.mxu0 %v679
    %1963 = vmatpush.msra.mxu0 %v675
    %1964 = vmatmul.f32.gmra.mxu0 %v1921
    %v1965 = vpop.f32.mrf.mxu0
    %v1966 = vadd.f32 0.0, %v1965
    %1967 = vdwg.mxu0
    %1968 = vmatpush.msra.mxu0 %v736
    %1969 = vmatpush.msra.mxu0 %v732
    %1970 = vmatpush.msra.mxu0 %v728
    %1971 = vmatpush.msra.mxu0 %v724
    %1972 = vmatpush.msra.mxu0 %v720
    %1973 = vmatpush.msra.mxu0 %v716
    %1974 = vmatpush.msra.mxu0 %v712
    %1975 = vmatpush.msra.mxu0 %v708
    %1976 = vmatpush.msra.mxu0 %v704
    %1977 = vmatpush.msra.mxu0 %v700
    %1978 = vmatpush.msra.mxu0 %v696
    %1979 = vmatpush.msra.mxu0 %v692
    %1980 = vmatpush.msra.mxu0 %v688
    %1981 = vmatpush.msra.mxu0 %v684
    %1982 = vmatpush.msra.mxu0 %v680
    %1983 = vmatpush.msra.mxu0 %v676
    %1984 = vmatmul.f32.gmra.mxu0 %v1921
    %v1985 = vpop.f32.mrf.mxu0
    %v1986 = vadd.f32 0.0, %v1985
    %1987 = vdwg.mxu0
    %1988 = vmatpush.msra.mxu0 %v737
    %1989 = vmatpush.msra.mxu0 %v733
    %1990 = vmatpush.msra.mxu0 %v729
    %1991 = vmatpush.msra.mxu0 %v725
    %1992 = vmatpush.msra.mxu0 %v721
    %1993 = vmatpush.msra.mxu0 %v717
    %1994 = vmatpush.msra.mxu0 %v713
    %1995 = vmatpush.msra.mxu0 %v709
    %1996 = vmatpush.msra.mxu0 %v705
    %1997 = vmatpush.msra.mxu0 %v701
    %1998 = vmatpush.msra.mxu0 %v697
    %1999 = vmatpush.msra.mxu0 %v693
    %2000 = vmatpush.msra.mxu0 %v689
    %2001 = vmatpush.msra.mxu0 %v685
    %2002 = vmatpush.msra.mxu0 %v681
    %2003 = vmatpush.msra.mxu0 %v677
    %2004 = vmatmul.f32.gmra.mxu0 %v1921
    %v2005 = vpop.f32.mrf.mxu0
    %v2006 = vadd.f32 0.0, %v2005
    %2007 = vdwg.mxu0
    %2008 = vmatpush.msra.mxu0 %v738
    %2009 = vmatpush.msra.mxu0 %v734
    %2010 = vmatpush.msra.mxu0 %v730
    %2011 = vmatpush.msra.mxu0 %v726
    %2012 = vmatpush.msra.mxu0 %v722
    %2013 = vmatpush.msra.mxu0 %v718
    %2014 = vmatpush.msra.mxu0 %v714
    %2015 = vmatpush.msra.mxu0 %v710
    %2016 = vmatpush.msra.mxu0 %v706
    %2017 = vmatpush.msra.mxu0 %v702
    %2018 = vmatpush.msra.mxu0 %v698
    %2019 = vmatpush.msra.mxu0 %v694
    %2020 = vmatpush.msra.mxu0 %v690
    %2021 = vmatpush.msra.mxu0 %v686
    %2022 = vmatpush.msra.mxu0 %v682
    %2023 = vmatpush.msra.mxu0 %v678
    %2024 = vmatmul.f32.gmra.mxu0 %v1921
    %v2025 = vpop.f32.mrf.mxu0
    %v2026 = vadd.f32 0.0, %v2025
    %2027 = vdwg.mxu0
    %v2028 = vadd.f32 %v1944, %v1966
    %v2029 = vadd.f32 %v1945, %v1986
    %v2030 = vadd.f32 %v1946, %v2006
    %v2031 = vadd.f32 %v1947, %v2026
    %s2032 = smul.addr %s1260, 8
    %s2033 = scalar_lea.vmem [#allocation3], %s2032
    %v2034 = vld [vmem:[%s2033] sm:$0xff]
    %v2035 = vld [vmem:[%s2033 + $0x8] sm:$0xff]
    %v2036 = vld [vmem:[%s2033 + $0x10] sm:$0xff]
    %v2037 = vld [vmem:[%s2033 + $0x18] sm:$0xff]
    %2038 = vmatpush.msra.mxu0 %v890
    %2039 = vmatpush.msra.mxu0 %v886
    %2040 = vmatpush.msra.mxu0 %v882
    %2041 = vmatpush.msra.mxu0 %v878
    %2042 = vmatpush.msra.mxu0 %v874
    %2043 = vmatpush.msra.mxu0 %v870
    %2044 = vmatpush.msra.mxu0 %v866
    %2045 = vmatpush.msra.mxu0 %v862
    %2046 = vmatpush.msra.mxu0 %v858
    %2047 = vmatpush.msra.mxu0 %v854
    %2048 = vmatpush.msra.mxu0 %v850
    %2049 = vmatpush.msra.mxu0 %v846
    %2050 = vmatpush.msra.mxu0 %v842
    %2051 = vmatpush.msra.mxu0 %v838
    %2052 = vmatpush.msra.mxu0 %v834
    %2053 = vmatpush.msra.mxu0 %v830
    %2054 = vmatmul.f32.gmra.mxu0 %v1939
    %v2055 = vpop.f32.mrf.mxu0
    %v2056 = vadd.f32 0.0, %v2055
    %2057 = vdwg.mxu0
    %2058 = vmatpush.msra.mxu0 %v891
    %2059 = vmatpush.msra.mxu0 %v887
    %2060 = vmatpush.msra.mxu0 %v883
    %2061 = vmatpush.msra.mxu0 %v879
    %2062 = vmatpush.msra.mxu0 %v875
    %2063 = vmatpush.msra.mxu0 %v871
    %2064 = vmatpush.msra.mxu0 %v867
    %2065 = vmatpush.msra.mxu0 %v863
    %2066 = vmatpush.msra.mxu0 %v859
    %2067 = vmatpush.msra.mxu0 %v855
    %2068 = vmatpush.msra.mxu0 %v851
    %2069 = vmatpush.msra.mxu0 %v847
    %2070 = vmatpush.msra.mxu0 %v843
    %2071 = vmatpush.msra.mxu0 %v839
    %2072 = vmatpush.msra.mxu0 %v835
    %2073 = vmatpush.msra.mxu0 %v831
    %2074 = vmatmul.f32.gmra.mxu0 %v1939
    %v2075 = vpop.f32.mrf.mxu0
    %v2076 = vadd.f32 0.0, %v2075
    %2077 = vdwg.mxu0
    %2078 = vmatpush.msra.mxu0 %v892
    %2079 = vmatpush.msra.mxu0 %v888
    %2080 = vmatpush.msra.mxu0 %v884
    %2081 = vmatpush.msra.mxu0 %v880
    %2082 = vmatpush.msra.mxu0 %v876
    %2083 = vmatpush.msra.mxu0 %v872
    %2084 = vmatpush.msra.mxu0 %v868
    %2085 = vmatpush.msra.mxu0 %v864
    %2086 = vmatpush.msra.mxu0 %v860
    %2087 = vmatpush.msra.mxu0 %v856
    %2088 = vmatpush.msra.mxu0 %v852
    %2089 = vmatpush.msra.mxu0 %v848
    %2090 = vmatpush.msra.mxu0 %v844
    %2091 = vmatpush.msra.mxu0 %v840
    %2092 = vmatpush.msra.mxu0 %v836
    %2093 = vmatpush.msra.mxu0 %v832
    %2094 = vmatmul.f32.gmra.mxu0 %v1939
    %v2095 = vpop.f32.mrf.mxu0
    %v2096 = vadd.f32 0.0, %v2095
    %2097 = vdwg.mxu0
    %2098 = vmatpush.msra.mxu0 %v893
    %2099 = vmatpush.msra.mxu0 %v889
    %2100 = vmatpush.msra.mxu0 %v885
    %2101 = vmatpush.msra.mxu0 %v881
    %2102 = vmatpush.msra.mxu0 %v877
    %2103 = vmatpush.msra.mxu0 %v873
    %2104 = vmatpush.msra.mxu0 %v869
    %2105 = vmatpush.msra.mxu0 %v865
    %2106 = vmatpush.msra.mxu0 %v861
    %2107 = vmatpush.msra.mxu0 %v857
    %2108 = vmatpush.msra.mxu0 %v853
    %2109 = vmatpush.msra.mxu0 %v849
    %2110 = vmatpush.msra.mxu0 %v845
    %2111 = vmatpush.msra.mxu0 %v841
    %2112 = vmatpush.msra.mxu0 %v837
    %2113 = vmatpush.msra.mxu0 %v833
    %2114 = vmatmul.f32.gmra.mxu0 %v1939
    %v2115 = vpop.f32.mrf.mxu0
    %v2116 = vadd.f32 0.0, %v2115
    %2117 = vdwg.mxu0
    %v2118 = vadd.f32 %v2034, %v2056
    %v2119 = vadd.f32 %v2035, %v2076
    %v2120 = vadd.f32 %v2036, %v2096
    %v2121 = vadd.f32 %v2037, %v2116
    %v2122 = vmul.f32 %v2028, 0.5
    %v2123 = vtanh.pop %v2122
    %v2124 = vmul.f32 %v2123, 0.5
    %v2125 = vadd.f32 %v2124, 0.5
    %v2126 = vmul.f32 %v2029, 0.5
    %v2127 = vtanh.pop %v2126
    %v2128 = vmul.f32 %v2127, 0.5
    %v2129 = vadd.f32 %v2128, 0.5
    %v2130 = vtanh.pop %v2030
    %v2131 = vmul.f32 %v2031, 0.5
    %v2132 = vtanh.pop %v2131
    %v2133 = vmul.f32 %v2132, 0.5
    %v2134 = vadd.f32 %v2133, 0.5
    %v2135 = vmul.f32 %v2129, %v1919
    %v2136 = vmul.f32 %v2125, %v2130
    %v2137 = vadd.f32 %v2135, %v2136
    %v2138 = vtanh.pop %v2137
    %v2139 = vmul.f32 %v2134, %v2138
    %v2140 = vmul.f32 %v2118, 0.5
    %v2141 = vtanh.pop %v2140
    %v2142 = vmul.f32 %v2141, 0.5
    %v2143 = vadd.f32 %v2142, 0.5
    %v2144 = vmul.f32 %v2119, 0.5
    %v2145 = vtanh.pop %v2144
    %v2146 = vmul.f32 %v2145, 0.5
    %v2147 = vadd.f32 %v2146, 0.5
    %v2148 = vtanh.pop %v2120
    %v2149 = vmul.f32 %v2121, 0.5
    %v2150 = vtanh.pop %v2149
    %v2151 = vmul.f32 %v2150, 0.5
    %v2152 = vadd.f32 %v2151, 0.5
    %v2153 = vmul.f32 %v2147, %v1937
    %v2154 = vmul.f32 %v2143, %v2148
    %v2155 = vadd.f32 %v2153, %v2154
    %v2156 = vtanh.pop %v2155
    %v2157 = vmul.f32 %v2152, %v2156
    %v2158 = vsel %vm1490, %v2139, %v1940
    %v2159 = vsel %vm1483, %v2157, %v1941
    %s2160 = smul.addr %s1119, 8
    %s2161 = scalar_lea.vmem [#allocation2], %s2160
    %v2162 = vld [vmem:[%s2161] sm:$0xff]
    %v2163 = vld [vmem:[%s2161 + $0x8] sm:$0xff]
    %v2164 = vld [vmem:[%s2161 + $0x10] sm:$0xff]
    %v2165 = vld [vmem:[%s2161 + $0x18] sm:$0xff]
    %2166 = vmatpush.msra.mxu0 %v735
    %2167 = vmatpush.msra.mxu0 %v731
    %2168 = vmatpush.msra.mxu0 %v727
    %2169 = vmatpush.msra.mxu0 %v723
    %2170 = vmatpush.msra.mxu0 %v719
    %2171 = vmatpush.msra.mxu0 %v715
    %2172 = vmatpush.msra.mxu0 %v711
    %2173 = vmatpush.msra.mxu0 %v707
    %2174 = vmatpush.msra.mxu0 %v703
    %2175 = vmatpush.msra.mxu0 %v699
    %2176 = vmatpush.msra.mxu0 %v695
    %2177 = vmatpush.msra.mxu0 %v691
    %2178 = vmatpush.msra.mxu0 %v687
    %2179 = vmatpush.msra.mxu0 %v683
    %2180 = vmatpush.msra.mxu0 %v679
    %2181 = vmatpush.msra.mxu0 %v675
    %2182 = vmatmul.f32.gmra.mxu0 %v2139
    %v2183 = vpop.f32.mrf.mxu0
    %v2184 = vadd.f32 0.0, %v2183
    %2185 = vdwg.mxu0
    %2186 = vmatpush.msra.mxu0 %v736
    %2187 = vmatpush.msra.mxu0 %v732
    %2188 = vmatpush.msra.mxu0 %v728
    %2189 = vmatpush.msra.mxu0 %v724
    %2190 = vmatpush.msra.mxu0 %v720
    %2191 = vmatpush.msra.mxu0 %v716
    %2192 = vmatpush.msra.mxu0 %v712
    %2193 = vmatpush.msra.mxu0 %v708
    %2194 = vmatpush.msra.mxu0 %v704
    %2195 = vmatpush.msra.mxu0 %v700
    %2196 = vmatpush.msra.mxu0 %v696
    %2197 = vmatpush.msra.mxu0 %v692
    %2198 = vmatpush.msra.mxu0 %v688
    %2199 = vmatpush.msra.mxu0 %v684
    %2200 = vmatpush.msra.mxu0 %v680
    %2201 = vmatpush.msra.mxu0 %v676
    %2202 = vmatmul.f32.gmra.mxu0 %v2139
    %v2203 = vpop.f32.mrf.mxu0
    %v2204 = vadd.f32 0.0, %v2203
    %2205 = vdwg.mxu0
    %2206 = vmatpush.msra.mxu0 %v737
    %2207 = vmatpush.msra.mxu0 %v733
    %2208 = vmatpush.msra.mxu0 %v729
    %2209 = vmatpush.msra.mxu0 %v725
    %2210 = vmatpush.msra.mxu0 %v721
    %2211 = vmatpush.msra.mxu0 %v717
    %2212 = vmatpush.msra.mxu0 %v713
    %2213 = vmatpush.msra.mxu0 %v709
    %2214 = vmatpush.msra.mxu0 %v705
    %2215 = vmatpush.msra.mxu0 %v701
    %2216 = vmatpush.msra.mxu0 %v697
    %2217 = vmatpush.msra.mxu0 %v693
    %2218 = vmatpush.msra.mxu0 %v689
    %2219 = vmatpush.msra.mxu0 %v685
    %2220 = vmatpush.msra.mxu0 %v681
    %2221 = vmatpush.msra.mxu0 %v677
    %2222 = vmatmul.f32.gmra.mxu0 %v2139
    %v2223 = vpop.f32.mrf.mxu0
    %v2224 = vadd.f32 0.0, %v2223
    %2225 = vdwg.mxu0
    %2226 = vmatpush.msra.mxu0 %v738
    %2227 = vmatpush.msra.mxu0 %v734
    %2228 = vmatpush.msra.mxu0 %v730
    %2229 = vmatpush.msra.mxu0 %v726
    %2230 = vmatpush.msra.mxu0 %v722
    %2231 = vmatpush.msra.mxu0 %v718
    %2232 = vmatpush.msra.mxu0 %v714
    %2233 = vmatpush.msra.mxu0 %v710
    %2234 = vmatpush.msra.mxu0 %v706
    %2235 = vmatpush.msra.mxu0 %v702
    %2236 = vmatpush.msra.mxu0 %v698
    %2237 = vmatpush.msra.mxu0 %v694
    %2238 = vmatpush.msra.mxu0 %v690
    %2239 = vmatpush.msra.mxu0 %v686
    %2240 = vmatpush.msra.mxu0 %v682
    %2241 = vmatpush.msra.mxu0 %v678
    %2242 = vmatmul.f32.gmra.mxu0 %v2139
    %v2243 = vpop.f32.mrf.mxu0
    %v2244 = vadd.f32 0.0, %v2243
    %2245 = vdwg.mxu0
    %v2246 = vadd.f32 %v2162, %v2184
    %v2247 = vadd.f32 %v2163, %v2204
    %v2248 = vadd.f32 %v2164, %v2224
    %v2249 = vadd.f32 %v2165, %v2244
    %s2250 = smul.addr %s1028, 8
    %s2251 = scalar_lea.vmem [#allocation3], %s2250
    %v2252 = vld [vmem:[%s2251] sm:$0xff]
    %v2253 = vld [vmem:[%s2251 + $0x8] sm:$0xff]
    %v2254 = vld [vmem:[%s2251 + $0x10] sm:$0xff]
    %v2255 = vld [vmem:[%s2251 + $0x18] sm:$0xff]
    %2256 = vmatpush.msra.mxu0 %v890
    %2257 = vmatpush.msra.mxu0 %v886
    %2258 = vmatpush.msra.mxu0 %v882
    %2259 = vmatpush.msra.mxu0 %v878
    %2260 = vmatpush.msra.mxu0 %v874
    %2261 = vmatpush.msra.mxu0 %v870
    %2262 = vmatpush.msra.mxu0 %v866
    %2263 = vmatpush.msra.mxu0 %v862
    %2264 = vmatpush.msra.mxu0 %v858
    %2265 = vmatpush.msra.mxu0 %v854
    %2266 = vmatpush.msra.mxu0 %v850
    %2267 = vmatpush.msra.mxu0 %v846
    %2268 = vmatpush.msra.mxu0 %v842
    %2269 = vmatpush.msra.mxu0 %v838
    %2270 = vmatpush.msra.mxu0 %v834
    %2271 = vmatpush.msra.mxu0 %v830
    %2272 = vmatmul.f32.gmra.mxu0 %v2157
    %v2273 = vpop.f32.mrf.mxu0
    %v2274 = vadd.f32 0.0, %v2273
    %2275 = vdwg.mxu0
    %2276 = vmatpush.msra.mxu0 %v891
    %2277 = vmatpush.msra.mxu0 %v887
    %2278 = vmatpush.msra.mxu0 %v883
    %2279 = vmatpush.msra.mxu0 %v879
    %2280 = vmatpush.msra.mxu0 %v875
    %2281 = vmatpush.msra.mxu0 %v871
    %2282 = vmatpush.msra.mxu0 %v867
    %2283 = vmatpush.msra.mxu0 %v863
    %2284 = vmatpush.msra.mxu0 %v859
    %2285 = vmatpush.msra.mxu0 %v855
    %2286 = vmatpush.msra.mxu0 %v851
    %2287 = vmatpush.msra.mxu0 %v847
    %2288 = vmatpush.msra.mxu0 %v843
    %2289 = vmatpush.msra.mxu0 %v839
    %2290 = vmatpush.msra.mxu0 %v835
    %2291 = vmatpush.msra.mxu0 %v831
    %2292 = vmatmul.f32.gmra.mxu0 %v2157
    %v2293 = vpop.f32.mrf.mxu0
    %v2294 = vadd.f32 0.0, %v2293
    %2295 = vdwg.mxu0
    %2296 = vmatpush.msra.mxu0 %v892
    %2297 = vmatpush.msra.mxu0 %v888
    %2298 = vmatpush.msra.mxu0 %v884
    %2299 = vmatpush.msra.mxu0 %v880
    %2300 = vmatpush.msra.mxu0 %v876
    %2301 = vmatpush.msra.mxu0 %v872
    %2302 = vmatpush.msra.mxu0 %v868
    %2303 = vmatpush.msra.mxu0 %v864
    %2304 = vmatpush.msra.mxu0 %v860
    %2305 = vmatpush.msra.mxu0 %v856
    %2306 = vmatpush.msra.mxu0 %v852
    %2307 = vmatpush.msra.mxu0 %v848
    %2308 = vmatpush.msra.mxu0 %v844
    %2309 = vmatpush.msra.mxu0 %v840
    %2310 = vmatpush.msra.mxu0 %v836
    %2311 = vmatpush.msra.mxu0 %v832
    %2312 = vmatmul.f32.gmra.mxu0 %v2157
    %v2313 = vpop.f32.mrf.mxu0
    %v2314 = vadd.f32 0.0, %v2313
    %2315 = vdwg.mxu0
    %2316 = vmatpush.msra.mxu0 %v893
    %2317 = vmatpush.msra.mxu0 %v889
    %2318 = vmatpush.msra.mxu0 %v885
    %2319 = vmatpush.msra.mxu0 %v881
    %2320 = vmatpush.msra.mxu0 %v877
    %2321 = vmatpush.msra.mxu0 %v873
    %2322 = vmatpush.msra.mxu0 %v869
    %2323 = vmatpush.msra.mxu0 %v865
    %2324 = vmatpush.msra.mxu0 %v861
    %2325 = vmatpush.msra.mxu0 %v857
    %2326 = vmatpush.msra.mxu0 %v853
    %2327 = vmatpush.msra.mxu0 %v849
    %2328 = vmatpush.msra.mxu0 %v845
    %2329 = vmatpush.msra.mxu0 %v841
    %2330 = vmatpush.msra.mxu0 %v837
    %2331 = vmatpush.msra.mxu0 %v833
    %2332 = vmatmul.f32.gmra.mxu0 %v2157
    %v2333 = vpop.f32.mrf.mxu0
    %v2334 = vadd.f32 0.0, %v2333
    %2335 = vdwg.mxu0
    %v2336 = vadd.f32 %v2252, %v2274
    %v2337 = vadd.f32 %v2253, %v2294
    %v2338 = vadd.f32 %v2254, %v2314
    %v2339 = vadd.f32 %v2255, %v2334
    %v2340 = vmul.f32 %v2246, 0.5
    %v2341 = vtanh.pop %v2340
    %v2342 = vmul.f32 %v2341, 0.5
    %v2343 = vadd.f32 %v2342, 0.5
    %v2344 = vmul.f32 %v2247, 0.5
    %v2345 = vtanh.pop %v2344
    %v2346 = vmul.f32 %v2345, 0.5
    %v2347 = vadd.f32 %v2346, 0.5
    %v2348 = vtanh.pop %v2248
    %v2349 = vmul.f32 %v2249, 0.5
    %v2350 = vtanh.pop %v2349
    %v2351 = vmul.f32 %v2350, 0.5
    %v2352 = vadd.f32 %v2351, 0.5
    %v2353 = vmul.f32 %v2347, %v2137
    %v2354 = vmul.f32 %v2343, %v2348
    %v2355 = vadd.f32 %v2353, %v2354
    %v2356 = vtanh.pop %v2355
    %v2357 = vmul.f32 %v2352, %v2356
    %v2358 = vmul.f32 %v2336, 0.5
    %v2359 = vtanh.pop %v2358
    %v2360 = vmul.f32 %v2359, 0.5
    %v2361 = vadd.f32 %v2360, 0.5
    %v2362 = vmul.f32 %v2337, 0.5
    %v2363 = vtanh.pop %v2362
    %v2364 = vmul.f32 %v2363, 0.5
    %v2365 = vadd.f32 %v2364, 0.5
    %v2366 = vtanh.pop %v2338
    %v2367 = vmul.f32 %v2339, 0.5
    %v2368 = vtanh.pop %v2367
    %v2369 = vmul.f32 %v2368, 0.5
    %v2370 = vadd.f32 %v2369, 0.5
    %v2371 = vmul.f32 %v2365, %v2155
    %v2372 = vmul.f32 %v2361, %v2366
    %v2373 = vadd.f32 %v2371, %v2372
    %v2374 = vtanh.pop %v2373
    %v2375 = vmul.f32 %v2370, %v2374
    %v2376 = vsel %vm1258, %v2357, %v2158
    %v2377 = vsel %vm1251, %v2375, %v2159
    %s2378 = smul.addr %s823, 8
    %s2379 = scalar_lea.vmem [#allocation2], %s2378
    %v2380 = vld [vmem:[%s2379] sm:$0xff]
    %v2381 = vld [vmem:[%s2379 + $0x8] sm:$0xff]
    %v2382 = vld [vmem:[%s2379 + $0x10] sm:$0xff]
    %v2383 = vld [vmem:[%s2379 + $0x18] sm:$0xff]
    %2384 = vmatpush.msra.mxu0 %v735
    %2385 = vmatpush.msra.mxu0 %v731
    %2386 = vmatpush.msra.mxu0 %v727
    %2387 = vmatpush.msra.mxu0 %v723
    %2388 = vmatpush.msra.mxu0 %v719
    %2389 = vmatpush.msra.mxu0 %v715
    %2390 = vmatpush.msra.mxu0 %v711
    %2391 = vmatpush.msra.mxu0 %v707
    %2392 = vmatpush.msra.mxu0 %v703
    %2393 = vmatpush.msra.mxu0 %v699
    %2394 = vmatpush.msra.mxu0 %v695
    %2395 = vmatpush.msra.mxu0 %v691
    %2396 = vmatpush.msra.mxu0 %v687
    %2397 = vmatpush.msra.mxu0 %v683
    %2398 = vmatpush.msra.mxu0 %v679
    %2399 = vmatpush.msra.mxu0 %v675
    %2400 = vmatmul.f32.gmra.mxu0 %v2357
    %v2401 = vpop.f32.mrf.mxu0
    %v2402 = vadd.f32 0.0, %v2401
    %2403 = vdwg.mxu0
    %2404 = vmatpush.msra.mxu0 %v736
    %2405 = vmatpush.msra.mxu0 %v732
    %2406 = vmatpush.msra.mxu0 %v728
    %2407 = vmatpush.msra.mxu0 %v724
    %2408 = vmatpush.msra.mxu0 %v720
    %2409 = vmatpush.msra.mxu0 %v716
    %2410 = vmatpush.msra.mxu0 %v712
    %2411 = vmatpush.msra.mxu0 %v708
    %2412 = vmatpush.msra.mxu0 %v704
    %2413 = vmatpush.msra.mxu0 %v700
    %2414 = vmatpush.msra.mxu0 %v696
    %2415 = vmatpush.msra.mxu0 %v692
    %2416 = vmatpush.msra.mxu0 %v688
    %2417 = vmatpush.msra.mxu0 %v684
    %2418 = vmatpush.msra.mxu0 %v680
    %2419 = vmatpush.msra.mxu0 %v676
    %2420 = vmatmul.f32.gmra.mxu0 %v2357
    %v2421 = vpop.f32.mrf.mxu0
    %v2422 = vadd.f32 0.0, %v2421
    %2423 = vdwg.mxu0
    %2424 = vmatpush.msra.mxu0 %v737
    %2425 = vmatpush.msra.mxu0 %v733
    %2426 = vmatpush.msra.mxu0 %v729
    %2427 = vmatpush.msra.mxu0 %v725
    %2428 = vmatpush.msra.mxu0 %v721
    %2429 = vmatpush.msra.mxu0 %v717
    %2430 = vmatpush.msra.mxu0 %v713
    %2431 = vmatpush.msra.mxu0 %v709
    %2432 = vmatpush.msra.mxu0 %v705
    %2433 = vmatpush.msra.mxu0 %v701
    %2434 = vmatpush.msra.mxu0 %v697
    %2435 = vmatpush.msra.mxu0 %v693
    %2436 = vmatpush.msra.mxu0 %v689
    %2437 = vmatpush.msra.mxu0 %v685
    %2438 = vmatpush.msra.mxu0 %v681
    %2439 = vmatpush.msra.mxu0 %v677
    %2440 = vmatmul.f32.gmra.mxu0 %v2357
    %v2441 = vpop.f32.mrf.mxu0
    %v2442 = vadd.f32 0.0, %v2441
    %2443 = vdwg.mxu0
    %2444 = vmatpush.msra.mxu0 %v738
    %2445 = vmatpush.msra.mxu0 %v734
    %2446 = vmatpush.msra.mxu0 %v730
    %2447 = vmatpush.msra.mxu0 %v726
    %2448 = vmatpush.msra.mxu0 %v722
    %2449 = vmatpush.msra.mxu0 %v718
    %2450 = vmatpush.msra.mxu0 %v714
    %2451 = vmatpush.msra.mxu0 %v710
    %2452 = vmatpush.msra.mxu0 %v706
    %2453 = vmatpush.msra.mxu0 %v702
    %2454 = vmatpush.msra.mxu0 %v698
    %2455 = vmatpush.msra.mxu0 %v694
    %2456 = vmatpush.msra.mxu0 %v690
    %2457 = vmatpush.msra.mxu0 %v686
    %2458 = vmatpush.msra.mxu0 %v682
    %2459 = vmatpush.msra.mxu0 %v678
    %2460 = vmatmul.f32.gmra.mxu0 %v2357
    %v2461 = vpop.f32.mrf.mxu0
    %v2462 = vadd.f32 0.0, %v2461
    %2463 = vdwg.mxu0
    %v2464 = vadd.f32 %v2380, %v2402
    %v2465 = vadd.f32 %v2381, %v2422
    %v2466 = vadd.f32 %v2382, %v2442
    %v2467 = vadd.f32 %v2383, %v2462
    %s2468 = smul.addr %s668, 8
    %s2469 = scalar_lea.vmem [#allocation3], %s2468
    %v2470 = vld [vmem:[%s2469] sm:$0xff]
    %v2471 = vld [vmem:[%s2469 + $0x8] sm:$0xff]
    %v2472 = vld [vmem:[%s2469 + $0x10] sm:$0xff]
    %v2473 = vld [vmem:[%s2469 + $0x18] sm:$0xff]
    %2474 = vmatpush.msra.mxu0 %v890
    %2475 = vmatpush.msra.mxu0 %v886
    %2476 = vmatpush.msra.mxu0 %v882
    %2477 = vmatpush.msra.mxu0 %v878
    %2478 = vmatpush.msra.mxu0 %v874
    %2479 = vmatpush.msra.mxu0 %v870
    %2480 = vmatpush.msra.mxu0 %v866
    %2481 = vmatpush.msra.mxu0 %v862
    %2482 = vmatpush.msra.mxu0 %v858
    %2483 = vmatpush.msra.mxu0 %v854
    %2484 = vmatpush.msra.mxu0 %v850
    %2485 = vmatpush.msra.mxu0 %v846
    %2486 = vmatpush.msra.mxu0 %v842
    %2487 = vmatpush.msra.mxu0 %v838
    %2488 = vmatpush.msra.mxu0 %v834
    %2489 = vmatpush.msra.mxu0 %v830
    %2490 = vmatmul.f32.gmra.mxu0 %v2375
    %v2491 = vpop.f32.mrf.mxu0
    %v2492 = vadd.f32 0.0, %v2491
    %2493 = vdwg.mxu0
    %2494 = vmatpush.msra.mxu0 %v891
    %2495 = vmatpush.msra.mxu0 %v887
    %2496 = vmatpush.msra.mxu0 %v883
    %2497 = vmatpush.msra.mxu0 %v879
    %2498 = vmatpush.msra.mxu0 %v875
    %2499 = vmatpush.msra.mxu0 %v871
    %2500 = vmatpush.msra.mxu0 %v867
    %2501 = vmatpush.msra.mxu0 %v863
    %2502 = vmatpush.msra.mxu0 %v859
    %2503 = vmatpush.msra.mxu0 %v855
    %2504 = vmatpush.msra.mxu0 %v851
    %2505 = vmatpush.msra.mxu0 %v847
    %2506 = vmatpush.msra.mxu0 %v843
    %2507 = vmatpush.msra.mxu0 %v839
    %2508 = vmatpush.msra.mxu0 %v835
    %2509 = vmatpush.msra.mxu0 %v831
    %2510 = vmatmul.f32.gmra.mxu0 %v2375
    %v2511 = vpop.f32.mrf.mxu0
    %v2512 = vadd.f32 0.0, %v2511
    %2513 = vdwg.mxu0
    %2514 = vmatpush.msra.mxu0 %v892
    %2515 = vmatpush.msra.mxu0 %v888
    %2516 = vmatpush.msra.mxu0 %v884
    %2517 = vmatpush.msra.mxu0 %v880
    %2518 = vmatpush.msra.mxu0 %v876
    %2519 = vmatpush.msra.mxu0 %v872
    %2520 = vmatpush.msra.mxu0 %v868
    %2521 = vmatpush.msra.mxu0 %v864
    %2522 = vmatpush.msra.mxu0 %v860
    %2523 = vmatpush.msra.mxu0 %v856
    %2524 = vmatpush.msra.mxu0 %v852
    %2525 = vmatpush.msra.mxu0 %v848
    %2526 = vmatpush.msra.mxu0 %v844
    %2527 = vmatpush.msra.mxu0 %v840
    %2528 = vmatpush.msra.mxu0 %v836
    %2529 = vmatpush.msra.mxu0 %v832
    %2530 = vmatmul.f32.gmra.mxu0 %v2375
    %v2531 = vpop.f32.mrf.mxu0
    %v2532 = vadd.f32 0.0, %v2531
    %2533 = vdwg.mxu0
    %2534 = vmatpush.msra.mxu0 %v893
    %2535 = vmatpush.msra.mxu0 %v889
    %2536 = vmatpush.msra.mxu0 %v885
    %2537 = vmatpush.msra.mxu0 %v881
    %2538 = vmatpush.msra.mxu0 %v877
    %2539 = vmatpush.msra.mxu0 %v873
    %2540 = vmatpush.msra.mxu0 %v869
    %2541 = vmatpush.msra.mxu0 %v865
    %2542 = vmatpush.msra.mxu0 %v861
    %2543 = vmatpush.msra.mxu0 %v857
    %2544 = vmatpush.msra.mxu0 %v853
    %2545 = vmatpush.msra.mxu0 %v849
    %2546 = vmatpush.msra.mxu0 %v845
    %2547 = vmatpush.msra.mxu0 %v841
    %2548 = vmatpush.msra.mxu0 %v837
    %2549 = vmatpush.msra.mxu0 %v833
    %2550 = vmatmul.f32.gmra.mxu0 %v2375
    %v2551 = vpop.f32.mrf.mxu0
    %v2552 = vadd.f32 0.0, %v2551
    %2553 = vdwg.mxu0
    %v2554 = vadd.f32 %v2470, %v2492
    %v2555 = vadd.f32 %v2471, %v2512
    %v2556 = vadd.f32 %v2472, %v2532
    %v2557 = vadd.f32 %v2473, %v2552
    %v2558 = vmul.f32 %v2464, 0.5
    %v2559 = vtanh.pop %v2558
    %v2560 = vmul.f32 %v2559, 0.5
    %v2561 = vadd.f32 %v2560, 0.5
    %v2562 = vmul.f32 %v2465, 0.5
    %v2563 = vtanh.pop %v2562
    %v2564 = vmul.f32 %v2563, 0.5
    %v2565 = vadd.f32 %v2564, 0.5
    %v2566 = vtanh.pop %v2466
    %v2567 = vmul.f32 %v2467, 0.5
    %v2568 = vtanh.pop %v2567
    %v2569 = vmul.f32 %v2568, 0.5
    %v2570 = vadd.f32 %v2569, 0.5
    %v2571 = vmul.f32 %v2565, %v2355
    %v2572 = vmul.f32 %v2561, %v2566
    %v2573 = vadd.f32 %v2571, %v2572
    %v2574 = vtanh.pop %v2573
    %v2575 = vmul.f32 %v2570, %v2574
    %v2576 = vmul.f32 %v2554, 0.5
    %v2577 = vtanh.pop %v2576
    %v2578 = vmul.f32 %v2577, 0.5
    %v2579 = vadd.f32 %v2578, 0.5
    %v2580 = vmul.f32 %v2555, 0.5
    %v2581 = vtanh.pop %v2580
    %v2582 = vmul.f32 %v2581, 0.5
    %v2583 = vadd.f32 %v2582, 0.5
    %v2584 = vtanh.pop %v2556
    %v2585 = vmul.f32 %v2557, 0.5
    %v2586 = vtanh.pop %v2585
    %v2587 = vmul.f32 %v2586, 0.5
    %v2588 = vadd.f32 %v2587, 0.5
    %v2589 = vmul.f32 %v2583, %v2373
    %v2590 = vmul.f32 %v2579, %v2584
    %v2591 = vadd.f32 %v2589, %v2590
    %v2592 = vtanh.pop %v2591
    %v2593 = vmul.f32 %v2588, %v2592
    %v2594 = vsel %vm1026, %v2575, %v2376
    %v2595 = vsel %vm1019, %v2593, %v2377
    %v2597 = vrot.slane %v2594, 4
    %vm2599 = vcmask 1043456
    %v2600 = vsel %vm2599, %v2594, %v2597
    %vm2601 = vcmask 1045504
    %v2602 = vsel %vm2601, %v2600, 0.0
    %v2604 = vrot.slane %v2595, 4
    %v2606 = vsel %vm2599, %v2595, %v2604
    %v2607 = vsel %vm2601, %v2606, 0.0
    %v2608 = vrot.slane %v2594, 2
    %v2610 = vsel %vm2599, %v2608, %v2594
    %v2611 = vsel %vm2601, %v2610, 0.0
    %v2612 = vrot.slane %v2595, 2
    %v2614 = vsel %vm2599, %v2612, %v2595
    %v2615 = vsel %vm2601, %v2614, 0.0
    %v2616 = vld [vmem:[#allocation11] sm:$0xff]
    %v2617 = vld [vmem:[#allocation11 + $0x8] sm:$0xff]
    %v2618 = vld [vmem:[#allocation11 + $0x10] sm:$0xff]
    %v2619 = vld [vmem:[#allocation11 + $0x18] sm:$0xff]
    %v2620 = vld [vmem:[#allocation11 + $0x20] sm:$0xff]
    %v2621 = vld [vmem:[#allocation11 + $0x28] sm:$0xff]
    %v2622 = vld [vmem:[#allocation11 + $0x30] sm:$0xff]
    %v2623 = vld [vmem:[#allocation11 + $0x38] sm:$0xff]
    %v2624 = vld [vmem:[#allocation11 + $0x40] sm:$0xff]
    %v2625 = vld [vmem:[#allocation11 + $0x48] sm:$0xff]
    %v2626 = vld [vmem:[#allocation11 + $0x50] sm:$0xff]
    %v2627 = vld [vmem:[#allocation11 + $0x58] sm:$0xff]
    %v2628 = vld [vmem:[#allocation11 + $0x60] sm:$0xff]
    %v2629 = vld [vmem:[#allocation11 + $0x68] sm:$0xff]
    %v2630 = vld [vmem:[#allocation11 + $0x70] sm:$0xff]
    %v2631 = vld [vmem:[#allocation11 + $0x78] sm:$0xff]
    %v2632 = vld [vmem:[#allocation11 + $0x80] sm:$0xff]
    %v2633 = vld [vmem:[#allocation11 + $0x88] sm:$0xff]
    %v2634 = vld [vmem:[#allocation11 + $0x90] sm:$0xff]
    %v2635 = vld [vmem:[#allocation11 + $0x98] sm:$0xff]
    %v2636 = vld [vmem:[#allocation11 + $0xa0] sm:$0xff]
    %v2637 = vld [vmem:[#allocation11 + $0xa8] sm:$0xff]
    %v2638 = vld [vmem:[#allocation11 + $0xb0] sm:$0xff]
    %v2639 = vld [vmem:[#allocation11 + $0xb8] sm:$0xff]
    %v2640 = vld [vmem:[#allocation11 + $0xc0] sm:$0xff]
    %v2641 = vld [vmem:[#allocation11 + $0xc8] sm:$0xff]
    %v2642 = vld [vmem:[#allocation11 + $0xd0] sm:$0xff]
    %v2643 = vld [vmem:[#allocation11 + $0xd8] sm:$0xff]
    %v2644 = vld [vmem:[#allocation11 + $0xe0] sm:$0xff]
    %v2645 = vld [vmem:[#allocation11 + $0xe8] sm:$0xff]
    %v2646 = vld [vmem:[#allocation11 + $0xf0] sm:$0xff]
    %v2647 = vld [vmem:[#allocation11 + $0xf8] sm:$0xff]
    %v2648 = vld [vmem:[#allocation11 + $0x100] sm:$0xff]
    %v2649 = vld [vmem:[#allocation11 + $0x108] sm:$0xff]
    %v2650 = vld [vmem:[#allocation11 + $0x110] sm:$0xff]
    %v2651 = vld [vmem:[#allocation11 + $0x118] sm:$0xff]
    %v2652 = vld [vmem:[#allocation11 + $0x120] sm:$0xff]
    %v2653 = vld [vmem:[#allocation11 + $0x128] sm:$0xff]
    %v2654 = vld [vmem:[#allocation11 + $0x130] sm:$0xff]
    %v2655 = vld [vmem:[#allocation11 + $0x138] sm:$0xff]
    %v2656 = vld [vmem:[#allocation11 + $0x140] sm:$0xff]
    %v2657 = vld [vmem:[#allocation11 + $0x148] sm:$0xff]
    %v2658 = vld [vmem:[#allocation11 + $0x150] sm:$0xff]
    %v2659 = vld [vmem:[#allocation11 + $0x158] sm:$0xff]
    %v2660 = vld [vmem:[#allocation11 + $0x160] sm:$0xff]
    %v2661 = vld [vmem:[#allocation11 + $0x168] sm:$0xff]
    %v2662 = vld [vmem:[#allocation11 + $0x170] sm:$0xff]
    %v2663 = vld [vmem:[#allocation11 + $0x178] sm:$0xff]
    %v2664 = vld [vmem:[#allocation11 + $0x180] sm:$0xff]
    %v2665 = vld [vmem:[#allocation11 + $0x188] sm:$0xff]
    %v2666 = vld [vmem:[#allocation11 + $0x190] sm:$0xff]
    %v2667 = vld [vmem:[#allocation11 + $0x198] sm:$0xff]
    %v2668 = vld [vmem:[#allocation11 + $0x1a0] sm:$0xff]
    %v2669 = vld [vmem:[#allocation11 + $0x1a8] sm:$0xff]
    %v2670 = vld [vmem:[#allocation11 + $0x1b0] sm:$0xff]
    %v2671 = vld [vmem:[#allocation11 + $0x1b8] sm:$0xff]
    %v2672 = vld [vmem:[#allocation11 + $0x1c0] sm:$0xff]
    %v2673 = vld [vmem:[#allocation11 + $0x1c8] sm:$0xff]
    %v2674 = vld [vmem:[#allocation11 + $0x1d0] sm:$0xff]
    %v2675 = vld [vmem:[#allocation11 + $0x1d8] sm:$0xff]
    %v2676 = vld [vmem:[#allocation11 + $0x1e0] sm:$0xff]
    %v2677 = vld [vmem:[#allocation11 + $0x1e8] sm:$0xff]
    %v2678 = vld [vmem:[#allocation11 + $0x1f0] sm:$0xff]
    %v2679 = vld [vmem:[#allocation11 + $0x1f8] sm:$0xff]
    %v2680 = vld [vmem:[%s9] sm:$0x1]
    %v2682 = vperm.slane %v2680, 0
    %2684 = vmatpush.msra.mxu0 %v2631
    %2685 = vmatpush.msra.mxu0 %v2630
    %2686 = vmatpush.msra.mxu0 %v2629
    %2687 = vmatpush.msra.mxu0 %v2628
    %2688 = vmatpush.msra.mxu0 %v2627
    %2689 = vmatpush.msra.mxu0 %v2626
    %2690 = vmatpush.msra.mxu0 %v2625
    %2691 = vmatpush.msra.mxu0 %v2624
    %2692 = vmatpush.msra.mxu0 %v2623
    %2693 = vmatpush.msra.mxu0 %v2622
    %2694 = vmatpush.msra.mxu0 %v2621
    %2695 = vmatpush.msra.mxu0 %v2620
    %2696 = vmatpush.msra.mxu0 %v2619
    %2697 = vmatpush.msra.mxu0 %v2618
    %2698 = vmatpush.msra.mxu0 %v2617
    %2699 = vmatpush.msra.mxu0 %v2616
    %2700 = vmatmul.f32.gmra.mxu0 %v2602
    %v2701 = vpop.f32.mrf.mxu0
    %v2702 = vadd.f32 %v2682, %v2701
    %2703 = vdwg.mxu0
    %2704 = vmatpush.msra.mxu0 %v2647
    %2705 = vmatpush.msra.mxu0 %v2646
    %2706 = vmatpush.msra.mxu0 %v2645
    %2707 = vmatpush.msra.mxu0 %v2644
    %2708 = vmatpush.msra.mxu0 %v2643
    %2709 = vmatpush.msra.mxu0 %v2642
    %2710 = vmatpush.msra.mxu0 %v2641
    %2711 = vmatpush.msra.mxu0 %v2640
    %2712 = vmatpush.msra.mxu0 %v2639
    %2713 = vmatpush.msra.mxu0 %v2638
    %2714 = vmatpush.msra.mxu0 %v2637
    %2715 = vmatpush.msra.mxu0 %v2636
    %2716 = vmatpush.msra.mxu0 %v2635
    %2717 = vmatpush.msra.mxu0 %v2634
    %2718 = vmatpush.msra.mxu0 %v2633
    %2719 = vmatpush.msra.mxu0 %v2632
    %2720 = vmatmul.f32.gmra.mxu0 %v2607
    %v2721 = vpop.f32.mrf.mxu0
    %v2722 = vadd.f32 %v2702, %v2721
    %2723 = vdwg.mxu0
    %2724 = vmatpush.msra.mxu0 %v2663
    %2725 = vmatpush.msra.mxu0 %v2662
    %2726 = vmatpush.msra.mxu0 %v2661
    %2727 = vmatpush.msra.mxu0 %v2660
    %2728 = vmatpush.msra.mxu0 %v2659
    %2729 = vmatpush.msra.mxu0 %v2658
    %2730 = vmatpush.msra.mxu0 %v2657
    %2731 = vmatpush.msra.mxu0 %v2656
    %2732 = vmatpush.msra.mxu0 %v2655
    %2733 = vmatpush.msra.mxu0 %v2654
    %2734 = vmatpush.msra.mxu0 %v2653
    %2735 = vmatpush.msra.mxu0 %v2652
    %2736 = vmatpush.msra.mxu0 %v2651
    %2737 = vmatpush.msra.mxu0 %v2650
    %2738 = vmatpush.msra.mxu0 %v2649
    %2739 = vmatpush.msra.mxu0 %v2648
    %2740 = vmatmul.f32.gmra.mxu0 %v2611
    %v2741 = vpop.f32.mrf.mxu0
    %v2742 = vadd.f32 %v2722, %v2741
    %2743 = vdwg.mxu0
    %2744 = vmatpush.msra.mxu0 %v2679
    %2745 = vmatpush.msra.mxu0 %v2678
    %2746 = vmatpush.msra.mxu0 %v2677
    %2747 = vmatpush.msra.mxu0 %v2676
    %2748 = vmatpush.msra.mxu0 %v2675
    %2749 = vmatpush.msra.mxu0 %v2674
    %2750 = vmatpush.msra.mxu0 %v2673
    %2751 = vmatpush.msra.mxu0 %v2672
    %2752 = vmatpush.msra.mxu0 %v2671
    %2753 = vmatpush.msra.mxu0 %v2670
    %2754 = vmatpush.msra.mxu0 %v2669
    %2755 = vmatpush.msra.mxu0 %v2668
    %2756 = vmatpush.msra.mxu0 %v2667
    %2757 = vmatpush.msra.mxu0 %v2666
    %2758 = vmatpush.msra.mxu0 %v2665
    %2759 = vmatpush.msra.mxu0 %v2664
    %2760 = vmatmul.f32.gmra.mxu0 %v2615
    %v2761 = vpop.f32.mrf.mxu0
    %v2762 = vadd.f32 %v2742, %v2761
    %2763 = vdwg.mxu0
    %vm2764 = vcmp.gt.f32.partialorder %v2762, 0.0
    %v2765 = vmul.f32 %v2762, 0.2
    %v2766 = vsel %vm2764, %v2762, %v2765
    %v2767 = vld [vmem:[%s10] sm:$0xff]
    %v2768 = vld [vmem:[%s10 + $0x8] sm:$0xff]
    %v2769 = vld [vmem:[%s10 + $0x10] sm:$0xff]
    %v2770 = vld [vmem:[%s10 + $0x18] sm:$0xff]
    %v2771 = vld [vmem:[%s10 + $0x20] sm:$0xff]
    %v2772 = vld [vmem:[%s10 + $0x28] sm:$0xff]
    %v2773 = vld [vmem:[%s10 + $0x30] sm:$0xff]
    %v2774 = vld [vmem:[%s10 + $0x38] sm:$0xff]
    %v2775 = vld [vmem:[%s10 + $0x40] sm:$0xff]
    %v2776 = vld [vmem:[%s10 + $0x48] sm:$0xff]
    %v2777 = vld [vmem:[%s10 + $0x50] sm:$0xff]
    %v2778 = vld [vmem:[%s10 + $0x58] sm:$0xff]
    %v2779 = vld [vmem:[%s10 + $0x60] sm:$0xff]
    %v2780 = vld [vmem:[%s10 + $0x68] sm:$0xff]
    %v2781 = vld [vmem:[%s10 + $0x70] sm:$0xff]
    %v2782 = vld [vmem:[%s10 + $0x78] sm:$0xff]
    %v2783 = vld [vmem:[%s11] sm:$0x1]
    %v2785 = vperm.slane %v2783, 0
    %2787 = vmatpush.msra.mxu0 %v2782
    %2788 = vmatpush.msra.mxu0 %v2781
    %2789 = vmatpush.msra.mxu0 %v2780
    %2790 = vmatpush.msra.mxu0 %v2779
    %2791 = vmatpush.msra.mxu0 %v2778
    %2792 = vmatpush.msra.mxu0 %v2777
    %2793 = vmatpush.msra.mxu0 %v2776
    %2794 = vmatpush.msra.mxu0 %v2775
    %2795 = vmatpush.msra.mxu0 %v2774
    %2796 = vmatpush.msra.mxu0 %v2773
    %2797 = vmatpush.msra.mxu0 %v2772
    %2798 = vmatpush.msra.mxu0 %v2771
    %2799 = vmatpush.msra.mxu0 %v2770
    %2800 = vmatpush.msra.mxu0 %v2769
    %2801 = vmatpush.msra.mxu0 %v2768
    %2802 = vmatpush.msra.mxu0 %v2767
    %2803 = vmatmul.f32.gmra.mxu0 %v2766
    %v2804 = vpop.f32.mrf.mxu0
    %v2805 = vadd.f32 %v2785, %v2804
    %2806 = vdwg.mxu0
    %2807 = vst [vmem:[%s12] sm:$0xff] %v2805
    // Predicated region
    $region70: #{forward.1} parent=1 // pred_check
      _
    $region71: #{forward.1} parent=1 // pred_check_branch
      %2809 = sbr.rel (0) target = $region73
    $region72: #{forward.1} parent=1 // pred_region
      _
    $region73: #{forward.1} parent=1 // pred_fallthru
      _
    // Predicated region
    $region74: #{forward.1} parent=1 // pred_check
      _
    $region75: #{forward.1} parent=1 // pred_check_branch
      %2811 = sbr.rel (0) target = $region77
    $region76: #{forward.1} parent=1 // pred_region
      _
    $region77: #{forward.1} parent=1 // pred_fallthru
      _
    %2812 = vsyncpa [#allocation5], 1
    %2813 = vsyncpa [#allocation7], 1
    %2814 = vsyncpa [#allocation10], 1

</llo_original>
